<compile_context>
chip_gen: v6e
topology: v6e:2x2x1
jax: 0.10.0
libtpu: 0.0.40
codegen_flags: <defaults>
</compile_context>

<pallas_src>
import functools
import math

import jax
import jax.numpy as jnp
from jax import lax
from jax.experimental import pallas as pl
from jax.experimental.pallas import tpu as pltpu

_VMEM_LIMIT = 48 * 1024 * 1024  # below v7x's 64 MiB physical VMEM on all gens


def _round_up(x, m):
    return (x + m - 1) // m * m


# ---------------------------------------------------------------------------
# Tiled matmul kernel:  out = [relu](x @ w + b)   (used for conv1 im2col)
# ---------------------------------------------------------------------------
def _matmul_kernel(x_ref, w_ref, b_ref, o_ref, acc_ref, *, relu):
    @pl.when(pl.program_id(2) == 0)
    def _():
        acc_ref[...] = jnp.zeros_like(acc_ref)

    acc_ref[...] += jnp.dot(x_ref[...], w_ref[...],
                            preferred_element_type=jnp.float32)

    @pl.when(pl.program_id(2) == pl.num_programs(2) - 1)
    def _():
        out = acc_ref[...] + b_ref[...]
        if relu:
            out = jnp.maximum(out, 0.0)
        o_ref[...] = out.astype(o_ref.dtype)


def matmul_bias(x, w, b, *, relu=False, tm=256, tn=256, tk=512,
                out_dtype=jnp.float32):
    """(M, K) @ (K, N) + b, bf16 MXU operands, f32 accumulation, fused ReLU."""
    M, K = x.shape
    K2, N = w.shape
    assert K == K2
    tm = min(tm, _round_up(M, 16))
    tn = min(tn, _round_up(N, 128))
    tk = min(tk, _round_up(K, 16))
    Mp, Kp, Np = _round_up(M, tm), _round_up(K, tk), _round_up(N, tn)
    xp = jnp.pad(x, ((0, Mp - M), (0, Kp - K))).astype(jnp.bfloat16)
    wp = jnp.pad(w, ((0, Kp - K), (0, Np - N))).astype(jnp.bfloat16)
    bp = jnp.pad(b, (0, Np - N)).reshape(1, Np).astype(jnp.float32)
    out = pl.pallas_call(
        functools.partial(_matmul_kernel, relu=relu),
        out_shape=jax.ShapeDtypeStruct((Mp, Np), out_dtype),
        grid=(Mp // tm, Np // tn, Kp // tk),
        in_specs=[
            pl.BlockSpec((tm, tk), lambda i, j, k: (i, k)),
            pl.BlockSpec((tk, tn), lambda i, j, k: (k, j)),
            pl.BlockSpec((1, tn), lambda i, j, k: (0, j)),
        ],
        out_specs=pl.BlockSpec((tm, tn), lambda i, j, k: (i, j)),
        scratch_shapes=[pltpu.VMEM((tm, tn), jnp.float32)],
        compiler_params=pltpu.CompilerParams(
            dimension_semantics=("parallel", "parallel", "arbitrary"),
            vmem_limit_bytes=_VMEM_LIMIT),
    )(xp, wp, bp)
    return out[:M, :N] if (Mp != M or Np != N) else out


def _im2col_3x3_s2(x):
    """(N, H, W, Cin) -> (N*oh*ow, 9*Cin) patches of a 3x3 stride-2 pad-1 conv."""
    N, H, W, Cin = x.shape
    oh, ow = H // 2, W // 2
    xp = jnp.pad(x, ((0, 0), (1, 1), (1, 1), (0, 0)))
    taps = [xp[:, di:di + 2 * oh:2, dj:dj + 2 * ow:2, :]
            for di in range(3) for dj in range(3)]
    return jnp.concatenate(taps, axis=-1).reshape(N * oh * ow, 9 * Cin)


# ---------------------------------------------------------------------------
# 3x3 stride-2 conv kernel (conv2, Cin=128): per-output-row grid, W pairs
# merged into the lane dim so every tap is a plain static slice; one K=9*Cin
# dot per row (no per-tap reshape copies, no host parity-plane stack).
# ---------------------------------------------------------------------------
def _conv3x3_s2_kernel(xa_ref, xb_ref, w_ref, b_ref, o_ref, *, ow, cin, relu):
    a = xa_ref[0, 0]            # (2, ow+1, 2*cin): padded rows 2r and 2r+1
    r0 = a[0]                   # even padded row 2r
    r1 = a[1]                   # odd  padded row 2r+1
    r2 = xb_ref[0, 0, 0]        # even padded row 2r+2
    taps = []
    for row in (r0, r1, r2):
        taps.append(row[:ow, :])              # cols 2j, 2j+1 (2*cin channels)
        taps.append(row[1:ow + 1, :cin])      # col  2j+2     (cin channels)
    patch = jnp.concatenate(taps, axis=-1)    # (ow, 9*cin)
    out = jnp.dot(patch, w_ref[...], preferred_element_type=jnp.float32)
    out = out + b_ref[...]
    if relu:
        out = jnp.maximum(out, 0.0)
    o_ref[0, 0] = out.astype(o_ref.dtype)


def conv3x3_s2(x, w_flat, b, *, relu, out_dtype=jnp.bfloat16):
    """x: (N, H, W, Cin) NHWC, w_flat: (9*Cin, Cout).  stride=2, pad=1."""
    N, H, W, Cin = x.shape
    assert H % 2 == 0 and W % 2 == 0
    oh, ow = H // 2, W // 2
    owp = ow + 1
    Cout = w_flat.shape[-1]
    # pad + cast + free reshape (fused by XLA): W-pairs merged into channels,
    # H rows grouped into (pair, parity).  No parity-plane stack, no im2col.
    xp = jnp.pad(x, ((0, 0), (1, 1), (1, 1), (0, 0))).astype(jnp.bfloat16)
    xp = xp.reshape(N, oh + 1, 2, owp, 2 * Cin)
    return pl.pallas_call(
        functools.partial(_conv3x3_s2_kernel, ow=ow, cin=Cin, relu=relu),
        out_shape=jax.ShapeDtypeStruct((N, oh, ow, Cout), out_dtype),
        grid=(N, oh),
        in_specs=[
            # row pair r (padded rows 2r, 2r+1)
            pl.BlockSpec((1, 1, 2, owp, 2 * Cin), lambda n, r: (n, r, 0, 0, 0)),
            # row pair r+1 (only its even row 2r+2 is used)
            pl.BlockSpec((1, 1, 2, owp, 2 * Cin), lambda n, r: (n, r + 1, 0, 0, 0)),
            pl.BlockSpec((9 * Cin, Cout), lambda n, r: (0, 0)),
            pl.BlockSpec((1, Cout), lambda n, r: (0, 0)),
        ],
        out_specs=pl.BlockSpec((1, 1, ow, Cout), lambda n, r: (n, r, 0, 0)),
        compiler_params=pltpu.CompilerParams(
            dimension_semantics=("parallel", "parallel"),
            vmem_limit_bytes=_VMEM_LIMIT),
    )(xp, xp, w_flat.astype(jnp.bfloat16),
      b.reshape(1, Cout).astype(jnp.float32))


# ---------------------------------------------------------------------------
# Fused neck + K|V projection kernel:
#   h = x @ Wn + bn;  h += pos (f32);  [k|v] = h @ [Wk|Wv] + [bk|bv]
# K and V are emitted as two separate bf16 outputs.
# ---------------------------------------------------------------------------
def _neck_kv_kernel(x_ref, pos_ref, wn_ref, bn_ref, wkv_ref, bkv_ref,
                    k_ref, v_ref):
    h = jnp.dot(x_ref[0], wn_ref[...],
                preferred_element_type=jnp.float32) + bn_ref[...]
    h = (h + pos_ref[...].astype(jnp.float32)).astype(jnp.bfloat16)
    kv = jnp.dot(h, wkv_ref[...],
                 preferred_element_type=jnp.float32) + bkv_ref[...]
    d = k_ref.shape[-1]
    k_ref[0] = kv[:, :d].astype(k_ref.dtype)
    v_ref[0] = kv[:, d:].astype(v_ref.dtype)


def neck_kv_project(feat, pos, wn, bn, wkv, bkv, *, tk):
    B, Nkp, C2 = feat.shape
    D = wn.shape[1]
    k, v = pl.pallas_call(
        _neck_kv_kernel,
        out_shape=(jax.ShapeDtypeStruct((B, Nkp, D), jnp.bfloat16),
                   jax.ShapeDtypeStruct((B, Nkp, D), jnp.bfloat16)),
        grid=(B, Nkp // tk),
        in_specs=[
            pl.BlockSpec((1, tk, C2), lambda b, i: (b, i, 0)),
            pl.BlockSpec((tk, D), lambda b, i: (i, 0)),
            pl.BlockSpec((C2, D), lambda b, i: (0, 0)),
            pl.BlockSpec((1, D), lambda b, i: (0, 0)),
            pl.BlockSpec((D, 2 * D), lambda b, i: (0, 0)),
            pl.BlockSpec((1, 2 * D), lambda b, i: (0, 0)),
        ],
        out_specs=[pl.BlockSpec((1, tk, D), lambda b, i: (b, i, 0)),
                   pl.BlockSpec((1, tk, D), lambda b, i: (b, i, 0))],
        compiler_params=pltpu.CompilerParams(
            dimension_semantics=("parallel", "parallel"),
            vmem_limit_bytes=_VMEM_LIMIT),
    )(feat, pos, wn, bn, wkv, bkv)
    return k, v


# ---------------------------------------------------------------------------
# Fused PETR head kernel:
#   Q proj -> flash attention over Nk tiles -> Wo + residual -> FFN + residual
#   -> cls|reg.   Grid (B, Nq_tiles, Nk_tiles); Nk axis is the reduction.
# ---------------------------------------------------------------------------
def _petr_head_kernel(q0_ref, k_ref, v_ref, wq_ref, bq_ref, wo_ref, bo_ref,
                      w1_ref, b1_ref, w2_ref, b2_ref, wcr_ref, bcr_ref,
                      o_ref, qf_ref, m_ref, l_ref, acc_ref, *, nk, tk):
    ki = pl.program_id(2)

    @pl.when(ki == 0)
    def _():
        # Q projection (1/sqrt(D) pre-folded into wq/bq), kept in VMEM scratch
        # for the whole Nk loop; running softmax stats initialized.
        qf = jnp.dot(q0_ref[...].astype(jnp.bfloat16), wq_ref[...],
                     preferred_element_type=jnp.float32) + bq_ref[...]
        qf_ref[...] = qf.astype(jnp.bfloat16)
        m_ref[...] = jnp.full(m_ref.shape, -jnp.inf, jnp.float32)
        l_ref[...] = jnp.zeros(l_ref.shape, jnp.float32)
        acc_ref[...] = jnp.zeros(acc_ref.shape, jnp.float32)

    k = k_ref[0]                                        # (tk, D) bf16
    v = v_ref[0]                                        # (tk, D) bf16
    s = lax.dot_general(qf_ref[...], k, (((1,), (1,)), ((), ())),
                        preferred_element_type=jnp.float32)   # (tq, tk)
    if nk % tk != 0:                    # static: mask keys in the padded tail
        col = ki * tk + lax.broadcasted_iota(jnp.int32, s.shape, 1)
        s = jnp.where(col < nk, s, -jnp.inf)

    m_prev = m_ref[...]
    m_new = jnp.maximum(m_prev, jnp.max(s, axis=-1, keepdims=True))
    alpha = jnp.exp(m_prev - m_new)
    p = jnp.exp(s - m_new)
    l_ref[...] = alpha * l_ref[...] + jnp.sum(p, axis=-1, keepdims=True)
    acc_ref[...] = alpha * acc_ref[...] + jnp.dot(
        p.astype(jnp.bfloat16), v, preferred_element_type=jnp.float32)
    m_ref[...] = m_new

    @pl.when(ki == pl.num_programs(2) - 1)
    def _():
        attn = (acc_ref[...] / l_ref[...]).astype(jnp.bfloat16)  # exact softmax
        h = jnp.dot(attn, wo_ref[...], preferred_element_type=jnp.float32)
        h = h + bo_ref[...] + q0_ref[...].astype(jnp.float32)    # + residual q0
        # FFN (residual computed in-kernel; no extra HBM stream)
        f = jnp.dot(h.astype(jnp.bfloat16), w1_ref[...],
                    preferred_element_type=jnp.float32) + b1_ref[...]
        f = jnp.maximum(f, 0.0).astype(jnp.bfloat16)
        h = jnp.dot(f, w2_ref[...],
                    preferred_element_type=jnp.float32) + b2_ref[...] + h
        # cls|reg head (lane-dense, padded to 128 columns)
        out = jnp.dot(h.astype(jnp.bfloat16), wcr_ref[...],
                      preferred_element_type=jnp.float32) + bcr_ref[...]
        o_ref[0] = out.astype(o_ref.dtype)


def petr_head(q0, k, v, prep, *, nk, tq, tk):
    B, Nkp, D = k.shape
    Nqp = q0.shape[0]
    ncr = prep["head_w"].shape[1]
    Dffn = prep["ffn_w1"].shape[1]
    return pl.pallas_call(
        functools.partial(_petr_head_kernel, nk=nk, tk=tk),
        out_shape=jax.ShapeDtypeStruct((B, Nqp, ncr), jnp.float32),
        grid=(B, Nqp // tq, Nkp // tk),
        in_specs=[
            pl.BlockSpec((tq, D), lambda b, qi, ki: (qi, 0)),        # q0 (f32)
            pl.BlockSpec((1, tk, D), lambda b, qi, ki: (b, ki, 0)),  # K
            pl.BlockSpec((1, tk, D), lambda b, qi, ki: (b, ki, 0)),  # V
            pl.BlockSpec((D, D), lambda b, qi, ki: (0, 0)),          # Wq
            pl.BlockSpec((1, D), lambda b, qi, ki: (0, 0)),          # bq
            pl.BlockSpec((D, D), lambda b, qi, ki: (0, 0)),          # Wo
            pl.BlockSpec((1, D), lambda b, qi, ki: (0, 0)),          # bo
            pl.BlockSpec((D, Dffn), lambda b, qi, ki: (0, 0)),       # W1
            pl.BlockSpec((1, Dffn), lambda b, qi, ki: (0, 0)),       # b1
            pl.BlockSpec((Dffn, D), lambda b, qi, ki: (0, 0)),       # W2
            pl.BlockSpec((1, D), lambda b, qi, ki: (0, 0)),          # b2
            pl.BlockSpec((D, ncr), lambda b, qi, ki: (0, 0)),        # cls|reg W
            pl.BlockSpec((1, ncr), lambda b, qi, ki: (0, 0)),        # cls|reg b
        ],
        out_specs=pl.BlockSpec((1, tq, ncr), lambda b, qi, ki: (b, qi, 0)),
        scratch_shapes=[
            pltpu.VMEM((tq, D), jnp.bfloat16),   # projected query
            pltpu.VMEM((tq, 1), jnp.float32),    # running max
            pltpu.VMEM((tq, 1), jnp.float32),    # running sum
            pltpu.VMEM((tq, D), jnp.float32),    # running attention accumulator
        ],
        compiler_params=pltpu.CompilerParams(
            dimension_semantics=("parallel", "parallel", "arbitrary"),
            vmem_limit_bytes=_VMEM_LIMIT),
    )(q0, k, v, prep["wq"], prep["bq"], prep["wo"], prep["bo"],
      prep["ffn_w1"], prep["ffn_b1"], prep["ffn_w2"], prep["ffn_b2"],
      prep["head_w"], prep["head_b"])


# ---------------------------------------------------------------------------
# Parameters
# ---------------------------------------------------------------------------
def init_params(key, cfg):
    Cin, C1, C2, D = cfg["Cin"], cfg["C1"], cfg["C2"], cfg["D"]
    Nq, Nk, Dffn = cfg["Nq"], cfg["Nk"], cfg["Dffn"]
    nc, code = cfg["num_classes"], cfg["code_size"]
    keys = iter(jax.random.split(key, 16))

    def lin(fan_in, shape):
        s = 1.0 / math.sqrt(fan_in)
        return jax.random.uniform(next(keys), shape, jnp.float32, -s, s)

    return {
        "bb_w1": lin(9 * Cin, (9, Cin, C1)), "bb_b1": jnp.zeros((C1,), jnp.float32),
        "bb_w2": lin(9 * C1, (9, C1, C2)), "bb_b2": jnp.zeros((C2,), jnp.float32),
        "neck_w": lin(C2, (C2, D)), "neck_b": jnp.zeros((D,), jnp.float32),
        "pos_embed": 0.02 * jax.random.normal(next(keys), (Nk, D), jnp.float32),
        "query": 0.02 * jax.random.normal(next(keys), (Nq, D), jnp.float32),
        "wq": lin(D, (D, D)), "bq": jnp.zeros((D,), jnp.float32),
        "wk": lin(D, (D, D)), "bk": jnp.zeros((D,), jnp.float32),
        "wv": lin(D, (D, D)), "bv": jnp.zeros((D,), jnp.float32),
        "wo": lin(D, (D, D)), "bo": jnp.zeros((D,), jnp.float32),
        "ffn_w1": lin(D, (D, Dffn)), "ffn_b1": jnp.zeros((Dffn,), jnp.float32),
        "ffn_w2": lin(Dffn, (Dffn, D)), "ffn_b2": jnp.zeros((D,), jnp.float32),
        "cls_w": lin(D, (D, nc)), "cls_b": jnp.zeros((nc,), jnp.float32),
        "reg_w": lin(D, (D, code)), "reg_b": jnp.zeros((code,), jnp.float32),
    }


def prepare_params(params, cfg):
    """One-off weight massaging hoisted out of the jitted hot path:
    flatten conv weights, fold 1/sqrt(D) into Wq, pack Wk|Wv and cls|reg,
    pre-cast to bf16 / reshape biases."""
    D = cfg["D"]
    nc, code = cfg["num_classes"], cfg["code_size"]
    scale = 1.0 / math.sqrt(D)
    ncr = _round_up(nc + code, 128)
    bf = jnp.bfloat16

    head_w = jnp.concatenate([params["cls_w"], params["reg_w"]], axis=1)
    head_b = jnp.concatenate([params["cls_b"], params["reg_b"]], axis=0)
    head_w = jnp.pad(head_w, ((0, 0), (0, ncr - nc - code)))
    head_b = jnp.pad(head_b, (0, ncr - nc - code))
    w_kv = jnp.concatenate([params["wk"], params["wv"]], axis=1)
    b_kv = jnp.concatenate([params["bk"], params["bv"]], axis=0)

    return {
        "bb_w1": params["bb_w1"].reshape(-1, params["bb_w1"].shape[-1]),
        "bb_b1": params["bb_b1"],
        "bb_w2": params["bb_w2"].reshape(-1, params["bb_w2"].shape[-1]).astype(bf),
        "bb_b2": params["bb_b2"],
        "neck_w": params["neck_w"].astype(bf),
        "neck_b": params["neck_b"].reshape(1, -1).astype(jnp.float32),
        "w_kv": w_kv.astype(bf),
        "b_kv": b_kv.reshape(1, -1).astype(jnp.float32),
        "pos_embed": params["pos_embed"].astype(bf),
        "query": params["query"],
        "wq": (params["wq"] * scale).astype(bf),
        "bq": (params["bq"] * scale).reshape(1, -1).astype(jnp.float32),
        "wo": params["wo"].astype(bf),
        "bo": params["bo"].reshape(1, -1).astype(jnp.float32),
        "ffn_w1": params["ffn_w1"].astype(bf),
        "ffn_b1": params["ffn_b1"].reshape(1, -1).astype(jnp.float32),
        "ffn_w2": params["ffn_w2"].astype(bf),
        "ffn_b2": params["ffn_b2"].reshape(1, -1).astype(jnp.float32),
        "head_w": head_w.astype(bf),
        "head_b": head_b.reshape(1, -1).astype(jnp.float32),
    }


# ---------------------------------------------------------------------------
# Forward
# ---------------------------------------------------------------------------
def omni_petr_forward(prep, imgs, cfg):
    """imgs: (B, Ncam, H, W, Cin) NHWC (== PyTorch (B, Ncam, Cin, H, W))."""
    B, Ncam, H, W, Cin = imgs.shape
    D, Nq = cfg["D"], cfg["Nq"]
    nc, code = cfg["num_classes"], cfg["code_size"]
    C1 = prep["bb_w1"].shape[-1]
    x = imgs.reshape(B * Ncam, H, W, Cin)

    # ---- backbone: two 3x3 stride-2 convs + ReLU ----
    oh1, ow1 = H // 2, W // 2
    patches = _im2col_3x3_s2(x)                                  # (N*oh1*ow1, 36)
    x = matmul_bias(patches, prep["bb_w1"], prep["bb_b1"], relu=True,
                    tm=128, out_dtype=jnp.bfloat16)
    x = x.reshape(B * Ncam, oh1, ow1, C1)
    x = conv3x3_s2(x, prep["bb_w2"], prep["bb_b2"], relu=True)   # bf16 out
    n_, oh2, ow2, C2 = x.shape
    Nk = Ncam * oh2 * ow2
    feat = x.reshape(B, Nk, C2)

    # ---- tiling (generation note: shrink tk for v7x's 64 MiB VMEM) ----
    tk = min(512, _round_up(Nk, 8))
    tq = min(256, _round_up(Nq, 8))
    Nk_pad = _round_up(Nk, tk)
    Nq_pad = _round_up(Nq, tq)

    pos = prep["pos_embed"]
    q0 = prep["query"]
    if Nk_pad != Nk:
        feat = jnp.pad(feat, ((0, 0), (0, Nk_pad - Nk), (0, 0)))
        pos = jnp.pad(pos, ((0, Nk_pad - Nk), (0, 0)))
    if Nq_pad != Nq:
        q0 = jnp.pad(q0, ((0, Nq_pad - Nq), (0, 0)))

    # ---- neck + K|V projection (one fused Pallas call, K/V bf16 outputs) ----
    k, v = neck_kv_project(feat, pos, prep["neck_w"], prep["neck_b"],
                           prep["w_kv"], prep["b_kv"], tk=tk)

    # ---- fused PETR head: Q proj + flash attention + Wo + FFN + cls|reg ----
    out = petr_head(q0, k, v, prep, nk=Nk, tq=tq, tk=tk)
    cls = out[:, :Nq, :nc]
    reg = out[:, :Nq, nc:nc + code]
    return {"cls_scores": cls, "bbox_preds": reg}


if __name__ == "__main__":
    # embed/hidden dims chosen as 128-multiples for lane-dense MXU outputs
    cfg = dict(Cin=4, C1=128, C2=128, D=128, Nq=8, Dffn=256,
               num_classes=3, code_size=10)
    B, Ncam, H, W = 2, 2, 16, 16
    # after two stride-2 convs: 16 -> 8 -> 4  =>  Nk = Ncam*4*4 = 32
    cfg["Nk"] = Ncam * (H // 4) * (W // 4)

    key = jax.random.PRNGKey(0)
    kp, kx = jax.random.split(key)
    params = init_params(kp, cfg)
    prep = prepare_params(params, cfg)        # weight massaging hoisted out
    imgs = jax.random.normal(kx, (B, Ncam, H, W, cfg["Cin"]), jnp.float32)

    fwd = jax.jit(lambda p, x: omni_petr_forward(p, x, cfg))
    out = fwd(prep, imgs)
    jax.block_until_ready(out)

    assert out["cls_scores"].shape == (B, cfg["Nq"], cfg["num_classes"])
    assert out["bbox_preds"].shape == (B, cfg["Nq"], cfg["code_size"])
    assert bool(jnp.all(jnp.isfinite(out["cls_scores"])))
    assert bool(jnp.all(jnp.isfinite(out["bbox_preds"])))
    print("KERNEL_OK")
</pallas_src>

<mosaic_0001>
module attributes {stable_mosaic.version = 11 : i64} {
  func.func @_matmul_kernel(%arg0: i32, %arg1: i32, %arg2: i32, %arg3: memref<128x48xbf16, #tpu.memory_space<vmem>>, %arg4: memref<48x128xbf16, #tpu.memory_space<vmem>>, %arg5: memref<1x128xf32, #tpu.memory_space<vmem>>, %arg6: memref<128x128xbf16, #tpu.memory_space<vmem>>, %arg7: memref<128x128xf32, #tpu.memory_space<vmem>>) attributes {dimension_semantics = [#tpu.dimension_semantics<parallel>, #tpu.dimension_semantics<parallel>, #tpu.dimension_semantics<arbitrary>], iteration_bounds = array<i64: 2, 1, 1>, scalar_prefetch = 0 : i64, scratch_operands = 1 : i64, tpu.core_type = #tpu.core_type<tc>, window_params = [{transform_indices = @transform_0, window_bounds = array<i64: 128, 48>}, {transform_indices = @transform_1, window_bounds = array<i64: 48, 128>}, {transform_indices = @transform_2, window_bounds = array<i64: 1, 128>}, {transform_indices = @transform_3, window_bounds = array<i64: 128, 128>}]} {
    %c0_i32 = arith.constant 0 : i32
    %0 = arith.cmpi eq, %arg2, %c0_i32 : i32
    %1 = arith.extui %0 : i1 to i32
    %c0_i32_0 = arith.constant 0 : i32
    %2 = arith.cmpi ne, %1, %c0_i32_0 : i32
    scf.if %2 {
      %cst_10 = arith.constant 0.000000e+00 : f32
      %12 = vector.broadcast %cst_10 : f32 to vector<128x128xf32>
      %c0_11 = arith.constant 0 : index
      %c0_12 = arith.constant 0 : index
      %13 = vector.load %arg7[%c0_11, %c0_12] : memref<128x128xf32, #tpu.memory_space<vmem>>, vector<128x128xf32>
      tpu.vector_store %arg7[%c0_11, %c0_12], %12 {strides = array<i32>} : memref<128x128xf32, #tpu.memory_space<vmem>>, vector<128x128xf32>,
    } else {
    }
    %c0 = arith.constant 0 : index
    %c0_1 = arith.constant 0 : index
    %3 = vector.load %arg7[%c0, %c0_1] : memref<128x128xf32, #tpu.memory_space<vmem>>, vector<128x128xf32>
    %c0_2 = arith.constant 0 : index
    %c0_3 = arith.constant 0 : index
    %4 = vector.load %arg3[%c0_2, %c0_3] : memref<128x48xbf16, #tpu.memory_space<vmem>>, vector<128x48xbf16>
    %c0_4 = arith.constant 0 : index
    %c0_5 = arith.constant 0 : index
    %5 = vector.load %arg4[%c0_4, %c0_5] : memref<48x128xbf16, #tpu.memory_space<vmem>>, vector<48x128xbf16>
    %cst = arith.constant dense<0.000000e+00> : vector<128x128xf32>
    %6 = tpu.matmul %4, %5, %cst {dimension_numbers = #tpu.dot_dimension_numbers<[1], [0], [0], [1], [0, 0, 1, 1], [], []>} : vector<128x48xbf16>, vector<48x128xbf16>, vector<128x128xf32> -> vector<128x128xf32>
    %7 = arith.addf %3, %6 : vector<128x128xf32>
    %c0_6 = arith.constant 0 : index
    %c0_7 = arith.constant 0 : index
    %8 = vector.load %arg7[%c0_6, %c0_7] : memref<128x128xf32, #tpu.memory_space<vmem>>, vector<128x128xf32>
    tpu.vector_store %arg7[%c0_6, %c0_7], %7 {strides = array<i32>} : memref<128x128xf32, #tpu.memory_space<vmem>>, vector<128x128xf32>,
    %c0_i32_8 = arith.constant 0 : i32
    %9 = arith.cmpi eq, %arg2, %c0_i32_8 : i32
    %10 = arith.extui %9 : i1 to i32
    %c0_i32_9 = arith.constant 0 : i32
    %11 = arith.cmpi ne, %10, %c0_i32_9 : i32
    scf.if %11 {
      %c0_10 = arith.constant 0 : index
      %c0_11 = arith.constant 0 : index
      %12 = vector.load %arg7[%c0_10, %c0_11] : memref<128x128xf32, #tpu.memory_space<vmem>>, vector<128x128xf32>
      %c0_12 = arith.constant 0 : index
      %c0_13 = arith.constant 0 : index
      %13 = vector.load %arg5[%c0_12, %c0_13] : memref<1x128xf32, #tpu.memory_space<vmem>>, vector<1x128xf32>
      %14 = vector.broadcast %13 : vector<1x128xf32> to vector<128x128xf32>
      %15 = arith.addf %12, %14 : vector<128x128xf32>
      %cst_14 = arith.constant 0.000000e+00 : f32
      %16 = vector.broadcast %cst_14 : f32 to vector<128x128xf32>
      %17 = arith.maximumf %15, %16 : vector<128x128xf32>
      %18 = arith.truncf %17 : vector<128x128xf32> to vector<128x128xbf16>
      %c0_15 = arith.constant 0 : index
      %c0_16 = arith.constant 0 : index
      %19 = vector.load %arg6[%c0_15, %c0_16] : memref<128x128xbf16, #tpu.memory_space<vmem>>, vector<128x128xbf16>
      tpu.vector_store %arg6[%c0_15, %c0_16], %18 {strides = array<i32>} : memref<128x128xbf16, #tpu.memory_space<vmem>>, vector<128x128xbf16>,
    } else {
    }
    return
  }
  func.func @transform_0(%arg0: i32, %arg1: i32, %arg2: i32) -> (i32, i32) {
    %c0_i32 = arith.constant 0 : i32
    return %arg0, %arg2 : i32, i32
  }
  func.func @transform_1(%arg0: i32, %arg1: i32, %arg2: i32) -> (i32, i32) {
    %c0_i32 = arith.constant 0 : i32
    return %arg2, %arg1 : i32, i32
  }
  func.func @transform_2(%arg0: i32, %arg1: i32, %arg2: i32) -> (i32, i32) {
    %c0_i32 = arith.constant 0 : i32
    %c0_i32_0 = arith.constant 0 : i32
    return %c0_i32, %arg1 : i32, i32
  }
  func.func @transform_3(%arg0: i32, %arg1: i32, %arg2: i32) -> (i32, i32) {
    %c0_i32 = arith.constant 0 : i32
    return %arg0, %arg1 : i32, i32
  }
}

module attributes {stable_mosaic.version = 11 : i64} {
  func.func @_conv3x3_s2_kernel(%arg0: i32, %arg1: i32, %arg2: memref<1x1x2x5x256xbf16, #tpu.memory_space<vmem>>, %arg3: memref<1x1x2x5x256xbf16, #tpu.memory_space<vmem>>, %arg4: memref<1152x128xbf16, #tpu.memory_space<vmem>>, %arg5: memref<1x128xf32, #tpu.memory_space<vmem>>, %arg6: memref<1x1x4x128xbf16, #tpu.memory_space<vmem>>) attributes {dimension_semantics = [#tpu.dimension_semantics<parallel>, #tpu.dimension_semantics<parallel>], iteration_bounds = array<i64: 4, 4>, scalar_prefetch = 0 : i64, scratch_operands = 0 : i64, tpu.core_type = #tpu.core_type<tc>, window_params = [{transform_indices = @transform_0, window_bounds = array<i64: 1, 1, 2, 5, 256>}, {transform_indices = @transform_1, window_bounds = array<i64: 1, 1, 2, 5, 256>}, {pipeline_mode = #tpu.pipeline_mode<synchronous>, transform_indices = @transform_2, window_bounds = array<i64: 1152, 128>}, {pipeline_mode = #tpu.pipeline_mode<synchronous>, transform_indices = @transform_3, window_bounds = array<i64: 1, 128>}, {transform_indices = @transform_4, window_bounds = array<i64: 1, 1, 4, 128>}]} {
    %c0 = arith.constant 0 : index
    %c0_0 = arith.constant 0 : index
    %c0_1 = arith.constant 0 : index
    %c0_2 = arith.constant 0 : index
    %c0_3 = arith.constant 0 : index
    %0 = vector.load %arg2[%c0, %c0_0, %c0_1, %c0_2, %c0_3] : memref<1x1x2x5x256xbf16, #tpu.memory_space<vmem>>, vector<1x1x2x5x256xbf16>
    %1 = vector.shape_cast %0 : vector<1x1x2x5x256xbf16> to vector<2x5x256xbf16>
    %2 = vector.extract_strided_slice %1 {offsets = [0, 0, 0], sizes = [1, 5, 256], strides = [1, 1, 1]} : vector<2x5x256xbf16> to vector<1x5x256xbf16>
    %3 = vector.shape_cast %2 : vector<1x5x256xbf16> to vector<5x256xbf16>
    %4 = vector.extract_strided_slice %1 {offsets = [1, 0, 0], sizes = [1, 5, 256], strides = [1, 1, 1]} : vector<2x5x256xbf16> to vector<1x5x256xbf16>
    %5 = vector.shape_cast %4 : vector<1x5x256xbf16> to vector<5x256xbf16>
    %c0_4 = arith.constant 0 : index
    %c0_5 = arith.constant 0 : index
    %c0_6 = arith.constant 0 : index
    %c0_7 = arith.constant 0 : index
    %c0_8 = arith.constant 0 : index
    %6 = vector.load %arg3[%c0_4, %c0_5, %c0_6, %c0_7, %c0_8] : memref<1x1x2x5x256xbf16, #tpu.memory_space<vmem>>, vector<1x1x1x5x256xbf16>
    %7 = vector.shape_cast %6 : vector<1x1x1x5x256xbf16> to vector<5x256xbf16>
    %8 = vector.extract_strided_slice %3 {offsets = [0, 0], sizes = [4, 256], strides = [1, 1]} : vector<5x256xbf16> to vector<4x256xbf16>
    %9 = vector.extract_strided_slice %3 {offsets = [1, 0], sizes = [4, 128], strides = [1, 1]} : vector<5x256xbf16> to vector<4x128xbf16>
    %10 = vector.extract_strided_slice %5 {offsets = [0, 0], sizes = [4, 256], strides = [1, 1]} : vector<5x256xbf16> to vector<4x256xbf16>
    %11 = vector.extract_strided_slice %5 {offsets = [1, 0], sizes = [4, 128], strides = [1, 1]} : vector<5x256xbf16> to vector<4x128xbf16>
    %12 = vector.extract_strided_slice %7 {offsets = [0, 0], sizes = [4, 256], strides = [1, 1]} : vector<5x256xbf16> to vector<4x256xbf16>
    %13 = vector.extract_strided_slice %7 {offsets = [1, 0], sizes = [4, 128], strides = [1, 1]} : vector<5x256xbf16> to vector<4x128xbf16>
    %14 = tpu.concatenate %8, %9, %10, %11, %12, %13 in 1 : vector<4x256xbf16>, vector<4x128xbf16>, vector<4x256xbf16>, vector<4x128xbf16>, vector<4x256xbf16>, vector<4x128xbf16> -> vector<4x1152xbf16>
    %c0_9 = arith.constant 0 : index
    %c0_10 = arith.constant 0 : index
    %15 = vector.load %arg4[%c0_9, %c0_10] : memref<1152x128xbf16, #tpu.memory_space<vmem>>, vector<1152x128xbf16>
    %cst = arith.constant dense<0.000000e+00> : vector<4x128xf32>
    %16 = tpu.matmul %14, %15, %cst {dimension_numbers = #tpu.dot_dimension_numbers<[1], [0], [0], [1], [0, 0, 1, 1], [], []>} : vector<4x1152xbf16>, vector<1152x128xbf16>, vector<4x128xf32> -> vector<4x128xf32>
    %c0_11 = arith.constant 0 : index
    %c0_12 = arith.constant 0 : index
    %17 = vector.load %arg5[%c0_11, %c0_12] : memref<1x128xf32, #tpu.memory_space<vmem>>, vector<1x128xf32>
    %18 = vector.broadcast %17 : vector<1x128xf32> to vector<4x128xf32>
    %19 = arith.addf %16, %18 : vector<4x128xf32>
    %cst_13 = arith.constant 0.000000e+00 : f32
    %20 = vector.broadcast %cst_13 : f32 to vector<4x128xf32>
    %21 = arith.maximumf %19, %20 : vector<4x128xf32>
    %22 = arith.truncf %21 : vector<4x128xf32> to vector<4x128xbf16>
    %c0_14 = arith.constant 0 : index
    %c0_15 = arith.constant 0 : index
    %c0_16 = arith.constant 0 : index
    %c0_17 = arith.constant 0 : index
    %23 = vector.load %arg6[%c0_14, %c0_15, %c0_16, %c0_17] : memref<1x1x4x128xbf16, #tpu.memory_space<vmem>>, vector<1x1x4x128xbf16>
    %24 = vector.shape_cast %23 : vector<1x1x4x128xbf16> to vector<4x128xbf16>
    %25 = vector.shape_cast %22 : vector<4x128xbf16> to vector<1x1x4x128xbf16>
    tpu.vector_store %arg6[%c0_14, %c0_15, %c0_16, %c0_17], %25 {strides = array<i32>} : memref<1x1x4x128xbf16, #tpu.memory_space<vmem>>, vector<1x1x4x128xbf16>,
    return
  }
  func.func @transform_0(%arg0: i32, %arg1: i32) -> (i32, i32, i32, i32, i32) {
    %c0_i32 = arith.constant 0 : i32
    %c0_i32_0 = arith.constant 0 : i32
    %c0_i32_1 = arith.constant 0 : i32
    %c0_i32_2 = arith.constant 0 : i32
    return %arg0, %arg1, %c0_i32, %c0_i32_0, %c0_i32_1 : i32, i32, i32, i32, i32
  }
  func.func @transform_1(%arg0: i32, %arg1: i32) -> (i32, i32, i32, i32, i32) {
    %c1_i32 = arith.constant 1 : i32
    %0 = arith.addi %arg1, %c1_i32 : i32
    %c0_i32 = arith.constant 0 : i32
    %c0_i32_0 = arith.constant 0 : i32
    %c0_i32_1 = arith.constant 0 : i32
    %c0_i32_2 = arith.constant 0 : i32
    return %arg0, %0, %c0_i32, %c0_i32_0, %c0_i32_1 : i32, i32, i32, i32, i32
  }
  func.func @transform_2(%arg0: i32, %arg1: i32) -> (i32, i32) {
    %c0_i32 = arith.constant 0 : i32
    %c0_i32_0 = arith.constant 0 : i32
    %c0_i32_1 = arith.constant 0 : i32
    return %c0_i32, %c0_i32_0 : i32, i32
  }
  func.func @transform_3(%arg0: i32, %arg1: i32) -> (i32, i32) {
    %c0_i32 = arith.constant 0 : i32
    %c0_i32_0 = arith.constant 0 : i32
    %c0_i32_1 = arith.constant 0 : i32
    return %c0_i32, %c0_i32_0 : i32, i32
  }
  func.func @transform_4(%arg0: i32, %arg1: i32) -> (i32, i32, i32, i32) {
    %c0_i32 = arith.constant 0 : i32
    %c0_i32_0 = arith.constant 0 : i32
    %c0_i32_1 = arith.constant 0 : i32
    return %arg0, %arg1, %c0_i32, %c0_i32_0 : i32, i32, i32, i32
  }
}

module attributes {stable_mosaic.version = 11 : i64} {
  func.func @_neck_kv_kernel(%arg0: i32, %arg1: i32, %arg2: memref<1x32x128xbf16, #tpu.memory_space<vmem>>, %arg3: memref<32x128xbf16, #tpu.memory_space<vmem>>, %arg4: memref<128x128xbf16, #tpu.memory_space<vmem>>, %arg5: memref<1x128xf32, #tpu.memory_space<vmem>>, %arg6: memref<128x256xbf16, #tpu.memory_space<vmem>>, %arg7: memref<1x256xf32, #tpu.memory_space<vmem>>, %arg8: memref<1x32x128xbf16, #tpu.memory_space<vmem>>, %arg9: memref<1x32x128xbf16, #tpu.memory_space<vmem>>) attributes {dimension_semantics = [#tpu.dimension_semantics<parallel>, #tpu.dimension_semantics<parallel>], iteration_bounds = array<i64: 2, 1>, scalar_prefetch = 0 : i64, scratch_operands = 0 : i64, tpu.core_type = #tpu.core_type<tc>, window_params = [{transform_indices = @transform_0, window_bounds = array<i64: 1, 32, 128>}, {transform_indices = @transform_1, window_bounds = array<i64: 32, 128>}, {pipeline_mode = #tpu.pipeline_mode<synchronous>, transform_indices = @transform_2, window_bounds = array<i64: 128, 128>}, {pipeline_mode = #tpu.pipeline_mode<synchronous>, transform_indices = @transform_3, window_bounds = array<i64: 1, 128>}, {pipeline_mode = #tpu.pipeline_mode<synchronous>, transform_indices = @transform_4, window_bounds = array<i64: 128, 256>}, {pipeline_mode = #tpu.pipeline_mode<synchronous>, transform_indices = @transform_5, window_bounds = array<i64: 1, 256>}, {transform_indices = @transform_6, window_bounds = array<i64: 1, 32, 128>}, {transform_indices = @transform_7, window_bounds = array<i64: 1, 32, 128>}]} {
    %c0 = arith.constant 0 : index
    %c0_0 = arith.constant 0 : index
    %c0_1 = arith.constant 0 : index
    %0 = vector.load %arg2[%c0, %c0_0, %c0_1] : memref<1x32x128xbf16, #tpu.memory_space<vmem>>, vector<1x32x128xbf16>
    %1 = vector.shape_cast %0 : vector<1x32x128xbf16> to vector<32x128xbf16>
    %c0_2 = arith.constant 0 : index
    %c0_3 = arith.constant 0 : index
    %2 = vector.load %arg4[%c0_2, %c0_3] : memref<128x128xbf16, #tpu.memory_space<vmem>>, vector<128x128xbf16>
    %cst = arith.constant dense<0.000000e+00> : vector<32x128xf32>
    %3 = tpu.matmul %1, %2, %cst {dimension_numbers = #tpu.dot_dimension_numbers<[1], [0], [0], [1], [0, 0, 1, 1], [], []>} : vector<32x128xbf16>, vector<128x128xbf16>, vector<32x128xf32> -> vector<32x128xf32>
    %c0_4 = arith.constant 0 : index
    %c0_5 = arith.constant 0 : index
    %4 = vector.load %arg5[%c0_4, %c0_5] : memref<1x128xf32, #tpu.memory_space<vmem>>, vector<1x128xf32>
    %5 = vector.broadcast %4 : vector<1x128xf32> to vector<32x128xf32>
    %6 = arith.addf %3, %5 : vector<32x128xf32>
    %c0_6 = arith.constant 0 : index
    %c0_7 = arith.constant 0 : index
    %7 = vector.load %arg3[%c0_6, %c0_7] : memref<32x128xbf16, #tpu.memory_space<vmem>>, vector<32x128xbf16>
    %8 = arith.extf %7 : vector<32x128xbf16> to vector<32x128xf32>
    %9 = arith.addf %6, %8 : vector<32x128xf32>
    %10 = arith.truncf %9 : vector<32x128xf32> to vector<32x128xbf16>
    %c0_8 = arith.constant 0 : index
    %c0_9 = arith.constant 0 : index
    %11 = vector.load %arg6[%c0_8, %c0_9] : memref<128x256xbf16, #tpu.memory_space<vmem>>, vector<128x256xbf16>
    %cst_10 = arith.constant dense<0.000000e+00> : vector<32x256xf32>
    %12 = tpu.matmul %10, %11, %cst_10 {dimension_numbers = #tpu.dot_dimension_numbers<[1], [0], [0], [1], [0, 0, 1, 1], [], []>} : vector<32x128xbf16>, vector<128x256xbf16>, vector<32x256xf32> -> vector<32x256xf32>
    %c0_11 = arith.constant 0 : index
    %c0_12 = arith.constant 0 : index
    %13 = vector.load %arg7[%c0_11, %c0_12] : memref<1x256xf32, #tpu.memory_space<vmem>>, vector<1x256xf32>
    %14 = vector.broadcast %13 : vector<1x256xf32> to vector<32x256xf32>
    %15 = arith.addf %12, %14 : vector<32x256xf32>
    %16 = vector.extract_strided_slice %15 {offsets = [0, 0], sizes = [32, 128], strides = [1, 1]} : vector<32x256xf32> to vector<32x128xf32>
    %17 = arith.truncf %16 : vector<32x128xf32> to vector<32x128xbf16>
    %c0_13 = arith.constant 0 : index
    %c0_14 = arith.constant 0 : index
    %c0_15 = arith.constant 0 : index
    %18 = vector.load %arg8[%c0_13, %c0_14, %c0_15] : memref<1x32x128xbf16, #tpu.memory_space<vmem>>, vector<1x32x128xbf16>
    %19 = vector.shape_cast %18 : vector<1x32x128xbf16> to vector<32x128xbf16>
    %20 = vector.shape_cast %17 : vector<32x128xbf16> to vector<1x32x128xbf16>
    tpu.vector_store %arg8[%c0_13, %c0_14, %c0_15], %20 {strides = array<i32>} : memref<1x32x128xbf16, #tpu.memory_space<vmem>>, vector<1x32x128xbf16>,
    %21 = vector.extract_strided_slice %15 {offsets = [0, 128], sizes = [32, 128], strides = [1, 1]} : vector<32x256xf32> to vector<32x128xf32>
    %22 = arith.truncf %21 : vector<32x128xf32> to vector<32x128xbf16>
    %c0_16 = arith.constant 0 : index
    %c0_17 = arith.constant 0 : index
    %c0_18 = arith.constant 0 : index
    %23 = vector.load %arg9[%c0_16, %c0_17, %c0_18] : memref<1x32x128xbf16, #tpu.memory_space<vmem>>, vector<1x32x128xbf16>
    %24 = vector.shape_cast %23 : vector<1x32x128xbf16> to vector<32x128xbf16>
    %25 = vector.shape_cast %22 : vector<32x128xbf16> to vector<1x32x128xbf16>
    tpu.vector_store %arg9[%c0_16, %c0_17, %c0_18], %25 {strides = array<i32>} : memref<1x32x128xbf16, #tpu.memory_space<vmem>>, vector<1x32x128xbf16>,
    return
  }
  func.func @transform_0(%arg0: i32, %arg1: i32) -> (i32, i32, i32) {
    %c0_i32 = arith.constant 0 : i32
    %c0_i32_0 = arith.constant 0 : i32
    return %arg0, %arg1, %c0_i32 : i32, i32, i32
  }
  func.func @transform_1(%arg0: i32, %arg1: i32) -> (i32, i32) {
    %c0_i32 = arith.constant 0 : i32
    %c0_i32_0 = arith.constant 0 : i32
    return %arg1, %c0_i32 : i32, i32
  }
  func.func @transform_2(%arg0: i32, %arg1: i32) -> (i32, i32) {
    %c0_i32 = arith.constant 0 : i32
    %c0_i32_0 = arith.constant 0 : i32
    %c0_i32_1 = arith.constant 0 : i32
    return %c0_i32, %c0_i32_0 : i32, i32
  }
  func.func @transform_3(%arg0: i32, %arg1: i32) -> (i32, i32) {
    %c0_i32 = arith.constant 0 : i32
    %c0_i32_0 = arith.constant 0 : i32
    %c0_i32_1 = arith.constant 0 : i32
    return %c0_i32, %c0_i32_0 : i32, i32
  }
  func.func @transform_4(%arg0: i32, %arg1: i32) -> (i32, i32) {
    %c0_i32 = arith.constant 0 : i32
    %c0_i32_0 = arith.constant 0 : i32
    %c0_i32_1 = arith.constant 0 : i32
    return %c0_i32, %c0_i32_0 : i32, i32
  }
  func.func @transform_5(%arg0: i32, %arg1: i32) -> (i32, i32) {
    %c0_i32 = arith.constant 0 : i32
    %c0_i32_0 = arith.constant 0 : i32
    %c0_i32_1 = arith.constant 0 : i32
    return %c0_i32, %c0_i32_0 : i32, i32
  }
  func.func @transform_6(%arg0: i32, %arg1: i32) -> (i32, i32, i32) {
    %c0_i32 = arith.constant 0 : i32
    %c0_i32_0 = arith.constant 0 : i32
    return %arg0, %arg1, %c0_i32 : i32, i32, i32
  }
  func.func @transform_7(%arg0: i32, %arg1: i32) -> (i32, i32, i32) {
    %c0_i32 = arith.constant 0 : i32
    %c0_i32_0 = arith.constant 0 : i32
    return %arg0, %arg1, %c0_i32 : i32, i32, i32
  }
}

module attributes {stable_mosaic.version = 11 : i64} {
  func.func @_petr_head_kernel(%arg0: i32, %arg1: i32, %arg2: i32, %arg3: memref<8x128xf32, #tpu.memory_space<vmem>>, %arg4: memref<1x32x128xbf16, #tpu.memory_space<vmem>>, %arg5: memref<1x32x128xbf16, #tpu.memory_space<vmem>>, %arg6: memref<128x128xbf16, #tpu.memory_space<vmem>>, %arg7: memref<1x128xf32, #tpu.memory_space<vmem>>, %arg8: memref<128x128xbf16, #tpu.memory_space<vmem>>, %arg9: memref<1x128xf32, #tpu.memory_space<vmem>>, %arg10: memref<128x256xbf16, #tpu.memory_space<vmem>>, %arg11: memref<1x256xf32, #tpu.memory_space<vmem>>, %arg12: memref<256x128xbf16, #tpu.memory_space<vmem>>, %arg13: memref<1x128xf32, #tpu.memory_space<vmem>>, %arg14: memref<128x128xbf16, #tpu.memory_space<vmem>>, %arg15: memref<1x128xf32, #tpu.memory_space<vmem>>, %arg16: memref<1x8x128xf32, #tpu.memory_space<vmem>>, %arg17: memref<8x128xbf16, #tpu.memory_space<vmem>>, %arg18: memref<8x1xf32, #tpu.memory_space<vmem>>, %arg19: memref<8x1xf32, #tpu.memory_space<vmem>>, %arg20: memref<8x128xf32, #tpu.memory_space<vmem>>) attributes {dimension_semantics = [#tpu.dimension_semantics<parallel>, #tpu.dimension_semantics<parallel>, #tpu.dimension_semantics<arbitrary>], iteration_bounds = array<i64: 2, 1, 1>, scalar_prefetch = 0 : i64, scratch_operands = 4 : i64, tpu.core_type = #tpu.core_type<tc>, window_params = [{transform_indices = @transform_0, window_bounds = array<i64: 8, 128>}, {transform_indices = @transform_1, window_bounds = array<i64: 1, 32, 128>}, {transform_indices = @transform_2, window_bounds = array<i64: 1, 32, 128>}, {pipeline_mode = #tpu.pipeline_mode<synchronous>, transform_indices = @transform_3, window_bounds = array<i64: 128, 128>}, {pipeline_mode = #tpu.pipeline_mode<synchronous>, transform_indices = @transform_4, window_bounds = array<i64: 1, 128>}, {pipeline_mode = #tpu.pipeline_mode<synchronous>, transform_indices = @transform_5, window_bounds = array<i64: 128, 128>}, {pipeline_mode = #tpu.pipeline_mode<synchronous>, transform_indices = @transform_6, window_bounds = array<i64: 1, 128>}, {pipeline_mode = #tpu.pipeline_mode<synchronous>, transform_indices = @transform_7, window_bounds = array<i64: 128, 256>}, {pipeline_mode = #tpu.pipeline_mode<synchronous>, transform_indices = @transform_8, window_bounds = array<i64: 1, 256>}, {pipeline_mode = #tpu.pipeline_mode<synchronous>, transform_indices = @transform_9, window_bounds = array<i64: 256, 128>}, {pipeline_mode = #tpu.pipeline_mode<synchronous>, transform_indices = @transform_10, window_bounds = array<i64: 1, 128>}, {pipeline_mode = #tpu.pipeline_mode<synchronous>, transform_indices = @transform_11, window_bounds = array<i64: 128, 128>}, {pipeline_mode = #tpu.pipeline_mode<synchronous>, transform_indices = @transform_12, window_bounds = array<i64: 1, 128>}, {transform_indices = @transform_13, window_bounds = array<i64: 1, 8, 128>}]} {
    %c0_i32 = arith.constant 0 : i32
    %0 = arith.cmpi eq, %arg2, %c0_i32 : i32
    %1 = arith.extui %0 : i1 to i32
    %c0_i32_0 = arith.constant 0 : i32
    %2 = arith.cmpi ne, %1, %c0_i32_0 : i32
    scf.if %2 {
      %c0_25 = arith.constant 0 : index
      %c0_26 = arith.constant 0 : index
      %35 = vector.load %arg3[%c0_25, %c0_26] : memref<8x128xf32, #tpu.memory_space<vmem>>, vector<8x128xf32>
      %36 = arith.truncf %35 : vector<8x128xf32> to vector<8x128xbf16>
      %c0_27 = arith.constant 0 : index
      %c0_28 = arith.constant 0 : index
      %37 = vector.load %arg6[%c0_27, %c0_28] : memref<128x128xbf16, #tpu.memory_space<vmem>>, vector<128x128xbf16>
      %cst_29 = arith.constant dense<0.000000e+00> : vector<8x128xf32>
      %38 = tpu.matmul %36, %37, %cst_29 {dimension_numbers = #tpu.dot_dimension_numbers<[1], [0], [0], [1], [0, 0, 1, 1], [], []>} : vector<8x128xbf16>, vector<128x128xbf16>, vector<8x128xf32> -> vector<8x128xf32>
      %c0_30 = arith.constant 0 : index
      %c0_31 = arith.constant 0 : index
      %39 = vector.load %arg7[%c0_30, %c0_31] : memref<1x128xf32, #tpu.memory_space<vmem>>, vector<1x128xf32>
      %40 = vector.broadcast %39 : vector<1x128xf32> to vector<8x128xf32>
      %41 = arith.addf %38, %40 : vector<8x128xf32>
      %42 = arith.truncf %41 : vector<8x128xf32> to vector<8x128xbf16>
      %c0_32 = arith.constant 0 : index
      %c0_33 = arith.constant 0 : index
      %43 = vector.load %arg17[%c0_32, %c0_33] : memref<8x128xbf16, #tpu.memory_space<vmem>>, vector<8x128xbf16>
      tpu.vector_store %arg17[%c0_32, %c0_33], %42 {strides = array<i32>} : memref<8x128xbf16, #tpu.memory_space<vmem>>, vector<8x128xbf16>,
      %cst_34 = arith.constant 0xFF800000 : f32
      %44 = vector.broadcast %cst_34 : f32 to vector<8x1xf32>
      %c0_35 = arith.constant 0 : index
      %c0_36 = arith.constant 0 : index
      %45 = vector.load %arg18[%c0_35, %c0_36] : memref<8x1xf32, #tpu.memory_space<vmem>>, vector<8x1xf32>
      tpu.vector_store %arg18[%c0_35, %c0_36], %44 {strides = array<i32>} : memref<8x1xf32, #tpu.memory_space<vmem>>, vector<8x1xf32>,
      %cst_37 = arith.constant 0.000000e+00 : f32
      %46 = vector.broadcast %cst_37 : f32 to vector<8x1xf32>
      %c0_38 = arith.constant 0 : index
      %c0_39 = arith.constant 0 : index
      %47 = vector.load %arg19[%c0_38, %c0_39] : memref<8x1xf32, #tpu.memory_space<vmem>>, vector<8x1xf32>
      tpu.vector_store %arg19[%c0_38, %c0_39], %46 {strides = array<i32>} : memref<8x1xf32, #tpu.memory_space<vmem>>, vector<8x1xf32>,
      %cst_40 = arith.constant 0.000000e+00 : f32
      %48 = vector.broadcast %cst_40 : f32 to vector<8x128xf32>
      %c0_41 = arith.constant 0 : index
      %c0_42 = arith.constant 0 : index
      %49 = vector.load %arg20[%c0_41, %c0_42] : memref<8x128xf32, #tpu.memory_space<vmem>>, vector<8x128xf32>
      tpu.vector_store %arg20[%c0_41, %c0_42], %48 {strides = array<i32>} : memref<8x128xf32, #tpu.memory_space<vmem>>, vector<8x128xf32>,
    } else {
    }
    %c0 = arith.constant 0 : index
    %c0_1 = arith.constant 0 : index
    %c0_2 = arith.constant 0 : index
    %3 = vector.load %arg4[%c0, %c0_1, %c0_2] : memref<1x32x128xbf16, #tpu.memory_space<vmem>>, vector<1x32x128xbf16>
    %4 = vector.shape_cast %3 : vector<1x32x128xbf16> to vector<32x128xbf16>
    %c0_3 = arith.constant 0 : index
    %c0_4 = arith.constant 0 : index
    %c0_5 = arith.constant 0 : index
    %5 = vector.load %arg5[%c0_3, %c0_4, %c0_5] : memref<1x32x128xbf16, #tpu.memory_space<vmem>>, vector<1x32x128xbf16>
    %6 = vector.shape_cast %5 : vector<1x32x128xbf16> to vector<32x128xbf16>
    %c0_6 = arith.constant 0 : index
    %c0_7 = arith.constant 0 : index
    %7 = vector.load %arg17[%c0_6, %c0_7] : memref<8x128xbf16, #tpu.memory_space<vmem>>, vector<8x128xbf16>
    %cst = arith.constant dense<0.000000e+00> : vector<8x32xf32>
    %8 = tpu.matmul %7, %4, %cst {dimension_numbers = #tpu.dot_dimension_numbers<[1], [1], [0], [0], [0, 0, 1, 0], [], []>} : vector<8x128xbf16>, vector<32x128xbf16>, vector<8x32xf32> -> vector<8x32xf32>
    %c0_8 = arith.constant 0 : index
    %c0_9 = arith.constant 0 : index
    %9 = vector.load %arg18[%c0_8, %c0_9] : memref<8x1xf32, #tpu.memory_space<vmem>>, vector<8x1xf32>
    %cst_10 = arith.constant dense<0xFF800000> : vector<8xf32>
    %10 = vector.multi_reduction <maximumf>, %8, %cst_10 [1] : vector<8x32xf32> to vector<8xf32>
    %11 = vector.shape_cast %10 : vector<8xf32> to vector<8x1xf32>
    %12 = arith.maximumf %9, %11 : vector<8x1xf32>
    %13 = arith.subf %9, %12 : vector<8x1xf32>
    %14 = math.exp %13 : vector<8x1xf32>
    %15 = vector.broadcast %12 : vector<8x1xf32> to vector<8x32xf32>
    %16 = arith.subf %8, %15 : vector<8x32xf32>
    %17 = math.exp %16 : vector<8x32xf32>
    %c0_11 = arith.constant 0 : index
    %c0_12 = arith.constant 0 : index
    %18 = vector.load %arg19[%c0_11, %c0_12] : memref<8x1xf32, #tpu.memory_space<vmem>>, vector<8x1xf32>
    %19 = arith.mulf %14, %18 : vector<8x1xf32>
    %cst_13 = arith.constant dense<0.000000e+00> : vector<8xf32>
    %20 = vector.multi_reduction <add>, %17, %cst_13 [1] : vector<8x32xf32> to vector<8xf32>
    %21 = vector.shape_cast %20 : vector<8xf32> to vector<8x1xf32>
    %22 = arith.addf %19, %21 : vector<8x1xf32>
    %c0_14 = arith.constant 0 : index
    %c0_15 = arith.constant 0 : index
    %23 = vector.load %arg19[%c0_14, %c0_15] : memref<8x1xf32, #tpu.memory_space<vmem>>, vector<8x1xf32>
    tpu.vector_store %arg19[%c0_14, %c0_15], %22 {strides = array<i32>} : memref<8x1xf32, #tpu.memory_space<vmem>>, vector<8x1xf32>,
    %c0_16 = arith.constant 0 : index
    %c0_17 = arith.constant 0 : index
    %24 = vector.load %arg20[%c0_16, %c0_17] : memref<8x128xf32, #tpu.memory_space<vmem>>, vector<8x128xf32>
    %25 = vector.broadcast %14 : vector<8x1xf32> to vector<8x128xf32>
    %26 = arith.mulf %25, %24 : vector<8x128xf32>
    %27 = arith.truncf %17 : vector<8x32xf32> to vector<8x32xbf16>
    %cst_18 = arith.constant dense<0.000000e+00> : vector<8x128xf32>
    %28 = tpu.matmul %27, %6, %cst_18 {dimension_numbers = #tpu.dot_dimension_numbers<[1], [0], [0], [1], [0, 0, 1, 1], [], []>} : vector<8x32xbf16>, vector<32x128xbf16>, vector<8x128xf32> -> vector<8x128xf32>
    %29 = arith.addf %26, %28 : vector<8x128xf32>
    %c0_19 = arith.constant 0 : index
    %c0_20 = arith.constant 0 : index
    %30 = vector.load %arg20[%c0_19, %c0_20] : memref<8x128xf32, #tpu.memory_space<vmem>>, vector<8x128xf32>
    tpu.vector_store %arg20[%c0_19, %c0_20], %29 {strides = array<i32>} : memref<8x128xf32, #tpu.memory_space<vmem>>, vector<8x128xf32>,
    %c0_21 = arith.constant 0 : index
    %c0_22 = arith.constant 0 : index
    %31 = vector.load %arg18[%c0_21, %c0_22] : memref<8x1xf32, #tpu.memory_space<vmem>>, vector<8x1xf32>
    tpu.vector_store %arg18[%c0_21, %c0_22], %12 {strides = array<i32>} : memref<8x1xf32, #tpu.memory_space<vmem>>, vector<8x1xf32>,
    %c0_i32_23 = arith.constant 0 : i32
    %32 = arith.cmpi eq, %arg2, %c0_i32_23 : i32
    %33 = arith.extui %32 : i1 to i32
    %c0_i32_24 = arith.constant 0 : i32
    %34 = arith.cmpi ne, %33, %c0_i32_24 : i32
    scf.if %34 {
      %c0_25 = arith.constant 0 : index
      %c0_26 = arith.constant 0 : index
      %35 = vector.load %arg20[%c0_25, %c0_26] : memref<8x128xf32, #tpu.memory_space<vmem>>, vector<8x128xf32>
      %c0_27 = arith.constant 0 : index
      %c0_28 = arith.constant 0 : index
      %36 = vector.load %arg19[%c0_27, %c0_28] : memref<8x1xf32, #tpu.memory_space<vmem>>, vector<8x1xf32>
      %37 = vector.broadcast %36 : vector<8x1xf32> to vector<8x128xf32>
      %38 = arith.divf %35, %37 : vector<8x128xf32>
      %39 = arith.truncf %38 : vector<8x128xf32> to vector<8x128xbf16>
      %c0_29 = arith.constant 0 : index
      %c0_30 = arith.constant 0 : index
      %40 = vector.load %arg8[%c0_29, %c0_30] : memref<128x128xbf16, #tpu.memory_space<vmem>>, vector<128x128xbf16>
      %cst_31 = arith.constant dense<0.000000e+00> : vector<8x128xf32>
      %41 = tpu.matmul %39, %40, %cst_31 {dimension_numbers = #tpu.dot_dimension_numbers<[1], [0], [0], [1], [0, 0, 1, 1], [], []>} : vector<8x128xbf16>, vector<128x128xbf16>, vector<8x128xf32> -> vector<8x128xf32>
      %c0_32 = arith.constant 0 : index
      %c0_33 = arith.constant 0 : index
      %42 = vector.load %arg9[%c0_32, %c0_33] : memref<1x128xf32, #tpu.memory_space<vmem>>, vector<1x128xf32>
      %43 = vector.broadcast %42 : vector<1x128xf32> to vector<8x128xf32>
      %44 = arith.addf %41, %43 : vector<8x128xf32>
      %c0_34 = arith.constant 0 : index
      %c0_35 = arith.constant 0 : index
      %45 = vector.load %arg3[%c0_34, %c0_35] : memref<8x128xf32, #tpu.memory_space<vmem>>, vector<8x128xf32>
      %46 = arith.addf %44, %45 : vector<8x128xf32>
      %47 = arith.truncf %46 : vector<8x128xf32> to vector<8x128xbf16>
      %c0_36 = arith.constant 0 : index
      %c0_37 = arith.constant 0 : index
      %48 = vector.load %arg10[%c0_36, %c0_37] : memref<128x256xbf16, #tpu.memory_space<vmem>>, vector<128x256xbf16>
      %cst_38 = arith.constant dense<0.000000e+00> : vector<8x256xf32>
      %49 = tpu.matmul %47, %48, %cst_38 {dimension_numbers = #tpu.dot_dimension_numbers<[1], [0], [0], [1], [0, 0, 1, 1], [], []>} : vector<8x128xbf16>, vector<128x256xbf16>, vector<8x256xf32> -> vector<8x256xf32>
      %c0_39 = arith.constant 0 : index
      %c0_40 = arith.constant 0 : index
      %50 = vector.load %arg11[%c0_39, %c0_40] : memref<1x256xf32, #tpu.memory_space<vmem>>, vector<1x256xf32>
      %51 = vector.broadcast %50 : vector<1x256xf32> to vector<8x256xf32>
      %52 = arith.addf %49, %51 : vector<8x256xf32>
      %cst_41 = arith.constant 0.000000e+00 : f32
      %53 = vector.broadcast %cst_41 : f32 to vector<8x256xf32>
      %54 = arith.maximumf %52, %53 : vector<8x256xf32>
      %55 = arith.truncf %54 : vector<8x256xf32> to vector<8x256xbf16>
      %c0_42 = arith.constant 0 : index
      %c0_43 = arith.constant 0 : index
      %56 = vector.load %arg12[%c0_42, %c0_43] : memref<256x128xbf16, #tpu.memory_space<vmem>>, vector<256x128xbf16>
      %cst_44 = arith.constant dense<0.000000e+00> : vector<8x128xf32>
      %57 = tpu.matmul %55, %56, %cst_44 {dimension_numbers = #tpu.dot_dimension_numbers<[1], [0], [0], [1], [0, 0, 1, 1], [], []>} : vector<8x256xbf16>, vector<256x128xbf16>, vector<8x128xf32> -> vector<8x128xf32>
      %c0_45 = arith.constant 0 : index
      %c0_46 = arith.constant 0 : index
      %58 = vector.load %arg13[%c0_45, %c0_46] : memref<1x128xf32, #tpu.memory_space<vmem>>, vector<1x128xf32>
      %59 = vector.broadcast %58 : vector<1x128xf32> to vector<8x128xf32>
      %60 = arith.addf %57, %59 : vector<8x128xf32>
      %61 = arith.addf %60, %46 : vector<8x128xf32>
      %62 = arith.truncf %61 : vector<8x128xf32> to vector<8x128xbf16>
      %c0_47 = arith.constant 0 : index
      %c0_48 = arith.constant 0 : index
      %63 = vector.load %arg14[%c0_47, %c0_48] : memref<128x128xbf16, #tpu.memory_space<vmem>>, vector<128x128xbf16>
      %cst_49 = arith.constant dense<0.000000e+00> : vector<8x128xf32>
      %64 = tpu.matmul %62, %63, %cst_49 {dimension_numbers = #tpu.dot_dimension_numbers<[1], [0], [0], [1], [0, 0, 1, 1], [], []>} : vector<8x128xbf16>, vector<128x128xbf16>, vector<8x128xf32> -> vector<8x128xf32>
      %c0_50 = arith.constant 0 : index
      %c0_51 = arith.constant 0 : index
      %65 = vector.load %arg15[%c0_50, %c0_51] : memref<1x128xf32, #tpu.memory_space<vmem>>, vector<1x128xf32>
      %66 = vector.broadcast %65 : vector<1x128xf32> to vector<8x128xf32>
      %67 = arith.addf %64, %66 : vector<8x128xf32>
      %c0_52 = arith.constant 0 : index
      %c0_53 = arith.constant 0 : index
      %c0_54 = arith.constant 0 : index
      %68 = vector.load %arg16[%c0_52, %c0_53, %c0_54] : memref<1x8x128xf32, #tpu.memory_space<vmem>>, vector<1x8x128xf32>
      %69 = vector.shape_cast %68 : vector<1x8x128xf32> to vector<8x128xf32>
      %70 = vector.shape_cast %67 : vector<8x128xf32> to vector<1x8x128xf32>
      tpu.vector_store %arg16[%c0_52, %c0_53, %c0_54], %70 {strides = array<i32>} : memref<1x8x128xf32, #tpu.memory_space<vmem>>, vector<1x8x128xf32>,
    } else {
    }
    return
  }
  func.func @transform_0(%arg0: i32, %arg1: i32, %arg2: i32) -> (i32, i32) {
    %c0_i32 = arith.constant 0 : i32
    %c0_i32_0 = arith.constant 0 : i32
    return %arg1, %c0_i32 : i32, i32
  }
  func.func @transform_1(%arg0: i32, %arg1: i32, %arg2: i32) -> (i32, i32, i32) {
    %c0_i32 = arith.constant 0 : i32
    %c0_i32_0 = arith.constant 0 : i32
    return %arg0, %arg2, %c0_i32 : i32, i32, i32
  }
  func.func @transform_2(%arg0: i32, %arg1: i32, %arg2: i32) -> (i32, i32, i32) {
    %c0_i32 = arith.constant 0 : i32
    %c0_i32_0 = arith.constant 0 : i32
    return %arg0, %arg2, %c0_i32 : i32, i32, i32
  }
  func.func @transform_3(%arg0: i32, %arg1: i32, %arg2: i32) -> (i32, i32) {
    %c0_i32 = arith.constant 0 : i32
    %c0_i32_0 = arith.constant 0 : i32
    %c0_i32_1 = arith.constant 0 : i32
    return %c0_i32, %c0_i32_0 : i32, i32
  }
  func.func @transform_4(%arg0: i32, %arg1: i32, %arg2: i32) -> (i32, i32) {
    %c0_i32 = arith.constant 0 : i32
    %c0_i32_0 = arith.constant 0 : i32
    %c0_i32_1 = arith.constant 0 : i32
    return %c0_i32, %c0_i32_0 : i32, i32
  }
  func.func @transform_5(%arg0: i32, %arg1: i32, %arg2: i32) -> (i32, i32) {
    %c0_i32 = arith.constant 0 : i32
    %c0_i32_0 = arith.constant 0 : i32
    %c0_i32_1 = arith.constant 0 : i32
    return %c0_i32, %c0_i32_0 : i32, i32
  }
  func.func @transform_6(%arg0: i32, %arg1: i32, %arg2: i32) -> (i32, i32) {
    %c0_i32 = arith.constant 0 : i32
    %c0_i32_0 = arith.constant 0 : i32
    %c0_i32_1 = arith.constant 0 : i32
    return %c0_i32, %c0_i32_0 : i32, i32
  }
  func.func @transform_7(%arg0: i32, %arg1: i32, %arg2: i32) -> (i32, i32) {
    %c0_i32 = arith.constant 0 : i32
    %c0_i32_0 = arith.constant 0 : i32
    %c0_i32_1 = arith.constant 0 : i32
    return %c0_i32, %c0_i32_0 : i32, i32
  }
  func.func @transform_8(%arg0: i32, %arg1: i32, %arg2: i32) -> (i32, i32) {
    %c0_i32 = arith.constant 0 : i32
    %c0_i32_0 = arith.constant 0 : i32
    %c0_i32_1 = arith.constant 0 : i32
    return %c0_i32, %c0_i32_0 : i32, i32
  }
  func.func @transform_9(%arg0: i32, %arg1: i32, %arg2: i32) -> (i32, i32) {
    %c0_i32 = arith.constant 0 : i32
    %c0_i32_0 = arith.constant 0 : i32
    %c0_i32_1 = arith.constant 0 : i32
    return %c0_i32, %c0_i32_0 : i32, i32
  }
  func.func @transform_10(%arg0: i32, %arg1: i32, %arg2: i32) -> (i32, i32) {
    %c0_i32 = arith.constant 0 : i32
    %c0_i32_0 = arith.constant 0 : i32
    %c0_i32_1 = arith.constant 0 : i32
    return %c0_i32, %c0_i32_0 : i32, i32
  }
  func.func @transform_11(%arg0: i32, %arg1: i32, %arg2: i32) -> (i32, i32) {
    %c0_i32 = arith.constant 0 : i32
    %c0_i32_0 = arith.constant 0 : i32
    %c0_i32_1 = arith.constant 0 : i32
    return %c0_i32, %c0_i32_0 : i32, i32
  }
  func.func @transform_12(%arg0: i32, %arg1: i32, %arg2: i32) -> (i32, i32) {
    %c0_i32 = arith.constant 0 : i32
    %c0_i32_0 = arith.constant 0 : i32
    %c0_i32_1 = arith.constant 0 : i32
    return %c0_i32, %c0_i32_0 : i32, i32
  }
  func.func @transform_13(%arg0: i32, %arg1: i32, %arg2: i32) -> (i32, i32, i32) {
    %c0_i32 = arith.constant 0 : i32
    %c0_i32_0 = arith.constant 0 : i32
    return %arg0, %arg1, %c0_i32 : i32, i32, i32
  }
}

</mosaic_0001>

<llo_original>
// kernel: _lambda_.4
$region0: #{_lambda_.4}
  #allocation0 [shape = 'u32[]', space=smem, size = 0x4, offset = 0x4, fixed_abs, tag = 'smem constant byte address 0x4 - core index']
  #allocation1 [shape = 'u32[144,128]{1,0:T(1,128)}', space=vmem, size = 0x12000, scoped, tag = 'internal scratch']
  #allocation2 [shape = 'f32[128,128]{1,0:T(8,128)}', space=vmem, size = 0x10000, scoped, tag = 'scratch operand']
  %s0 = inlined_call_operand.vmem [shape: bf16[256,48], index: 0, kind: input, shape index: {}]
  %s1 = inlined_call_operand.vmem [shape: bf16[48,128], index: 1, kind: input, shape index: {}]
  %s2 = inlined_call_operand.vmem [shape: f32[1,128], index: 2, kind: input, shape index: {}]
  %s3 = inlined_call_operand.vmem [shape: bf16[256,128], index: 3, kind: output, shape index: {}]
  %s4 = sld [smem:[#allocation0]]
  $region53: #{_lambda_.4} parent=0
    _
  %s6 = ssub.s32 1, %s4
  %s7 = scalar_select 0, %s6, %s4
  loop: start=0, step=1, limit=4
  $region2: #{_lambda_.4} parent=0 // loop_pre_header
    _
  $region3: #{_lambda_.4} parent=0 // loop_header
    %s9 = sphi 0, %s13
    %p10 = scmp.ge.s32.totalorder %s9, 4
    %s16 = sphi 0, %s35
    %s17 = sphi 0, %s31
    %s18 = sphi 0, %s27
    %s19 = sphi 0, %s16
    %s20 = sphi 0, %s17
    %s21 = sphi 0, %s18
    %s22 = sphi 0, %s19
    %s23 = sphi 0, %s20
    %s24 = sphi 0, %s21
    %s40 = sphi 0, %s42
    %s43 = sphi 0, %s40
    %s44 = sphi 0, %s43
    %s60 = sphi 0, %s44
    %s68 = sphi 0, %s70
    %s71 = sphi 0, %s68
    %s72 = sphi 0, %s71
    %s88 = sphi 0, %s72
    %s94 = sphi 0, %s96
    %s97 = sphi 0, %s94
    %s98 = sphi 0, %s97
    %s114 = sphi 0, %s98
    %s122 = sphi 0, %s124
    %s125 = sphi 0, %s122
    %s126 = sphi 0, %s125
    %s142 = sphi 0, %s126
  $region4: #{_lambda_.4} parent=0 // loop_header_branch
    %12 = sbr.rel (%p10) target = $region8
  $region5: #{_lambda_.4} parent=0 // loop_body
    %s14 = ssub.s32 %s9, 1
    %s15 = ssub.s32 %s9, 2
    %s25 = sadd.s32 1, %s18
    %p26 = scmp.ge.s32.totalorder %s25, 1
    %s27 = scalar_select %p26, 0, %s25
    %s28 = sadd.s32 1, %s17
    %s29 = scalar_select %p26, %s28, %s17
    %p30 = scmp.ge.s32.totalorder %s29, 1
    %s31 = scalar_select %p30, 0, %s29
    %s32 = sadd.s32 1, %s16
    %s33 = scalar_select %p30, %s32, %s16
    %p34 = scmp.ge.s32.totalorder %s33, 2
    %s35 = scalar_select %p34, 0, %s33
    %s36 = ssub.s32 %s16, %s35
    %s37 = ssub.s32 %s18, %s27
    %s38 = sor.u32 %s36, %s37
    %p39 = scmp.eq.s32.totalorder %s38, 0
    %s41 = sadd.s32 %s40, 1
    %s42 = scalar_select %p39, %s40, %s41
    %p45 = pneg %p39
    %p46 = scmp.eq.s32.totalorder %s9, 1
    %p47 = por %p45, %p46
    %p48 = scmp.ne.s32.totalorder %s40, %s43
    %p49 = scmp.eq.s32.totalorder %s9, 0
    %p50 = por %p48, %p49
    %p51 = scmp.ne.s32.totalorder %s40, %s43
    %p52 = scmp.eq.s32.totalorder %s14, 1
    %p53 = por %p51, %p52
    %p54 = scmp.ne.s32.totalorder %s43, %s44
    %p55 = scmp.eq.s32.totalorder %s14, 0
    %p56 = por %p54, %p55
    %p57 = scmp.ne.s32.totalorder %s43, %s44
    %p58 = scmp.eq.s32.totalorder %s15, 1
    %p59 = por %p57, %p58
    %p61 = scmp.ne.s32.totalorder %s44, %s60
    %p62 = scmp.eq.s32.totalorder %s15, 0
    %p63 = por %p61, %p62
    %s64 = ssub.s32 %s18, %s27
    %s65 = ssub.s32 %s17, %s31
    %s66 = sor.u32 %s64, %s65
    %p67 = scmp.eq.s32.totalorder %s66, 0
    %s69 = sadd.s32 %s68, 1
    %s70 = scalar_select %p67, %s68, %s69
    %p73 = pneg %p67
    %p74 = scmp.eq.s32.totalorder %s9, 1
    %p75 = por %p73, %p74
    %p76 = scmp.ne.s32.totalorder %s68, %s71
    %p77 = scmp.eq.s32.totalorder %s9, 0
    %p78 = por %p76, %p77
    %p79 = scmp.ne.s32.totalorder %s68, %s71
    %p80 = scmp.eq.s32.totalorder %s14, 1
    %p81 = por %p79, %p80
    %p82 = scmp.ne.s32.totalorder %s71, %s72
    %p83 = scmp.eq.s32.totalorder %s14, 0
    %p84 = por %p82, %p83
    %p85 = scmp.ne.s32.totalorder %s71, %s72
    %p86 = scmp.eq.s32.totalorder %s15, 1
    %p87 = por %p85, %p86
    %p89 = scmp.ne.s32.totalorder %s72, %s88
    %p90 = scmp.eq.s32.totalorder %s15, 0
    %p91 = por %p89, %p90
    %s92 = ssub.s32 %s17, %s31
    %p93 = scmp.eq.s32.totalorder %s92, 0
    %s95 = sadd.s32 %s94, 1
    %s96 = scalar_select %p93, %s94, %s95
    %p99 = pneg %p93
    %p100 = scmp.eq.s32.totalorder %s9, 1
    %p101 = por %p99, %p100
    %p102 = scmp.ne.s32.totalorder %s94, %s97
    %p103 = scmp.eq.s32.totalorder %s9, 0
    %p104 = por %p102, %p103
    %p105 = scmp.ne.s32.totalorder %s94, %s97
    %p106 = scmp.eq.s32.totalorder %s14, 1
    %p107 = por %p105, %p106
    %p108 = scmp.ne.s32.totalorder %s97, %s98
    %p109 = scmp.eq.s32.totalorder %s14, 0
    %p110 = por %p108, %p109
    %p111 = scmp.ne.s32.totalorder %s97, %s98
    %p112 = scmp.eq.s32.totalorder %s15, 1
    %p113 = por %p111, %p112
    %p115 = scmp.ne.s32.totalorder %s98, %s114
    %p116 = scmp.eq.s32.totalorder %s15, 0
    %p117 = por %p115, %p116
    %s118 = ssub.s32 %s16, %s35
    %s119 = ssub.s32 %s17, %s31
    %s120 = sor.u32 %s118, %s119
    %p121 = scmp.eq.s32.totalorder %s120, 0
    %s123 = sadd.s32 %s122, 1
    %s124 = scalar_select %p121, %s122, %s123
    %p127 = pneg %p121
    %p128 = scmp.eq.s32.totalorder %s9, 1
    %p129 = por %p127, %p128
    %p130 = scmp.ne.s32.totalorder %s122, %s125
    %p131 = scmp.eq.s32.totalorder %s9, 0
    %p132 = por %p130, %p131
    %p133 = scmp.ne.s32.totalorder %s122, %s125
    %p134 = scmp.eq.s32.totalorder %s14, 1
    %p135 = por %p133, %p134
    %p136 = scmp.ne.s32.totalorder %s125, %s126
    %p137 = scmp.eq.s32.totalorder %s14, 0
    %p138 = por %p136, %p137
    %p139 = scmp.ne.s32.totalorder %s125, %s126
    %p140 = scmp.eq.s32.totalorder %s15, 1
    %p141 = por %p139, %p140
    %p143 = scmp.ne.s32.totalorder %s126, %s142
    %p144 = scmp.eq.s32.totalorder %s15, 0
    %p145 = por %p143, %p144
    %p146 = scmp.le.s32.totalorder 1, %s9
    %p147 = scmp.lt.s32.totalorder %s9, 3
    %p148 = pnand %p146, %p147
    %p149 = pneg %p148
    // Predicated region
    $region9: #{_lambda_.4} parent=5 // pred_check
      _
    $region10: #{_lambda_.4} parent=5 // pred_check_branch
      %151 = sbr.rel (%p148) target = $region12
    $region11: #{_lambda_.4} parent=5 // pred_region
      %s152 = ssub.s32 %s9, 1
      // Predicated region
      $region13: #{_lambda_.4} parent=11 // pred_check
        %p153 = pneg %p84
      $region14: #{_lambda_.4} parent=11 // pred_check_branch
        %155 = sbr.rel (%p153) target = $region16
      $region15: #{_lambda_.4} parent=11 // pred_region
        %s156 = smul.u32 6, %s21
        %p157 = scmp.lt.s32.totalorder %s156, 5
        %s158 = scalar_select %p157, %s156, 5
        %p159 = scmp.lt.s32.totalorder %s20, 0
        %s160 = scalar_select %p159, %s20, 0
        %s161 = sadd.s32 %s160, %s158
        %s162 = smul.addr %s161, 4
        %s163 = scalar_lea.vmem %s1, %s162
        %s164 = smul.u32 6, %s21
      $region16: #{_lambda_.4} parent=11 // pred_fallthru
        _
      // Predicated region
      $region17: #{_lambda_.4} parent=11 // pred_check
        %p165 = pneg %p110
      $region18: #{_lambda_.4} parent=11 // pred_check_branch
        %167 = sbr.rel (%p165) target = $region20
      $region19: #{_lambda_.4} parent=11 // pred_region
        %p168 = scmp.lt.s32.totalorder %s20, 0
        %s169 = scalar_select %p168, %s20, 0
        %s170 = scalar_lea.vmem %s2, %s169
      $region20: #{_lambda_.4} parent=11 // pred_fallthru
        _
    $region12: #{_lambda_.4} parent=5 // pred_fallthru
      _
    %p171 = scmp.lt.s32.totalorder %s9, 2
    // Predicated region
    $region21: #{_lambda_.4} parent=5 // pred_check
      %p172 = pneg %p171
    $region22: #{_lambda_.4} parent=5 // pred_check_branch
      %174 = sbr.rel (%p172) target = $region24
    $region23: #{_lambda_.4} parent=5 // pred_region
      // Predicated region
      $region25: #{_lambda_.4} parent=23 // pred_check
        %p175 = pneg %p50
      $region26: #{_lambda_.4} parent=23 // pred_check_branch
        %177 = sbr.rel (%p175) target = $region28
      $region27: #{_lambda_.4} parent=23 // pred_region
        %s178 = smul.u32 16, %s16
        %p179 = scmp.lt.s32.totalorder %s178, 31
        %s180 = scalar_select %p179, %s178, 31
        %p181 = scmp.lt.s32.totalorder %s18, 0
        %s182 = scalar_select %p181, %s18, 0
        %s183 = sadd.s32 %s182, %s180
        %s184 = smul.addr %s183, 4
        %s185 = scalar_lea.vmem %s0, %s184
        %s186 = smul.u32 16, %s16
      $region28: #{_lambda_.4} parent=23 // pred_fallthru
        _
    $region24: #{_lambda_.4} parent=5 // pred_fallthru
      _
    %p187 = scmp.le.s32.totalorder 1, %s9
    %p188 = scmp.lt.s32.totalorder %s9, 3
    %p189 = pnand %p187, %p188
    %p190 = pneg %p189
    // Predicated region
    $region29: #{_lambda_.4} parent=5 // pred_check
      _
    $region30: #{_lambda_.4} parent=5 // pred_check_branch
      %192 = sbr.rel (%p189) target = $region32
    $region31: #{_lambda_.4} parent=5 // pred_region
      %s193 = ssub.s32 %s9, 1
      %s194 = smul.u32 16, %s19
      %p195 = scmp.lt.s32.totalorder %s194, 31
      %s196 = scalar_select %p195, %s194, 31
      %p197 = scmp.lt.s32.totalorder %s21, 0
      %s198 = scalar_select %p197, %s21, 0
      %s199 = sadd.s32 %s198, %s196
      %s200 = smul.addr %s199, 4
      %s201 = scalar_lea.vmem %s0, %s200
      %p202 = pneg %p56
      %p203 = pneg %p53
      %s204 = smul.u32 6, %s21
      %p205 = scmp.lt.s32.totalorder %s204, 5
      %s206 = scalar_select %p205, %s204, 5
      %p207 = scmp.lt.s32.totalorder %s20, 0
      %s208 = scalar_select %p207, %s20, 0
      %s209 = sadd.s32 %s208, %s206
      %s210 = smul.addr %s209, 4
      %s211 = scalar_lea.vmem %s1, %s210
      %p212 = pneg %p84
      %p213 = pneg %p81
      %p214 = scmp.lt.s32.totalorder %s20, 0
      %s215 = scalar_select %p214, %s20, 0
      %s216 = scalar_lea.vmem %s2, %s215
      %p217 = pneg %p110
      %p218 = pneg %p107
      %p219 = pneg %p138
      %p220 = pneg %p135
      %s221 = smul.u32 16, %s19
      %p222 = scmp.lt.s32.totalorder %s221, 31
      %s223 = scalar_select %p222, %s221, 31
      %p224 = scmp.lt.s32.totalorder %s20, 0
      %s225 = scalar_select %p224, %s20, 0
      %s226 = sadd.s32 %s225, %s223
      %s227 = smul.addr %s226, 4
      %s228 = scalar_lea.vmem %s3, %s227
      %s229 = smul.u32 16, %s19
      %p230 = scmp.lt.s32.totalorder %s229, 31
      %s231 = scalar_select %p230, %s229, 31
      %p232 = scmp.lt.s32.totalorder %s21, 0
      %s233 = scalar_select %p232, %s21, 0
      %s234 = sadd.s32 %s233, %s231
      %s235 = smul.addr %s234, 4
      %s236 = scalar_lea.vmem %s0, %s235
      %s237 = smul.u32 16, %s19
      %s238 = smul.u32 6, %s21
      %p239 = scmp.lt.s32.totalorder %s238, 5
      %s240 = scalar_select %p239, %s238, 5
      %p241 = scmp.lt.s32.totalorder %s20, 0
      %s242 = scalar_select %p241, %s20, 0
      %s243 = sadd.s32 %s242, %s240
      %s244 = smul.addr %s243, 4
      %s245 = scalar_lea.vmem %s1, %s244
      %s246 = smul.u32 6, %s21
      %p247 = scmp.lt.s32.totalorder %s20, 0
      %s248 = scalar_select %p247, %s20, 0
      %s249 = scalar_lea.vmem %s2, %s248
      %s250 = smul.u32 16, %s19
      %p251 = scmp.lt.s32.totalorder %s250, 31
      %s252 = scalar_select %p251, %s250, 31
      %p253 = scmp.lt.s32.totalorder %s20, 0
      %s254 = scalar_select %p253, %s20, 0
      %s255 = sadd.s32 %s254, %s252
      %s256 = smul.addr %s255, 4
      %s257 = scalar_lea.vmem %s3, %s256
      %s258 = smul.u32 16, %s19
      %p260 = scmp.eq.s32.totalorder %s21, 0
      // Predicated region
      $region33: #{_lambda_.4} parent=31 // pred_check
        %p261 = pneg %p260
      $region34: #{_lambda_.4} parent=31 // pred_check_branch
        %263 = sbr.rel (%p261) target = $region36
      $region35: #{_lambda_.4} parent=31 // pred_region
        %264 = vst [vmem:[#allocation2] sm:$0xff] 0.0
        %265 = vst [vmem:[#allocation2 + $0x8] sm:$0xff] 0.0
        %266 = vst [vmem:[#allocation2 + $0x10] sm:$0xff] 0.0
        %267 = vst [vmem:[#allocation2 + $0x18] sm:$0xff] 0.0
        %268 = vst [vmem:[#allocation2 + $0x20] sm:$0xff] 0.0
        %269 = vst [vmem:[#allocation2 + $0x28] sm:$0xff] 0.0
        %270 = vst [vmem:[#allocation2 + $0x30] sm:$0xff] 0.0
        %271 = vst [vmem:[#allocation2 + $0x38] sm:$0xff] 0.0
        %272 = vst [vmem:[#allocation2 + $0x40] sm:$0xff] 0.0
        %273 = vst [vmem:[#allocation2 + $0x48] sm:$0xff] 0.0
        %274 = vst [vmem:[#allocation2 + $0x50] sm:$0xff] 0.0
        %275 = vst [vmem:[#allocation2 + $0x58] sm:$0xff] 0.0
        %276 = vst [vmem:[#allocation2 + $0x60] sm:$0xff] 0.0
        %277 = vst [vmem:[#allocation2 + $0x68] sm:$0xff] 0.0
        %278 = vst [vmem:[#allocation2 + $0x70] sm:$0xff] 0.0
        %279 = vst [vmem:[#allocation2 + $0x78] sm:$0xff] 0.0
      $region36: #{_lambda_.4} parent=31 // pred_fallthru
        _
      %v280 = vld [vmem:[#allocation2] sm:$0xff]
      %v281 = vld [vmem:[#allocation2 + $0x8] sm:$0xff]
      %v282 = vld [vmem:[#allocation2 + $0x10] sm:$0xff]
      %v283 = vld [vmem:[#allocation2 + $0x18] sm:$0xff]
      %v284 = vld [vmem:[#allocation2 + $0x20] sm:$0xff]
      %v285 = vld [vmem:[#allocation2 + $0x28] sm:$0xff]
      %v286 = vld [vmem:[#allocation2 + $0x30] sm:$0xff]
      %v287 = vld [vmem:[#allocation2 + $0x38] sm:$0xff]
      %v288 = vld [vmem:[#allocation2 + $0x40] sm:$0xff]
      %v289 = vld [vmem:[#allocation2 + $0x48] sm:$0xff]
      %v290 = vld [vmem:[#allocation2 + $0x50] sm:$0xff]
      %v291 = vld [vmem:[#allocation2 + $0x58] sm:$0xff]
      %v292 = vld [vmem:[#allocation2 + $0x60] sm:$0xff]
      %v293 = vld [vmem:[#allocation2 + $0x68] sm:$0xff]
      %v294 = vld [vmem:[#allocation2 + $0x70] sm:$0xff]
      %v295 = vld [vmem:[#allocation2 + $0x78] sm:$0xff]
      %v296 = vld [vmem:[%s236] sm:$0xf]
      %v297 = vld [vmem:[%s236 + $0x4] sm:$0xf]
      %v298 = vld [vmem:[%s236 + $0x8] sm:$0xf]
      %v299 = vld [vmem:[%s236 + $0xc] sm:$0xf]
      %v300 = vld [vmem:[%s236 + $0x10] sm:$0xf]
      %v301 = vld [vmem:[%s236 + $0x14] sm:$0xf]
      %v302 = vld [vmem:[%s236 + $0x18] sm:$0xf]
      %v303 = vld [vmem:[%s236 + $0x1c] sm:$0xf]
      %v304 = vld [vmem:[%s236 + $0x20] sm:$0xf]
      %v305 = vld [vmem:[%s236 + $0x24] sm:$0xf]
      %v306 = vld [vmem:[%s236 + $0x28] sm:$0xf]
      %v307 = vld [vmem:[%s236 + $0x2c] sm:$0xf]
      %v308 = vld [vmem:[%s236 + $0x30] sm:$0xf]
      %v309 = vld [vmem:[%s236 + $0x34] sm:$0xf]
      %v310 = vld [vmem:[%s236 + $0x38] sm:$0xf]
      %v311 = vld [vmem:[%s236 + $0x3c] sm:$0xf]
      %v312 = vld [vmem:[%s245] sm:$0xf]
      %v313 = vld [vmem:[%s245 + $0x4] sm:$0xf]
      %v314 = vld [vmem:[%s245 + $0x8] sm:$0xf]
      %v315 = vld [vmem:[%s245 + $0xc] sm:$0xf]
      %v316 = vld [vmem:[%s245 + $0x10] sm:$0xf]
      %v317 = vld [vmem:[%s245 + $0x14] sm:$0xf]
      %v334 = vunpack.c.l.b16 %v296
      %v335 = vunpack.c.l.b16 %v297
      %v336 = vunpack.c.l.b16 %v298
      %v337 = vunpack.c.l.b16 %v299
      %v338 = vunpack.c.l.b16 %v300
      %v339 = vunpack.c.l.b16 %v301
      %v340 = vunpack.c.l.b16 %v302
      %v341 = vunpack.c.l.b16 %v303
      %v342 = vunpack.c.l.b16 %v304
      %v343 = vunpack.c.l.b16 %v305
      %v344 = vunpack.c.l.b16 %v306
      %v345 = vunpack.c.l.b16 %v307
      %v346 = vunpack.c.l.b16 %v308
      %v347 = vunpack.c.l.b16 %v309
      %v348 = vunpack.c.l.b16 %v310
      %v349 = vunpack.c.l.b16 %v311
      %v350 = vpack.c.b16 %v335, %v334
      %v351 = vpack.c.b16 %v337, %v336
      %v352 = vpack.c.b16 %v339, %v338
      %v353 = vpack.c.b16 %v341, %v340
      %v354 = vpack.c.b16 %v343, %v342
      %v355 = vpack.c.b16 %v345, %v344
      %v356 = vpack.c.b16 %v347, %v346
      %v357 = vpack.c.b16 %v349, %v348
      %v364 = vunpack.c.l.b16 %v312
      %v365 = vunpack.c.l.b16 %v313
      %v366 = vunpack.c.l.b16 %v314
      %v367 = vunpack.c.l.b16 %v315
      %v368 = vunpack.c.l.b16 %v316
      %v369 = vunpack.c.l.b16 %v317
      %v370 = vpack.c.b16 %v365, %v364
      %v371 = vpack.c.b16 %v367, %v366
      %v372 = vpack.c.b16 %v369, %v368
      %vm376 = vcmask 392192
      %v378 = vsel %vm376, %v350, 0
      %v381 = vsel %vm376, %v351, 0
      %v384 = vsel %vm376, %v352, 0
      %v387 = vsel %vm376, %v353, 0
      %v390 = vsel %vm376, %v354, 0
      %v393 = vsel %vm376, %v355, 0
      %v396 = vsel %vm376, %v356, 0
      %v399 = vsel %vm376, %v357, 0
      %401 = vmatprep.subr.bf16.mxu0 0
      %402 = vmatpush1.bf16.msra.mxu0 0
      %403 = vmatprep.subr.bf16.mxu0 0
      %404 = vmatpush1.bf16.msra.mxu0 0
      %405 = vmatprep.subr.bf16.mxu0 0
      %406 = vmatpush1.bf16.msra.mxu0 0
      %407 = vmatprep.subr.bf16.mxu0 0
      %408 = vmatpush1.bf16.msra.mxu0 0
      %409 = vmatprep.subr.bf16.mxu0 0
      %410 = vmatpush1.bf16.msra.mxu0 0
      %411 = vmatprep.subr.bf16.mxu0 0
      %412 = vmatpush1.bf16.msra.mxu0 %v372
      %413 = vmatprep.subr.bf16.mxu0 0
      %414 = vmatpush1.bf16.msra.mxu0 %v371
      %415 = vmatprep.subr.bf16.mxu0 0
      %416 = vmatpush1.bf16.msra.mxu0 %v370
      %417 = vmatprep.subr.bf16.mxu0 0
      %418 = vmatpush2.bf16.msra.mxu0 0
      %419 = vmatprep.subr.bf16.mxu0 0
      %420 = vmatpush2.bf16.msra.mxu0 0
      %421 = vmatprep.subr.bf16.mxu0 0
      %422 = vmatpush2.bf16.msra.mxu0 0
      %423 = vmatprep.subr.bf16.mxu0 0
      %424 = vmatpush2.bf16.msra.mxu0 0
      %425 = vmatprep.subr.bf16.mxu0 0
      %426 = vmatpush2.bf16.msra.mxu0 0
      %427 = vmatprep.subr.bf16.mxu0 0
      %428 = vmatpush2.bf16.msra.mxu0 0
      %429 = vmatprep.subr.bf16.mxu0 0
      %430 = vmatpush2.bf16.msra.mxu0 0
      %431 = vmatprep.subr.bf16.mxu0 0
      %432 = vmatpush2.bf16.msra.mxu0 0
      %433 = vmatprep.mubr.bf16.mxu0 0
      %434 = vmatmul.mubr.bf16.gmra.mxu0 %v378
      %v435 = vpop.f32.mrf.mxu0
      %v436 = vadd.f32 0.0, %v435
      %v437 = vpop.f32.mrf.mxu0
      %v438 = vpop.f32.mrf.mxu0
      %v439 = vadd.f32 0.0, %v438
      %v440 = vpop.f32.mrf.mxu0
      %441 = vmatprep.mubr.bf16.mxu0 0
      %442 = vmatmul.mubr.bf16.gmra.mxu0 %v381
      %v443 = vpop.f32.mrf.mxu0
      %v444 = vadd.f32 0.0, %v443
      %v445 = vpop.f32.mrf.mxu0
      %v446 = vpop.f32.mrf.mxu0
      %v447 = vadd.f32 0.0, %v446
      %v448 = vpop.f32.mrf.mxu0
      %449 = vmatprep.mubr.bf16.mxu0 0
      %450 = vmatmul.mubr.bf16.gmra.mxu0 %v384
      %v451 = vpop.f32.mrf.mxu0
      %v452 = vadd.f32 0.0, %v451
      %v453 = vpop.f32.mrf.mxu0
      %v454 = vpop.f32.mrf.mxu0
      %v455 = vadd.f32 0.0, %v454
      %v456 = vpop.f32.mrf.mxu0
      %457 = vmatprep.mubr.bf16.mxu0 0
      %458 = vmatmul.mubr.bf16.gmra.mxu0 %v387
      %v459 = vpop.f32.mrf.mxu0
      %v460 = vadd.f32 0.0, %v459
      %v461 = vpop.f32.mrf.mxu0
      %v462 = vpop.f32.mrf.mxu0
      %v463 = vadd.f32 0.0, %v462
      %v464 = vpop.f32.mrf.mxu0
      %465 = vmatprep.mubr.bf16.mxu0 0
      %466 = vmatmul.mubr.bf16.gmra.mxu0 %v390
      %v467 = vpop.f32.mrf.mxu0
      %v468 = vadd.f32 0.0, %v467
      %v469 = vpop.f32.mrf.mxu0
      %v470 = vpop.f32.mrf.mxu0
      %v471 = vadd.f32 0.0, %v470
      %v472 = vpop.f32.mrf.mxu0
      %473 = vmatprep.mubr.bf16.mxu0 0
      %474 = vmatmul.mubr.bf16.gmra.mxu0 %v393
      %v475 = vpop.f32.mrf.mxu0
      %v476 = vadd.f32 0.0, %v475
      %v477 = vpop.f32.mrf.mxu0
      %v478 = vpop.f32.mrf.mxu0
      %v479 = vadd.f32 0.0, %v478
      %v480 = vpop.f32.mrf.mxu0
      %481 = vmatprep.mubr.bf16.mxu0 0
      %482 = vmatmul.mubr.bf16.gmra.mxu0 %v396
      %v483 = vpop.f32.mrf.mxu0
      %v484 = vadd.f32 0.0, %v483
      %v485 = vpop.f32.mrf.mxu0
      %v486 = vpop.f32.mrf.mxu0
      %v487 = vadd.f32 0.0, %v486
      %v488 = vpop.f32.mrf.mxu0
      %489 = vmatprep.mubr.bf16.mxu0 0
      %490 = vmatmul.mubr.bf16.gmra.mxu0 %v399
      %v491 = vpop.f32.mrf.mxu0
      %v492 = vadd.f32 0.0, %v491
      %v493 = vpop.f32.mrf.mxu0
      %v494 = vpop.f32.mrf.mxu0
      %v495 = vadd.f32 0.0, %v494
      %v496 = vpop.f32.mrf.mxu0
      %497 = vdwg.mxu0
      %v498 = vadd.f32 %v280, %v436
      %v499 = vadd.f32 %v281, %v439
      %v500 = vadd.f32 %v282, %v444
      %v501 = vadd.f32 %v283, %v447
      %v502 = vadd.f32 %v284, %v452
      %v503 = vadd.f32 %v285, %v455
      %v504 = vadd.f32 %v286, %v460
      %v505 = vadd.f32 %v287, %v463
      %v506 = vadd.f32 %v288, %v468
      %v507 = vadd.f32 %v289, %v471
      %v508 = vadd.f32 %v290, %v476
      %v509 = vadd.f32 %v291, %v479
      %v510 = vadd.f32 %v292, %v484
      %v511 = vadd.f32 %v293, %v487
      %v512 = vadd.f32 %v294, %v492
      %v513 = vadd.f32 %v295, %v495
      %514 = vst [vmem:[#allocation2] sm:$0xff] %v498
      %515 = vst [vmem:[#allocation2 + $0x8] sm:$0xff] %v499
      %516 = vst [vmem:[#allocation2 + $0x10] sm:$0xff] %v500
      %517 = vst [vmem:[#allocation2 + $0x18] sm:$0xff] %v501
      %518 = vst [vmem:[#allocation2 + $0x20] sm:$0xff] %v502
      %519 = vst [vmem:[#allocation2 + $0x28] sm:$0xff] %v503
      %520 = vst [vmem:[#allocation2 + $0x30] sm:$0xff] %v504
      %521 = vst [vmem:[#allocation2 + $0x38] sm:$0xff] %v505
      %522 = vst [vmem:[#allocation2 + $0x40] sm:$0xff] %v506
      %523 = vst [vmem:[#allocation2 + $0x48] sm:$0xff] %v507
      %524 = vst [vmem:[#allocation2 + $0x50] sm:$0xff] %v508
      %525 = vst [vmem:[#allocation2 + $0x58] sm:$0xff] %v509
      %526 = vst [vmem:[#allocation2 + $0x60] sm:$0xff] %v510
      %527 = vst [vmem:[#allocation2 + $0x68] sm:$0xff] %v511
      %528 = vst [vmem:[#allocation2 + $0x70] sm:$0xff] %v512
      %529 = vst [vmem:[#allocation2 + $0x78] sm:$0xff] %v513
      // Predicated region
      $region37: #{_lambda_.4} parent=31 // pred_check
        %p530 = pneg %p260
      $region38: #{_lambda_.4} parent=31 // pred_check_branch
        %532 = sbr.rel (%p530) target = $region40
      $region39: #{_lambda_.4} parent=31 // pred_region
        %v533 = vld [vmem:[#allocation2] sm:$0xff]
        %v534 = vld [vmem:[#allocation2 + $0x8] sm:$0xff]
        %v535 = vld [vmem:[#allocation2 + $0x10] sm:$0xff]
        %v536 = vld [vmem:[#allocation2 + $0x18] sm:$0xff]
        %v537 = vld [vmem:[#allocation2 + $0x20] sm:$0xff]
        %v538 = vld [vmem:[#allocation2 + $0x28] sm:$0xff]
        %v539 = vld [vmem:[#allocation2 + $0x30] sm:$0xff]
        %v540 = vld [vmem:[#allocation2 + $0x38] sm:$0xff]
        %v541 = vld [vmem:[#allocation2 + $0x40] sm:$0xff]
        %v542 = vld [vmem:[#allocation2 + $0x48] sm:$0xff]
        %v543 = vld [vmem:[#allocation2 + $0x50] sm:$0xff]
        %v544 = vld [vmem:[#allocation2 + $0x58] sm:$0xff]
        %v545 = vld [vmem:[#allocation2 + $0x60] sm:$0xff]
        %v546 = vld [vmem:[#allocation2 + $0x68] sm:$0xff]
        %v547 = vld [vmem:[#allocation2 + $0x70] sm:$0xff]
        %v548 = vld [vmem:[#allocation2 + $0x78] sm:$0xff]
        %v549 = vld [vmem:[%s249] sm:$0x1]
        %v551 = vlaneseq
        %v552 = vshrl.u32 %v551, 7
        %v553 = vsub.s32 0, %v552
        %v554 = vrot.slane %v549, %v553
        %v556 = vadd.f32 %v533, %v554
        %v557 = vadd.f32 %v534, %v554
        %v558 = vadd.f32 %v535, %v554
        %v559 = vadd.f32 %v536, %v554
        %v560 = vadd.f32 %v537, %v554
        %v561 = vadd.f32 %v538, %v554
        %v562 = vadd.f32 %v539, %v554
        %v563 = vadd.f32 %v540, %v554
        %v564 = vadd.f32 %v541, %v554
        %v565 = vadd.f32 %v542, %v554
        %v566 = vadd.f32 %v543, %v554
        %v567 = vadd.f32 %v544, %v554
        %v568 = vadd.f32 %v545, %v554
        %v569 = vadd.f32 %v546, %v554
        %v570 = vadd.f32 %v547, %v554
        %v571 = vadd.f32 %v548, %v554
        %v572 = vmax.f32 %v556, 0.0
        %v573 = vmax.f32 %v557, 0.0
        %v574 = vmax.f32 %v558, 0.0
        %v575 = vmax.f32 %v559, 0.0
        %v576 = vmax.f32 %v560, 0.0
        %v577 = vmax.f32 %v561, 0.0
        %v578 = vmax.f32 %v562, 0.0
        %v579 = vmax.f32 %v563, 0.0
        %v580 = vmax.f32 %v564, 0.0
        %v581 = vmax.f32 %v565, 0.0
        %v582 = vmax.f32 %v566, 0.0
        %v583 = vmax.f32 %v567, 0.0
        %v584 = vmax.f32 %v568, 0.0
        %v585 = vmax.f32 %v569, 0.0
        %v586 = vmax.f32 %v570, 0.0
        %v587 = vmax.f32 %v571, 0.0
        %v588 = vpack.c.bf16 %v573, %v572
        %v589 = vpack.c.bf16 %v575, %v574
        %v590 = vpack.c.bf16 %v577, %v576
        %v591 = vpack.c.bf16 %v579, %v578
        %v592 = vpack.c.bf16 %v581, %v580
        %v593 = vpack.c.bf16 %v583, %v582
        %v594 = vpack.c.bf16 %v585, %v584
        %v595 = vpack.c.bf16 %v587, %v586
        %v604 = vunpack.c.l.b16 %v588
        %v605 = vunpack.c.h.b16 %v588
        %v606 = vunpack.c.l.b16 %v589
        %v607 = vunpack.c.h.b16 %v589
        %v608 = vunpack.c.l.b16 %v590
        %v609 = vunpack.c.h.b16 %v590
        %v610 = vunpack.c.l.b16 %v591
        %v611 = vunpack.c.h.b16 %v591
        %v612 = vunpack.c.l.b16 %v592
        %v613 = vunpack.c.h.b16 %v592
        %v614 = vunpack.c.l.b16 %v593
        %v615 = vunpack.c.h.b16 %v593
        %v616 = vunpack.c.l.b16 %v594
        %v617 = vunpack.c.h.b16 %v594
        %v618 = vunpack.c.l.b16 %v595
        %v619 = vunpack.c.h.b16 %v595
        %v620 = vpack.c.b16 %v604, %v604
        %v621 = vpack.c.b16 %v605, %v605
        %v622 = vpack.c.b16 %v606, %v606
        %v623 = vpack.c.b16 %v607, %v607
        %v624 = vpack.c.b16 %v608, %v608
        %v625 = vpack.c.b16 %v609, %v609
        %v626 = vpack.c.b16 %v610, %v610
        %v627 = vpack.c.b16 %v611, %v611
        %v628 = vpack.c.b16 %v612, %v612
        %v629 = vpack.c.b16 %v613, %v613
        %v630 = vpack.c.b16 %v614, %v614
        %v631 = vpack.c.b16 %v615, %v615
        %v632 = vpack.c.b16 %v616, %v616
        %v633 = vpack.c.b16 %v617, %v617
        %v634 = vpack.c.b16 %v618, %v618
        %v635 = vpack.c.b16 %v619, %v619
        %652 = vst [vmem:[%s257] sm:$0xf] %v620
        %653 = vst [vmem:[%s257 + $0x4] sm:$0xf] %v621
        %654 = vst [vmem:[%s257 + $0x8] sm:$0xf] %v622
        %655 = vst [vmem:[%s257 + $0xc] sm:$0xf] %v623
        %656 = vst [vmem:[%s257 + $0x10] sm:$0xf] %v624
        %657 = vst [vmem:[%s257 + $0x14] sm:$0xf] %v625
        %658 = vst [vmem:[%s257 + $0x18] sm:$0xf] %v626
        %659 = vst [vmem:[%s257 + $0x1c] sm:$0xf] %v627
        %660 = vst [vmem:[%s257 + $0x20] sm:$0xf] %v628
        %661 = vst [vmem:[%s257 + $0x24] sm:$0xf] %v629
        %662 = vst [vmem:[%s257 + $0x28] sm:$0xf] %v630
        %663 = vst [vmem:[%s257 + $0x2c] sm:$0xf] %v631
        %664 = vst [vmem:[%s257 + $0x30] sm:$0xf] %v632
        %665 = vst [vmem:[%s257 + $0x34] sm:$0xf] %v633
        %666 = vst [vmem:[%s257 + $0x38] sm:$0xf] %v634
        %667 = vst [vmem:[%s257 + $0x3c] sm:$0xf] %v635
      $region40: #{_lambda_.4} parent=31 // pred_fallthru
        _
      %s668 = smul.u32 16, %s19
      %p669 = scmp.lt.s32.totalorder %s668, 31
      %s670 = scalar_select %p669, %s668, 31
      %p671 = scmp.lt.s32.totalorder %s20, 0
      %s672 = scalar_select %p671, %s20, 0
      %s673 = sadd.s32 %s672, %s670
      %s674 = smul.addr %s673, 4
      %s675 = scalar_lea.vmem %s3, %s674
      // Predicated region
      $region41: #{_lambda_.4} parent=31 // pred_check
        %p676 = pneg %p135
      $region42: #{_lambda_.4} parent=31 // pred_check_branch
        %678 = sbr.rel (%p676) target = $region44
      $region43: #{_lambda_.4} parent=31 // pred_region
        %s679 = smul.u32 16, %s19
      $region44: #{_lambda_.4} parent=31 // pred_fallthru
        _
    $region32: #{_lambda_.4} parent=5 // pred_fallthru
      _
    %p680 = scmp.le.s32.totalorder 2, %s9
    // Predicated region
    $region45: #{_lambda_.4} parent=5 // pred_check
      %p681 = pneg %p680
    $region46: #{_lambda_.4} parent=5 // pred_check_branch
      %683 = sbr.rel (%p681) target = $region48
    $region47: #{_lambda_.4} parent=5 // pred_region
      %s684 = ssub.s32 %s9, 2
      // Predicated region
      $region49: #{_lambda_.4} parent=47 // pred_check
        %p685 = pneg %p141
      $region50: #{_lambda_.4} parent=47 // pred_check_branch
        %687 = sbr.rel (%p685) target = $region52
      $region51: #{_lambda_.4} parent=47 // pred_region
        %s688 = smul.u32 16, %s22
        %p689 = scmp.lt.s32.totalorder %s688, 31
        %s690 = scalar_select %p689, %s688, 31
        %p691 = scmp.lt.s32.totalorder %s23, 0
        %s692 = scalar_select %p691, %s23, 0
        %s693 = sadd.s32 %s692, %s690
        %s694 = smul.addr %s693, 4
        %s695 = scalar_lea.vmem %s3, %s694
      $region52: #{_lambda_.4} parent=47 // pred_fallthru
        _
    $region48: #{_lambda_.4} parent=5 // pred_fallthru
      _
  $region6: #{_lambda_.4} parent=0 // loop_footer
    %s13 = sadd.s32 1, %s9
  $region7: #{_lambda_.4} parent=0 // loop_footer_branch
    %8 = sbr.rel target = $region3
  $region8: #{_lambda_.4} parent=0 // loop_exit
    _

// kernel: _lambda_.6
$region0: #{_lambda_.6}
  #allocation0 [shape = 'u32[]', space=smem, size = 0x4, offset = 0x4, fixed_abs, tag = 'smem constant byte address 0x4 - core index']
  #allocation1 [shape = 'u32[144,128]{1,0:T(1,128)}', space=vmem, size = 0x12000, scoped, tag = 'internal scratch']
  %s0 = inlined_call_operand.vmem [shape: bf16[2,32,128], index: 0, kind: input, shape index: {}]
  %s1 = inlined_call_operand.vmem [shape: bf16[32,128], index: 1, kind: input, shape index: {}]
  %s2 = inlined_call_operand.vmem [shape: bf16[128,128], index: 2, kind: input, shape index: {}]
  %s3 = inlined_call_operand.vmem [shape: f32[1,128], index: 3, kind: input, shape index: {}]
  %s4 = inlined_call_operand.vmem [shape: bf16[128,256], index: 4, kind: input, shape index: {}]
  %s5 = inlined_call_operand.vmem [shape: f32[1,256], index: 5, kind: input, shape index: {}]
  %s6 = inlined_call_operand.vmem [shape: bf16[2,32,128], index: 6, kind: output, shape index: {0}]
  %s7 = inlined_call_operand.vmem [shape: bf16[2,32,128], index: 7, kind: output, shape index: {1}]
  %8 = xla_tuple %s6, %s7
  %s9 = sld [smem:[#allocation0]]
  $region65: #{_lambda_.6} parent=0
    _
  %s11 = ssub.s32 1, %s9
  %s12 = scalar_select 0, %s11, %s9
  loop: start=0, step=1, limit=4
  $region2: #{_lambda_.6} parent=0 // loop_pre_header
    _
  $region3: #{_lambda_.6} parent=0 // loop_header
    %s14 = sphi 0, %s18
    %p15 = scmp.ge.s32.totalorder %s14, 4
    %s21 = sphi 0, %s33
    %s22 = sphi 0, %s29
    %s23 = sphi 0, %s21
    %s24 = sphi 0, %s22
    %s25 = sphi 0, %s23
    %s26 = sphi 0, %s24
    %s38 = sphi 0, %s40
    %s41 = sphi 0, %s38
    %s42 = sphi 0, %s41
    %s58 = sphi 0, %s42
    %s64 = sphi 0, %s66
    %s67 = sphi 0, %s64
    %s68 = sphi 0, %s67
    %s84 = sphi 0, %s68
    %s88 = sphi 0, %s88
    %s90 = sphi 0, %s88
    %s91 = sphi 0, %s90
    %s105 = sphi 0, %s91
    %s109 = sphi 0, %s109
    %s111 = sphi 0, %s109
    %s112 = sphi 0, %s111
    %s126 = sphi 0, %s112
    %s130 = sphi 0, %s130
    %s132 = sphi 0, %s130
    %s133 = sphi 0, %s132
    %s147 = sphi 0, %s133
    %s151 = sphi 0, %s151
    %s153 = sphi 0, %s151
    %s154 = sphi 0, %s153
    %s168 = sphi 0, %s154
    %s176 = sphi 0, %s178
    %s179 = sphi 0, %s176
    %s180 = sphi 0, %s179
    %s196 = sphi 0, %s180
    %s204 = sphi 0, %s206
    %s207 = sphi 0, %s204
    %s208 = sphi 0, %s207
    %s224 = sphi 0, %s208
  $region4: #{_lambda_.6} parent=0 // loop_header_branch
    %17 = sbr.rel (%p15) target = $region8
  $region5: #{_lambda_.6} parent=0 // loop_body
    %s19 = ssub.s32 %s14, 1
    %s20 = ssub.s32 %s14, 2
    %s27 = sadd.s32 1, %s22
    %p28 = scmp.ge.s32.totalorder %s27, 1
    %s29 = scalar_select %p28, 0, %s27
    %s30 = sadd.s32 1, %s21
    %s31 = scalar_select %p28, %s30, %s21
    %p32 = scmp.ge.s32.totalorder %s31, 2
    %s33 = scalar_select %p32, 0, %s31
    %s34 = ssub.s32 %s21, %s33
    %s35 = ssub.s32 %s22, %s29
    %s36 = sor.u32 %s34, %s35
    %p37 = scmp.eq.s32.totalorder %s36, 0
    %s39 = sadd.s32 %s38, 1
    %s40 = scalar_select %p37, %s38, %s39
    %p43 = pneg %p37
    %p44 = scmp.eq.s32.totalorder %s14, 1
    %p45 = por %p43, %p44
    %p46 = scmp.ne.s32.totalorder %s38, %s41
    %p47 = scmp.eq.s32.totalorder %s14, 0
    %p48 = por %p46, %p47
    %p49 = scmp.ne.s32.totalorder %s38, %s41
    %p50 = scmp.eq.s32.totalorder %s19, 1
    %p51 = por %p49, %p50
    %p52 = scmp.ne.s32.totalorder %s41, %s42
    %p53 = scmp.eq.s32.totalorder %s19, 0
    %p54 = por %p52, %p53
    %p55 = scmp.ne.s32.totalorder %s41, %s42
    %p56 = scmp.eq.s32.totalorder %s20, 1
    %p57 = por %p55, %p56
    %p59 = scmp.ne.s32.totalorder %s42, %s58
    %p60 = scmp.eq.s32.totalorder %s20, 0
    %p61 = por %p59, %p60
    %s62 = ssub.s32 %s22, %s29
    %p63 = scmp.eq.s32.totalorder %s62, 0
    %s65 = sadd.s32 %s64, 1
    %s66 = scalar_select %p63, %s64, %s65
    %p69 = pneg %p63
    %p70 = scmp.eq.s32.totalorder %s14, 1
    %p71 = por %p69, %p70
    %p72 = scmp.ne.s32.totalorder %s64, %s67
    %p73 = scmp.eq.s32.totalorder %s14, 0
    %p74 = por %p72, %p73
    %p75 = scmp.ne.s32.totalorder %s64, %s67
    %p76 = scmp.eq.s32.totalorder %s19, 1
    %p77 = por %p75, %p76
    %p78 = scmp.ne.s32.totalorder %s67, %s68
    %p79 = scmp.eq.s32.totalorder %s19, 0
    %p80 = por %p78, %p79
    %p81 = scmp.ne.s32.totalorder %s67, %s68
    %p82 = scmp.eq.s32.totalorder %s20, 1
    %p83 = por %p81, %p82
    %p85 = scmp.ne.s32.totalorder %s68, %s84
    %p86 = scmp.eq.s32.totalorder %s20, 0
    %p87 = por %p85, %p86
    %s89 = sadd.s32 %s88, 1
    %p92 = scmp.eq.s32.totalorder %s14, 1
    %p93 = scmp.ne.s32.totalorder %s88, %s90
    %p94 = scmp.eq.s32.totalorder %s14, 0
    %p95 = por %p93, %p94
    %p96 = scmp.ne.s32.totalorder %s88, %s90
    %p97 = scmp.eq.s32.totalorder %s19, 1
    %p98 = por %p96, %p97
    %p99 = scmp.ne.s32.totalorder %s90, %s91
    %p100 = scmp.eq.s32.totalorder %s19, 0
    %p101 = por %p99, %p100
    %p102 = scmp.ne.s32.totalorder %s90, %s91
    %p103 = scmp.eq.s32.totalorder %s20, 1
    %p104 = por %p102, %p103
    %p106 = scmp.ne.s32.totalorder %s91, %s105
    %p107 = scmp.eq.s32.totalorder %s20, 0
    %p108 = por %p106, %p107
    %s110 = sadd.s32 %s109, 1
    %p113 = scmp.eq.s32.totalorder %s14, 1
    %p114 = scmp.ne.s32.totalorder %s109, %s111
    %p115 = scmp.eq.s32.totalorder %s14, 0
    %p116 = por %p114, %p115
    %p117 = scmp.ne.s32.totalorder %s109, %s111
    %p118 = scmp.eq.s32.totalorder %s19, 1
    %p119 = por %p117, %p118
    %p120 = scmp.ne.s32.totalorder %s111, %s112
    %p121 = scmp.eq.s32.totalorder %s19, 0
    %p122 = por %p120, %p121
    %p123 = scmp.ne.s32.totalorder %s111, %s112
    %p124 = scmp.eq.s32.totalorder %s20, 1
    %p125 = por %p123, %p124
    %p127 = scmp.ne.s32.totalorder %s112, %s126
    %p128 = scmp.eq.s32.totalorder %s20, 0
    %p129 = por %p127, %p128
    %s131 = sadd.s32 %s130, 1
    %p134 = scmp.eq.s32.totalorder %s14, 1
    %p135 = scmp.ne.s32.totalorder %s130, %s132
    %p136 = scmp.eq.s32.totalorder %s14, 0
    %p137 = por %p135, %p136
    %p138 = scmp.ne.s32.totalorder %s130, %s132
    %p139 = scmp.eq.s32.totalorder %s19, 1
    %p140 = por %p138, %p139
    %p141 = scmp.ne.s32.totalorder %s132, %s133
    %p142 = scmp.eq.s32.totalorder %s19, 0
    %p143 = por %p141, %p142
    %p144 = scmp.ne.s32.totalorder %s132, %s133
    %p145 = scmp.eq.s32.totalorder %s20, 1
    %p146 = por %p144, %p145
    %p148 = scmp.ne.s32.totalorder %s133, %s147
    %p149 = scmp.eq.s32.totalorder %s20, 0
    %p150 = por %p148, %p149
    %s152 = sadd.s32 %s151, 1
    %p155 = scmp.eq.s32.totalorder %s14, 1
    %p156 = scmp.ne.s32.totalorder %s151, %s153
    %p157 = scmp.eq.s32.totalorder %s14, 0
    %p158 = por %p156, %p157
    %p159 = scmp.ne.s32.totalorder %s151, %s153
    %p160 = scmp.eq.s32.totalorder %s19, 1
    %p161 = por %p159, %p160
    %p162 = scmp.ne.s32.totalorder %s153, %s154
    %p163 = scmp.eq.s32.totalorder %s19, 0
    %p164 = por %p162, %p163
    %p165 = scmp.ne.s32.totalorder %s153, %s154
    %p166 = scmp.eq.s32.totalorder %s20, 1
    %p167 = por %p165, %p166
    %p169 = scmp.ne.s32.totalorder %s154, %s168
    %p170 = scmp.eq.s32.totalorder %s20, 0
    %p171 = por %p169, %p170
    %s172 = ssub.s32 %s21, %s33
    %s173 = ssub.s32 %s22, %s29
    %s174 = sor.u32 %s172, %s173
    %p175 = scmp.eq.s32.totalorder %s174, 0
    %s177 = sadd.s32 %s176, 1
    %s178 = scalar_select %p175, %s176, %s177
    %p181 = pneg %p175
    %p182 = scmp.eq.s32.totalorder %s14, 1
    %p183 = por %p181, %p182
    %p184 = scmp.ne.s32.totalorder %s176, %s179
    %p185 = scmp.eq.s32.totalorder %s14, 0
    %p186 = por %p184, %p185
    %p187 = scmp.ne.s32.totalorder %s176, %s179
    %p188 = scmp.eq.s32.totalorder %s19, 1
    %p189 = por %p187, %p188
    %p190 = scmp.ne.s32.totalorder %s179, %s180
    %p191 = scmp.eq.s32.totalorder %s19, 0
    %p192 = por %p190, %p191
    %p193 = scmp.ne.s32.totalorder %s179, %s180
    %p194 = scmp.eq.s32.totalorder %s20, 1
    %p195 = por %p193, %p194
    %p197 = scmp.ne.s32.totalorder %s180, %s196
    %p198 = scmp.eq.s32.totalorder %s20, 0
    %p199 = por %p197, %p198
    %s200 = ssub.s32 %s21, %s33
    %s201 = ssub.s32 %s22, %s29
    %s202 = sor.u32 %s200, %s201
    %p203 = scmp.eq.s32.totalorder %s202, 0
    %s205 = sadd.s32 %s204, 1
    %s206 = scalar_select %p203, %s204, %s205
    %p209 = pneg %p203
    %p210 = scmp.eq.s32.totalorder %s14, 1
    %p211 = por %p209, %p210
    %p212 = scmp.ne.s32.totalorder %s204, %s207
    %p213 = scmp.eq.s32.totalorder %s14, 0
    %p214 = por %p212, %p213
    %p215 = scmp.ne.s32.totalorder %s204, %s207
    %p216 = scmp.eq.s32.totalorder %s19, 1
    %p217 = por %p215, %p216
    %p218 = scmp.ne.s32.totalorder %s207, %s208
    %p219 = scmp.eq.s32.totalorder %s19, 0
    %p220 = por %p218, %p219
    %p221 = scmp.ne.s32.totalorder %s207, %s208
    %p222 = scmp.eq.s32.totalorder %s20, 1
    %p223 = por %p221, %p222
    %p225 = scmp.ne.s32.totalorder %s208, %s224
    %p226 = scmp.eq.s32.totalorder %s20, 0
    %p227 = por %p225, %p226
    %p228 = scmp.le.s32.totalorder 1, %s14
    %p229 = scmp.lt.s32.totalorder %s14, 3
    %p230 = pnand %p228, %p229
    %p231 = pneg %p230
    // Predicated region
    $region9: #{_lambda_.6} parent=5 // pred_check
      _
    $region10: #{_lambda_.6} parent=5 // pred_check_branch
      %233 = sbr.rel (%p230) target = $region12
    $region11: #{_lambda_.6} parent=5 // pred_region
      %s234 = ssub.s32 %s14, 1
      // Predicated region
      $region13: #{_lambda_.6} parent=11 // pred_check
        %p235 = pneg %p80
      $region14: #{_lambda_.6} parent=11 // pred_check_branch
        %237 = sbr.rel (%p235) target = $region16
      $region15: #{_lambda_.6} parent=11 // pred_region
        %s238 = smul.u32 4, %s24
        %p239 = scmp.lt.s32.totalorder %s238, 3
        %s240 = scalar_select %p239, %s238, 3
        %s241 = smul.addr %s240, 4
        %s242 = scalar_lea.vmem %s1, %s241
        %s243 = smul.u32 4, %s24
      $region16: #{_lambda_.6} parent=11 // pred_fallthru
        _
      // Predicated region
      $region17: #{_lambda_.6} parent=11 // pred_check
        %p244 = pneg %p101
      $region18: #{_lambda_.6} parent=11 // pred_check_branch
        %246 = sbr.rel (%p244) target = $region20
      $region19: #{_lambda_.6} parent=11 // pred_region
        _
      $region20: #{_lambda_.6} parent=11 // pred_fallthru
        _
      // Predicated region
      $region21: #{_lambda_.6} parent=11 // pred_check
        %p247 = pneg %p122
      $region22: #{_lambda_.6} parent=11 // pred_check_branch
        %249 = sbr.rel (%p247) target = $region24
      $region23: #{_lambda_.6} parent=11 // pred_region
        _
      $region24: #{_lambda_.6} parent=11 // pred_fallthru
        _
      // Predicated region
      $region25: #{_lambda_.6} parent=11 // pred_check
        %p250 = pneg %p143
      $region26: #{_lambda_.6} parent=11 // pred_check_branch
        %252 = sbr.rel (%p250) target = $region28
      $region27: #{_lambda_.6} parent=11 // pred_region
        _
      $region28: #{_lambda_.6} parent=11 // pred_fallthru
        _
      // Predicated region
      $region29: #{_lambda_.6} parent=11 // pred_check
        %p253 = pneg %p164
      $region30: #{_lambda_.6} parent=11 // pred_check_branch
        %255 = sbr.rel (%p253) target = $region32
      $region31: #{_lambda_.6} parent=11 // pred_region
        _
      $region32: #{_lambda_.6} parent=11 // pred_fallthru
        _
    $region12: #{_lambda_.6} parent=5 // pred_fallthru
      _
    %p256 = scmp.lt.s32.totalorder %s14, 2
    // Predicated region
    $region33: #{_lambda_.6} parent=5 // pred_check
      %p257 = pneg %p256
    $region34: #{_lambda_.6} parent=5 // pred_check_branch
      %259 = sbr.rel (%p257) target = $region36
    $region35: #{_lambda_.6} parent=5 // pred_region
      // Predicated region
      $region37: #{_lambda_.6} parent=35 // pred_check
        %p260 = pneg %p48
      $region38: #{_lambda_.6} parent=35 // pred_check_branch
        %262 = sbr.rel (%p260) target = $region40
      $region39: #{_lambda_.6} parent=35 // pred_region
        %s263 = smul.u32 4, %s22
        %p264 = scmp.lt.s32.totalorder %s21, 1
        %s265 = scalar_select %p264, %s21, 1
        %p266 = scmp.lt.s32.totalorder %s263, 3
        %s267 = scalar_select %p266, %s263, 3
        %s268 = smul.addr %s265, 4
        %s269 = sadd.s32 %s267, %s268
        %s270 = smul.addr %s269, 4
        %s271 = scalar_lea.vmem %s0, %s270
        %s272 = smul.u32 4, %s22
      $region40: #{_lambda_.6} parent=35 // pred_fallthru
        _
    $region36: #{_lambda_.6} parent=5 // pred_fallthru
      _
    %p273 = scmp.le.s32.totalorder 1, %s14
    %p274 = scmp.lt.s32.totalorder %s14, 3
    %p275 = pnand %p273, %p274
    %p276 = pneg %p275
    // Predicated region
    $region41: #{_lambda_.6} parent=5 // pred_check
      _
    $region42: #{_lambda_.6} parent=5 // pred_check_branch
      %278 = sbr.rel (%p275) target = $region44
    $region43: #{_lambda_.6} parent=5 // pred_region
      %s279 = ssub.s32 %s14, 1
      %s280 = smul.u32 4, %s24
      %p281 = scmp.lt.s32.totalorder %s23, 1
      %s282 = scalar_select %p281, %s23, 1
      %p283 = scmp.lt.s32.totalorder %s280, 3
      %s284 = scalar_select %p283, %s280, 3
      %s285 = smul.addr %s282, 4
      %s286 = sadd.s32 %s284, %s285
      %s287 = smul.addr %s286, 4
      %s288 = scalar_lea.vmem %s0, %s287
      %p289 = pneg %p54
      %p290 = pneg %p51
      %s291 = smul.u32 4, %s24
      %p292 = scmp.lt.s32.totalorder %s291, 3
      %s293 = scalar_select %p292, %s291, 3
      %s294 = smul.addr %s293, 4
      %s295 = scalar_lea.vmem %s1, %s294
      %p296 = pneg %p80
      %p297 = pneg %p77
      %p298 = pneg %p101
      %p299 = pneg %p98
      %p300 = pneg %p122
      %p301 = pneg %p119
      %p302 = pneg %p143
      %p303 = pneg %p140
      %p304 = pneg %p164
      %p305 = pneg %p161
      %p306 = pneg %p192
      %p307 = pneg %p189
      %s308 = smul.u32 4, %s24
      %p309 = scmp.lt.s32.totalorder %s23, 1
      %s310 = scalar_select %p309, %s23, 1
      %p311 = scmp.lt.s32.totalorder %s308, 3
      %s312 = scalar_select %p311, %s308, 3
      %s313 = smul.addr %s310, 4
      %s314 = sadd.s32 %s312, %s313
      %s315 = smul.addr %s314, 4
      %s316 = scalar_lea.vmem %s6, %s315
      %p317 = pneg %p220
      %p318 = pneg %p217
      %s319 = smul.u32 4, %s24
      %p320 = scmp.lt.s32.totalorder %s23, 1
      %s321 = scalar_select %p320, %s23, 1
      %p322 = scmp.lt.s32.totalorder %s319, 3
      %s323 = scalar_select %p322, %s319, 3
      %s324 = smul.addr %s321, 4
      %s325 = sadd.s32 %s323, %s324
      %s326 = smul.addr %s325, 4
      %s327 = scalar_lea.vmem %s7, %s326
      %s328 = smul.u32 4, %s24
      %p329 = scmp.lt.s32.totalorder %s23, 1
      %s330 = scalar_select %p329, %s23, 1
      %p331 = scmp.lt.s32.totalorder %s328, 3
      %s332 = scalar_select %p331, %s328, 3
      %s333 = smul.addr %s330, 4
      %s334 = sadd.s32 %s332, %s333
      %s335 = smul.addr %s334, 4
      %s336 = scalar_lea.vmem %s0, %s335
      %s337 = smul.u32 4, %s24
      %s338 = smul.u32 4, %s24
      %p339 = scmp.lt.s32.totalorder %s338, 3
      %s340 = scalar_select %p339, %s338, 3
      %s341 = smul.addr %s340, 4
      %s342 = scalar_lea.vmem %s1, %s341
      %s343 = smul.u32 4, %s24
      %s344 = smul.u32 4, %s24
      %p345 = scmp.lt.s32.totalorder %s23, 1
      %s346 = scalar_select %p345, %s23, 1
      %p347 = scmp.lt.s32.totalorder %s344, 3
      %s348 = scalar_select %p347, %s344, 3
      %s349 = smul.addr %s346, 4
      %s350 = sadd.s32 %s348, %s349
      %s351 = smul.addr %s350, 4
      %s352 = scalar_lea.vmem %s6, %s351
      %s353 = smul.u32 4, %s24
      %s354 = smul.u32 4, %s24
      %p355 = scmp.lt.s32.totalorder %s23, 1
      %s356 = scalar_select %p355, %s23, 1
      %p357 = scmp.lt.s32.totalorder %s354, 3
      %s358 = scalar_select %p357, %s354, 3
      %s359 = smul.addr %s356, 4
      %s360 = sadd.s32 %s358, %s359
      %s361 = smul.addr %s360, 4
      %s362 = scalar_lea.vmem %s7, %s361
      %s363 = smul.u32 4, %s24
      %v365 = vld [vmem:[%s336] sm:$0xf]
      %v366 = vld [vmem:[%s336 + $0x4] sm:$0xf]
      %v367 = vld [vmem:[%s336 + $0x8] sm:$0xf]
      %v368 = vld [vmem:[%s336 + $0xc] sm:$0xf]
      %v369 = vld [vmem:[%s2] sm:$0xf]
      %v370 = vld [vmem:[%s2 + $0x4] sm:$0xf]
      %v371 = vld [vmem:[%s2 + $0x8] sm:$0xf]
      %v372 = vld [vmem:[%s2 + $0xc] sm:$0xf]
      %v373 = vld [vmem:[%s2 + $0x10] sm:$0xf]
      %v374 = vld [vmem:[%s2 + $0x14] sm:$0xf]
      %v375 = vld [vmem:[%s2 + $0x18] sm:$0xf]
      %v376 = vld [vmem:[%s2 + $0x1c] sm:$0xf]
      %v377 = vld [vmem:[%s2 + $0x20] sm:$0xf]
      %v378 = vld [vmem:[%s2 + $0x24] sm:$0xf]
      %v379 = vld [vmem:[%s2 + $0x28] sm:$0xf]
      %v380 = vld [vmem:[%s2 + $0x2c] sm:$0xf]
      %v381 = vld [vmem:[%s2 + $0x30] sm:$0xf]
      %v382 = vld [vmem:[%s2 + $0x34] sm:$0xf]
      %v383 = vld [vmem:[%s2 + $0x38] sm:$0xf]
      %v384 = vld [vmem:[%s2 + $0x3c] sm:$0xf]
      %v385 = vld [vmem:[%s3] sm:$0x1]
      %v387 = vlaneseq
      %v388 = vshrl.u32 %v387, 7
      %v389 = vsub.s32 0, %v388
      %v390 = vrot.slane %v385, %v389
      %v396 = vunpack.c.l.b16 %v365
      %v397 = vunpack.c.l.b16 %v366
      %v398 = vunpack.c.l.b16 %v367
      %v399 = vunpack.c.l.b16 %v368
      %v400 = vpack.c.b16 %v397, %v396
      %v401 = vpack.c.b16 %v399, %v398
      %v420 = vunpack.c.l.b16 %v369
      %v421 = vunpack.c.l.b16 %v370
      %v422 = vunpack.c.l.b16 %v371
      %v423 = vunpack.c.l.b16 %v372
      %v424 = vunpack.c.l.b16 %v373
      %v425 = vunpack.c.l.b16 %v374
      %v426 = vunpack.c.l.b16 %v375
      %v427 = vunpack.c.l.b16 %v376
      %v428 = vunpack.c.l.b16 %v377
      %v429 = vunpack.c.l.b16 %v378
      %v430 = vunpack.c.l.b16 %v379
      %v431 = vunpack.c.l.b16 %v380
      %v432 = vunpack.c.l.b16 %v381
      %v433 = vunpack.c.l.b16 %v382
      %v434 = vunpack.c.l.b16 %v383
      %v435 = vunpack.c.l.b16 %v384
      %v436 = vpack.c.b16 %v421, %v420
      %v437 = vpack.c.b16 %v423, %v422
      %v438 = vpack.c.b16 %v425, %v424
      %v439 = vpack.c.b16 %v427, %v426
      %v440 = vpack.c.b16 %v429, %v428
      %v441 = vpack.c.b16 %v431, %v430
      %v442 = vpack.c.b16 %v433, %v432
      %v443 = vpack.c.b16 %v435, %v434
      %452 = vmatprep.subr.bf16.mxu0 0
      %453 = vmatpush1.bf16.msra.mxu0 %v443
      %454 = vmatprep.subr.bf16.mxu0 0
      %455 = vmatpush1.bf16.msra.mxu0 %v442
      %456 = vmatprep.subr.bf16.mxu0 0
      %457 = vmatpush1.bf16.msra.mxu0 %v441
      %458 = vmatprep.subr.bf16.mxu0 0
      %459 = vmatpush1.bf16.msra.mxu0 %v440
      %460 = vmatprep.subr.bf16.mxu0 0
      %461 = vmatpush1.bf16.msra.mxu0 %v439
      %462 = vmatprep.subr.bf16.mxu0 0
      %463 = vmatpush1.bf16.msra.mxu0 %v438
      %464 = vmatprep.subr.bf16.mxu0 0
      %465 = vmatpush1.bf16.msra.mxu0 %v437
      %466 = vmatprep.subr.bf16.mxu0 0
      %467 = vmatpush1.bf16.msra.mxu0 %v436
      %468 = vmatprep.subr.bf16.mxu0 0
      %469 = vmatpush2.bf16.msra.mxu0 0
      %470 = vmatprep.subr.bf16.mxu0 0
      %471 = vmatpush2.bf16.msra.mxu0 0
      %472 = vmatprep.subr.bf16.mxu0 0
      %473 = vmatpush2.bf16.msra.mxu0 0
      %474 = vmatprep.subr.bf16.mxu0 0
      %475 = vmatpush2.bf16.msra.mxu0 0
      %476 = vmatprep.subr.bf16.mxu0 0
      %477 = vmatpush2.bf16.msra.mxu0 0
      %478 = vmatprep.subr.bf16.mxu0 0
      %479 = vmatpush2.bf16.msra.mxu0 0
      %480 = vmatprep.subr.bf16.mxu0 0
      %481 = vmatpush2.bf16.msra.mxu0 0
      %482 = vmatprep.subr.bf16.mxu0 0
      %483 = vmatpush2.bf16.msra.mxu0 0
      %484 = vmatprep.mubr.bf16.mxu0 0
      %485 = vmatmul.mubr.bf16.gmra.mxu0 %v400
      %v486 = vpop.f32.mrf.mxu0
      %v487 = vadd.f32 %v390, %v486
      %v488 = vpop.f32.mrf.mxu0
      %v489 = vpop.f32.mrf.mxu0
      %v490 = vadd.f32 %v390, %v489
      %v491 = vpop.f32.mrf.mxu0
      %492 = vmatprep.mubr.bf16.mxu0 0
      %493 = vmatmul.mubr.bf16.gmra.mxu0 %v401
      %v494 = vpop.f32.mrf.mxu0
      %v495 = vadd.f32 %v390, %v494
      %v496 = vpop.f32.mrf.mxu0
      %v497 = vpop.f32.mrf.mxu0
      %v498 = vadd.f32 %v390, %v497
      %v499 = vpop.f32.mrf.mxu0
      %500 = vdwg.mxu0
      %v501 = vld [vmem:[%s342] sm:$0xf]
      %v502 = vld [vmem:[%s342 + $0x4] sm:$0xf]
      %v503 = vld [vmem:[%s342 + $0x8] sm:$0xf]
      %v504 = vld [vmem:[%s342 + $0xc] sm:$0xf]
      %v505 = vunpack.c.l.bf16 %v501
      %v506 = vunpack.c.l.bf16 %v502
      %v507 = vunpack.c.l.bf16 %v503
      %v508 = vunpack.c.l.bf16 %v504
      %v509 = vadd.f32 %v487, %v505
      %v510 = vadd.f32 %v490, %v506
      %v511 = vadd.f32 %v495, %v507
      %v512 = vadd.f32 %v498, %v508
      %v513 = vpack.c.bf16 %v510, %v509
      %v514 = vpack.c.bf16 %v512, %v511
      %v515 = vld [vmem:[%s4] sm:$0xff]
      %v516 = vld [vmem:[%s4 + $0x8] sm:$0xff]
      %v517 = vld [vmem:[%s4 + $0x10] sm:$0xff]
      %v518 = vld [vmem:[%s4 + $0x18] sm:$0xff]
      %v519 = vld [vmem:[%s4 + $0x20] sm:$0xff]
      %v520 = vld [vmem:[%s4 + $0x28] sm:$0xff]
      %v521 = vld [vmem:[%s4 + $0x30] sm:$0xff]
      %v522 = vld [vmem:[%s4 + $0x38] sm:$0xff]
      %v523 = vld [vmem:[%s4 + $0x40] sm:$0xff]
      %v524 = vld [vmem:[%s4 + $0x48] sm:$0xff]
      %v525 = vld [vmem:[%s4 + $0x50] sm:$0xff]
      %v526 = vld [vmem:[%s4 + $0x58] sm:$0xff]
      %v527 = vld [vmem:[%s4 + $0x60] sm:$0xff]
      %v528 = vld [vmem:[%s4 + $0x68] sm:$0xff]
      %v529 = vld [vmem:[%s4 + $0x70] sm:$0xff]
      %v530 = vld [vmem:[%s4 + $0x78] sm:$0xff]
      %v531 = vld [vmem:[%s5] sm:$0x3]
      %v533 = vlaneseq
      %v534 = vshrl.u32 %v533, 7
      %v535 = vsub.s32 0, %v534
      %v536 = vrot.slane %v531, %v535
      %v537 = vlaneseq
      %v538 = vshrl.u32 %v537, 7
      %v539 = vsub.s32 1, %v538
      %v540 = vrot.slane %v531, %v539
      %v559 = vunpack.c.l.b16 %v515
      %v560 = vunpack.c.h.b16 %v515
      %v561 = vunpack.c.l.b16 %v516
      %v562 = vunpack.c.h.b16 %v516
      %v563 = vunpack.c.l.b16 %v517
      %v564 = vunpack.c.h.b16 %v517
      %v565 = vunpack.c.l.b16 %v518
      %v566 = vunpack.c.h.b16 %v518
      %v567 = vunpack.c.l.b16 %v519
      %v568 = vunpack.c.h.b16 %v519
      %v569 = vunpack.c.l.b16 %v520
      %v570 = vunpack.c.h.b16 %v520
      %v571 = vunpack.c.l.b16 %v521
      %v572 = vunpack.c.h.b16 %v521
      %v573 = vunpack.c.l.b16 %v522
      %v574 = vunpack.c.h.b16 %v522
      %v575 = vunpack.c.l.b16 %v523
      %v576 = vunpack.c.h.b16 %v523
      %v577 = vunpack.c.l.b16 %v524
      %v578 = vunpack.c.h.b16 %v524
      %v579 = vunpack.c.l.b16 %v525
      %v580 = vunpack.c.h.b16 %v525
      %v581 = vunpack.c.l.b16 %v526
      %v582 = vunpack.c.h.b16 %v526
      %v583 = vunpack.c.l.b16 %v527
      %v584 = vunpack.c.h.b16 %v527
      %v585 = vunpack.c.l.b16 %v528
      %v586 = vunpack.c.h.b16 %v528
      %v587 = vunpack.c.l.b16 %v529
      %v588 = vunpack.c.h.b16 %v529
      %v589 = vunpack.c.l.b16 %v530
      %v590 = vunpack.c.h.b16 %v530
      %v591 = vpack.c.b16 %v561, %v559
      %v592 = vpack.c.b16 %v562, %v560
      %v593 = vpack.c.b16 %v565, %v563
      %v594 = vpack.c.b16 %v566, %v564
      %v595 = vpack.c.b16 %v569, %v567
      %v596 = vpack.c.b16 %v570, %v568
      %v597 = vpack.c.b16 %v573, %v571
      %v598 = vpack.c.b16 %v574, %v572
      %v599 = vpack.c.b16 %v577, %v575
      %v600 = vpack.c.b16 %v578, %v576
      %v601 = vpack.c.b16 %v581, %v579
      %v602 = vpack.c.b16 %v582, %v580
      %v603 = vpack.c.b16 %v585, %v583
      %v604 = vpack.c.b16 %v586, %v584
      %v605 = vpack.c.b16 %v589, %v587
      %v606 = vpack.c.b16 %v590, %v588
      %623 = vmatprep.subr.bf16.mxu0 %v606
      %624 = vmatpush1.bf16.msra.mxu0 %v605
      %625 = vmatprep.subr.bf16.mxu0 %v604
      %626 = vmatpush1.bf16.msra.mxu0 %v603
      %627 = vmatprep.subr.bf16.mxu0 %v602
      %628 = vmatpush1.bf16.msra.mxu0 %v601
      %629 = vmatprep.subr.bf16.mxu0 %v600
      %630 = vmatpush1.bf16.msra.mxu0 %v599
      %631 = vmatprep.subr.bf16.mxu0 %v598
      %632 = vmatpush1.bf16.msra.mxu0 %v597
      %633 = vmatprep.subr.bf16.mxu0 %v596
      %634 = vmatpush1.bf16.msra.mxu0 %v595
      %635 = vmatprep.subr.bf16.mxu0 %v594
      %636 = vmatpush1.bf16.msra.mxu0 %v593
      %637 = vmatprep.subr.bf16.mxu0 %v592
      %638 = vmatpush1.bf16.msra.mxu0 %v591
      %639 = vmatprep.subr.bf16.mxu0 0
      %640 = vmatpush2.bf16.msra.mxu0 0
      %641 = vmatprep.subr.bf16.mxu0 0
      %642 = vmatpush2.bf16.msra.mxu0 0
      %643 = vmatprep.subr.bf16.mxu0 0
      %644 = vmatpush2.bf16.msra.mxu0 0
      %645 = vmatprep.subr.bf16.mxu0 0
      %646 = vmatpush2.bf16.msra.mxu0 0
      %647 = vmatprep.subr.bf16.mxu0 0
      %648 = vmatpush2.bf16.msra.mxu0 0
      %649 = vmatprep.subr.bf16.mxu0 0
      %650 = vmatpush2.bf16.msra.mxu0 0
      %651 = vmatprep.subr.bf16.mxu0 0
      %652 = vmatpush2.bf16.msra.mxu0 0
      %653 = vmatprep.subr.bf16.mxu0 0
      %654 = vmatpush2.bf16.msra.mxu0 0
      %655 = vmatprep.mubr.bf16.mxu0 0
      %656 = vmatmul.mubr.bf16.gmra.mxu0 %v513
      %v657 = vpop.f32.mrf.mxu0
      %v658 = vadd.f32 %v536, %v657
      %v659 = vpop.f32.mrf.mxu0
      %v660 = vadd.f32 %v540, %v659
      %v661 = vpop.f32.mrf.mxu0
      %v662 = vadd.f32 %v536, %v661
      %v663 = vpop.f32.mrf.mxu0
      %v664 = vadd.f32 %v540, %v663
      %665 = vmatprep.mubr.bf16.mxu0 0
      %666 = vmatmul.mubr.bf16.gmra.mxu0 %v514
      %v667 = vpop.f32.mrf.mxu0
      %v668 = vadd.f32 %v536, %v667
      %v669 = vpop.f32.mrf.mxu0
      %v670 = vadd.f32 %v540, %v669
      %v671 = vpop.f32.mrf.mxu0
      %v672 = vadd.f32 %v536, %v671
      %v673 = vpop.f32.mrf.mxu0
      %v674 = vadd.f32 %v540, %v673
      %675 = vdwg.mxu0
      %v676 = vpack.c.bf16 %v662, %v658
      %v677 = vpack.c.bf16 %v672, %v668
      %v680 = vunpack.c.l.b16 %v676
      %v681 = vunpack.c.h.b16 %v676
      %v682 = vunpack.c.l.b16 %v677
      %v683 = vunpack.c.h.b16 %v677
      %v684 = vpack.c.b16 %v680, %v680
      %v685 = vpack.c.b16 %v681, %v681
      %v686 = vpack.c.b16 %v682, %v682
      %v687 = vpack.c.b16 %v683, %v683
      %692 = vst [vmem:[%s352] sm:$0xf] %v684
      %693 = vst [vmem:[%s352 + $0x4] sm:$0xf] %v685
      %694 = vst [vmem:[%s352 + $0x8] sm:$0xf] %v686
      %695 = vst [vmem:[%s352 + $0xc] sm:$0xf] %v687
      %v696 = vpack.c.bf16 %v664, %v660
      %v697 = vpack.c.bf16 %v674, %v670
      %v700 = vunpack.c.l.b16 %v696
      %v701 = vunpack.c.h.b16 %v696
      %v702 = vunpack.c.l.b16 %v697
      %v703 = vunpack.c.h.b16 %v697
      %v704 = vpack.c.b16 %v700, %v700
      %v705 = vpack.c.b16 %v701, %v701
      %v706 = vpack.c.b16 %v702, %v702
      %v707 = vpack.c.b16 %v703, %v703
      %712 = vst [vmem:[%s362] sm:$0xf] %v704
      %713 = vst [vmem:[%s362 + $0x4] sm:$0xf] %v705
      %714 = vst [vmem:[%s362 + $0x8] sm:$0xf] %v706
      %715 = vst [vmem:[%s362 + $0xc] sm:$0xf] %v707
      %s716 = smul.u32 4, %s24
      %p717 = scmp.lt.s32.totalorder %s23, 1
      %s718 = scalar_select %p717, %s23, 1
      %p719 = scmp.lt.s32.totalorder %s716, 3
      %s720 = scalar_select %p719, %s716, 3
      %s721 = smul.addr %s718, 4
      %s722 = sadd.s32 %s720, %s721
      %s723 = smul.addr %s722, 4
      %s724 = scalar_lea.vmem %s6, %s723
      %s725 = smul.u32 4, %s24
      %p726 = scmp.lt.s32.totalorder %s23, 1
      %s727 = scalar_select %p726, %s23, 1
      %p728 = scmp.lt.s32.totalorder %s725, 3
      %s729 = scalar_select %p728, %s725, 3
      %s730 = smul.addr %s727, 4
      %s731 = sadd.s32 %s729, %s730
      %s732 = smul.addr %s731, 4
      %s733 = scalar_lea.vmem %s7, %s732
      // Predicated region
      $region45: #{_lambda_.6} parent=43 // pred_check
        %p734 = pneg %p189
      $region46: #{_lambda_.6} parent=43 // pred_check_branch
        %736 = sbr.rel (%p734) target = $region48
      $region47: #{_lambda_.6} parent=43 // pred_region
        %s737 = smul.u32 4, %s24
      $region48: #{_lambda_.6} parent=43 // pred_fallthru
        _
      // Predicated region
      $region49: #{_lambda_.6} parent=43 // pred_check
        %p738 = pneg %p217
      $region50: #{_lambda_.6} parent=43 // pred_check_branch
        %740 = sbr.rel (%p738) target = $region52
      $region51: #{_lambda_.6} parent=43 // pred_region
        %s741 = smul.u32 4, %s24
      $region52: #{_lambda_.6} parent=43 // pred_fallthru
        _
    $region44: #{_lambda_.6} parent=5 // pred_fallthru
      _
    %p742 = scmp.le.s32.totalorder 2, %s14
    // Predicated region
    $region53: #{_lambda_.6} parent=5 // pred_check
      %p743 = pneg %p742
    $region54: #{_lambda_.6} parent=5 // pred_check_branch
      %745 = sbr.rel (%p743) target = $region56
    $region55: #{_lambda_.6} parent=5 // pred_region
      %s746 = ssub.s32 %s14, 2
      // Predicated region
      $region57: #{_lambda_.6} parent=55 // pred_check
        %p747 = pneg %p195
      $region58: #{_lambda_.6} parent=55 // pred_check_branch
        %749 = sbr.rel (%p747) target = $region60
      $region59: #{_lambda_.6} parent=55 // pred_region
        %s750 = smul.u32 4, %s26
        %p751 = scmp.lt.s32.totalorder %s25, 1
        %s752 = scalar_select %p751, %s25, 1
        %p753 = scmp.lt.s32.totalorder %s750, 3
        %s754 = scalar_select %p753, %s750, 3
        %s755 = smul.addr %s752, 4
        %s756 = sadd.s32 %s754, %s755
        %s757 = smul.addr %s756, 4
        %s758 = scalar_lea.vmem %s6, %s757
      $region60: #{_lambda_.6} parent=55 // pred_fallthru
        _
      // Predicated region
      $region61: #{_lambda_.6} parent=55 // pred_check
        %p759 = pneg %p223
      $region62: #{_lambda_.6} parent=55 // pred_check_branch
        %761 = sbr.rel (%p759) target = $region64
      $region63: #{_lambda_.6} parent=55 // pred_region
        %s762 = smul.u32 4, %s26
        %p763 = scmp.lt.s32.totalorder %s25, 1
        %s764 = scalar_select %p763, %s25, 1
        %p765 = scmp.lt.s32.totalorder %s762, 3
        %s766 = scalar_select %p765, %s762, 3
        %s767 = smul.addr %s764, 4
        %s768 = sadd.s32 %s766, %s767
        %s769 = smul.addr %s768, 4
        %s770 = scalar_lea.vmem %s7, %s769
      $region64: #{_lambda_.6} parent=55 // pred_fallthru
        _
    $region56: #{_lambda_.6} parent=5 // pred_fallthru
      _
  $region6: #{_lambda_.6} parent=0 // loop_footer
    %s18 = sadd.s32 1, %s14
  $region7: #{_lambda_.6} parent=0 // loop_footer_branch
    %13 = sbr.rel target = $region3
  $region8: #{_lambda_.6} parent=0 // loop_exit
    _

// kernel: _lambda_.5
$region0: #{_lambda_.5}
  #allocation0 [shape = 'u32[]', space=smem, size = 0x4, offset = 0x4, fixed_abs, tag = 'smem constant byte address 0x4 - core index']
  #allocation1 [shape = 'u32[144,128]{1,0:T(1,128)}', space=vmem, size = 0x12000, scoped, tag = 'internal scratch']
  %s0 = inlined_call_operand.vmem [shape: bf16[4,5,2,5,256], index: 0, kind: input, shape index: {}, may-alias: {0,1}]
  %s1 = inlined_call_operand.vmem [shape: bf16[4,5,2,5,256], index: 1, kind: input, shape index: {}, may-alias: {0,1}]
  %s2 = inlined_call_operand.vmem [shape: bf16[1152,128], index: 2, kind: input, shape index: {}]
  %s3 = inlined_call_operand.vmem [shape: f32[1,128], index: 3, kind: input, shape index: {}]
  %s4 = inlined_call_operand.vmem [shape: bf16[4,4,4,128], index: 4, kind: output, shape index: {}]
  %s5 = sld [smem:[#allocation0]]
  $region49: #{_lambda_.5} parent=0
    _
  %s7 = ssub.s32 1, %s5
  %s8 = scalar_select 0, %s7, %s5
  loop: start=0, step=1, limit=18
  $region2: #{_lambda_.5} parent=0 // loop_pre_header
    _
  $region3: #{_lambda_.5} parent=0 // loop_header
    %s10 = sphi 0, %s14
    %p11 = scmp.ge.s32.totalorder %s10, 18
    %s17 = sphi 0, %s29
    %s18 = sphi 0, %s25
    %s19 = sphi 0, %s17
    %s20 = sphi 0, %s18
    %s21 = sphi 0, %s19
    %s22 = sphi 0, %s20
    %s34 = sphi 0, %s36
    %s37 = sphi 0, %s34
    %s38 = sphi 0, %s37
    %s54 = sphi 0, %s38
    %s64 = sphi 0, %s66
    %s67 = sphi 0, %s64
    %s68 = sphi 0, %s67
    %s84 = sphi 0, %s68
    %s88 = sphi 0, %s88
    %s90 = sphi 0, %s88
    %s91 = sphi 0, %s90
    %s105 = sphi 0, %s91
    %s109 = sphi 0, %s109
    %s111 = sphi 0, %s109
    %s112 = sphi 0, %s111
    %s126 = sphi 0, %s112
    %s134 = sphi 0, %s136
    %s137 = sphi 0, %s134
    %s138 = sphi 0, %s137
    %s154 = sphi 0, %s138
  $region4: #{_lambda_.5} parent=0 // loop_header_branch
    %13 = sbr.rel (%p11) target = $region8
  $region5: #{_lambda_.5} parent=0 // loop_body
    %s15 = ssub.s32 %s10, 1
    %s16 = ssub.s32 %s10, 2
    %s23 = sadd.s32 1, %s18
    %p24 = scmp.ge.s32.totalorder %s23, 4
    %s25 = scalar_select %p24, 0, %s23
    %s26 = sadd.s32 1, %s17
    %s27 = scalar_select %p24, %s26, %s17
    %p28 = scmp.ge.s32.totalorder %s27, 4
    %s29 = scalar_select %p28, 0, %s27
    %s30 = ssub.s32 %s17, %s29
    %s31 = ssub.s32 %s18, %s25
    %s32 = sor.u32 %s30, %s31
    %p33 = scmp.eq.s32.totalorder %s32, 0
    %s35 = sadd.s32 %s34, 1
    %s36 = scalar_select %p33, %s34, %s35
    %p39 = pneg %p33
    %p40 = scmp.eq.s32.totalorder %s10, 15
    %p41 = por %p39, %p40
    %p42 = scmp.ne.s32.totalorder %s34, %s37
    %p43 = scmp.eq.s32.totalorder %s10, 0
    %p44 = por %p42, %p43
    %p45 = scmp.ne.s32.totalorder %s34, %s37
    %p46 = scmp.eq.s32.totalorder %s15, 15
    %p47 = por %p45, %p46
    %p48 = scmp.ne.s32.totalorder %s37, %s38
    %p49 = scmp.eq.s32.totalorder %s15, 0
    %p50 = por %p48, %p49
    %p51 = scmp.ne.s32.totalorder %s37, %s38
    %p52 = scmp.eq.s32.totalorder %s16, 15
    %p53 = por %p51, %p52
    %p55 = scmp.ne.s32.totalorder %s38, %s54
    %p56 = scmp.eq.s32.totalorder %s16, 0
    %p57 = por %p55, %p56
    %s58 = sadd.s32 %s18, 1
    %s59 = sadd.s32 %s25, 1
    %s60 = ssub.s32 %s17, %s29
    %s61 = ssub.s32 %s58, %s59
    %s62 = sor.u32 %s60, %s61
    %p63 = scmp.eq.s32.totalorder %s62, 0
    %s65 = sadd.s32 %s64, 1
    %s66 = scalar_select %p63, %s64, %s65
    %p69 = pneg %p63
    %p70 = scmp.eq.s32.totalorder %s10, 15
    %p71 = por %p69, %p70
    %p72 = scmp.ne.s32.totalorder %s64, %s67
    %p73 = scmp.eq.s32.totalorder %s10, 0
    %p74 = por %p72, %p73
    %p75 = scmp.ne.s32.totalorder %s64, %s67
    %p76 = scmp.eq.s32.totalorder %s15, 15
    %p77 = por %p75, %p76
    %p78 = scmp.ne.s32.totalorder %s67, %s68
    %p79 = scmp.eq.s32.totalorder %s15, 0
    %p80 = por %p78, %p79
    %p81 = scmp.ne.s32.totalorder %s67, %s68
    %p82 = scmp.eq.s32.totalorder %s16, 15
    %p83 = por %p81, %p82
    %p85 = scmp.ne.s32.totalorder %s68, %s84
    %p86 = scmp.eq.s32.totalorder %s16, 0
    %p87 = por %p85, %p86
    %s89 = sadd.s32 %s88, 1
    %p92 = scmp.eq.s32.totalorder %s10, 15
    %p93 = scmp.ne.s32.totalorder %s88, %s90
    %p94 = scmp.eq.s32.totalorder %s10, 0
    %p95 = por %p93, %p94
    %p96 = scmp.ne.s32.totalorder %s88, %s90
    %p97 = scmp.eq.s32.totalorder %s15, 15
    %p98 = por %p96, %p97
    %p99 = scmp.ne.s32.totalorder %s90, %s91
    %p100 = scmp.eq.s32.totalorder %s15, 0
    %p101 = por %p99, %p100
    %p102 = scmp.ne.s32.totalorder %s90, %s91
    %p103 = scmp.eq.s32.totalorder %s16, 15
    %p104 = por %p102, %p103
    %p106 = scmp.ne.s32.totalorder %s91, %s105
    %p107 = scmp.eq.s32.totalorder %s16, 0
    %p108 = por %p106, %p107
    %s110 = sadd.s32 %s109, 1
    %p113 = scmp.eq.s32.totalorder %s10, 15
    %p114 = scmp.ne.s32.totalorder %s109, %s111
    %p115 = scmp.eq.s32.totalorder %s10, 0
    %p116 = por %p114, %p115
    %p117 = scmp.ne.s32.totalorder %s109, %s111
    %p118 = scmp.eq.s32.totalorder %s15, 15
    %p119 = por %p117, %p118
    %p120 = scmp.ne.s32.totalorder %s111, %s112
    %p121 = scmp.eq.s32.totalorder %s15, 0
    %p122 = por %p120, %p121
    %p123 = scmp.ne.s32.totalorder %s111, %s112
    %p124 = scmp.eq.s32.totalorder %s16, 15
    %p125 = por %p123, %p124
    %p127 = scmp.ne.s32.totalorder %s112, %s126
    %p128 = scmp.eq.s32.totalorder %s16, 0
    %p129 = por %p127, %p128
    %s130 = ssub.s32 %s17, %s29
    %s131 = ssub.s32 %s18, %s25
    %s132 = sor.u32 %s130, %s131
    %p133 = scmp.eq.s32.totalorder %s132, 0
    %s135 = sadd.s32 %s134, 1
    %s136 = scalar_select %p133, %s134, %s135
    %p139 = pneg %p133
    %p140 = scmp.eq.s32.totalorder %s10, 15
    %p141 = por %p139, %p140
    %p142 = scmp.ne.s32.totalorder %s134, %s137
    %p143 = scmp.eq.s32.totalorder %s10, 0
    %p144 = por %p142, %p143
    %p145 = scmp.ne.s32.totalorder %s134, %s137
    %p146 = scmp.eq.s32.totalorder %s15, 15
    %p147 = por %p145, %p146
    %p148 = scmp.ne.s32.totalorder %s137, %s138
    %p149 = scmp.eq.s32.totalorder %s15, 0
    %p150 = por %p148, %p149
    %p151 = scmp.ne.s32.totalorder %s137, %s138
    %p152 = scmp.eq.s32.totalorder %s16, 15
    %p153 = por %p151, %p152
    %p155 = scmp.ne.s32.totalorder %s138, %s154
    %p156 = scmp.eq.s32.totalorder %s16, 0
    %p157 = por %p155, %p156
    %p158 = scmp.le.s32.totalorder 1, %s10
    %p159 = scmp.lt.s32.totalorder %s10, 17
    %p160 = pnand %p158, %p159
    %p161 = pneg %p160
    // Predicated region
    $region9: #{_lambda_.5} parent=5 // pred_check
      _
    $region10: #{_lambda_.5} parent=5 // pred_check_branch
      %163 = sbr.rel (%p160) target = $region12
    $region11: #{_lambda_.5} parent=5 // pred_region
      %s164 = ssub.s32 %s10, 1
      // Predicated region
      $region13: #{_lambda_.5} parent=11 // pred_check
        %p165 = pneg %p101
      $region14: #{_lambda_.5} parent=11 // pred_check_branch
        %167 = sbr.rel (%p165) target = $region16
      $region15: #{_lambda_.5} parent=11 // pred_region
        _
      $region16: #{_lambda_.5} parent=11 // pred_fallthru
        _
      // Predicated region
      $region17: #{_lambda_.5} parent=11 // pred_check
        %p168 = pneg %p122
      $region18: #{_lambda_.5} parent=11 // pred_check_branch
        %170 = sbr.rel (%p168) target = $region20
      $region19: #{_lambda_.5} parent=11 // pred_region
        _
      $region20: #{_lambda_.5} parent=11 // pred_fallthru
        _
    $region12: #{_lambda_.5} parent=5 // pred_fallthru
      _
    %p171 = scmp.lt.s32.totalorder %s10, 16
    // Predicated region
    $region21: #{_lambda_.5} parent=5 // pred_check
      %p172 = pneg %p171
    $region22: #{_lambda_.5} parent=5 // pred_check_branch
      %174 = sbr.rel (%p172) target = $region24
    $region23: #{_lambda_.5} parent=5 // pred_region
      // Predicated region
      $region25: #{_lambda_.5} parent=23 // pred_check
        %p175 = pneg %p44
      $region26: #{_lambda_.5} parent=23 // pred_check_branch
        %177 = sbr.rel (%p175) target = $region28
      $region27: #{_lambda_.5} parent=23 // pred_region
        %p178 = scmp.lt.s32.totalorder %s17, 3
        %s179 = scalar_select %p178, %s17, 3
        %p180 = scmp.lt.s32.totalorder %s18, 4
        %s181 = scalar_select %p180, %s18, 4
        %s182 = smul.addr %s181, 4
        %s183 = smul.addr %s179, 20
        %s184 = sadd.s32 %s182, %s183
        %s185 = smul.addr %s184, 4
        %s186 = scalar_lea.vmem %s0, %s185
      $region28: #{_lambda_.5} parent=23 // pred_fallthru
        _
      // Predicated region
      $region29: #{_lambda_.5} parent=23 // pred_check
        %p187 = pneg %p74
      $region30: #{_lambda_.5} parent=23 // pred_check_branch
        %189 = sbr.rel (%p187) target = $region32
      $region31: #{_lambda_.5} parent=23 // pred_region
        %s190 = sadd.s32 %s18, 1
        %p191 = scmp.lt.s32.totalorder %s17, 3
        %s192 = scalar_select %p191, %s17, 3
        %p193 = scmp.lt.s32.totalorder %s190, 4
        %s194 = scalar_select %p193, %s190, 4
        %s195 = smul.addr %s194, 4
        %s196 = smul.addr %s192, 20
        %s197 = sadd.s32 %s195, %s196
        %s198 = smul.addr %s197, 4
        %s199 = scalar_lea.vmem %s1, %s198
        %s200 = sadd.s32 %s18, 1
      $region32: #{_lambda_.5} parent=23 // pred_fallthru
        _
    $region24: #{_lambda_.5} parent=5 // pred_fallthru
      _
    %p201 = scmp.le.s32.totalorder 1, %s10
    %p202 = scmp.lt.s32.totalorder %s10, 17
    %p203 = pnand %p201, %p202
    %p204 = pneg %p203
    // Predicated region
    $region33: #{_lambda_.5} parent=5 // pred_check
      _
    $region34: #{_lambda_.5} parent=5 // pred_check_branch
      %206 = sbr.rel (%p203) target = $region36
    $region35: #{_lambda_.5} parent=5 // pred_region
      %s207 = ssub.s32 %s10, 1
      %p208 = scmp.lt.s32.totalorder %s19, 3
      %s209 = scalar_select %p208, %s19, 3
      %p210 = scmp.lt.s32.totalorder %s20, 4
      %s211 = scalar_select %p210, %s20, 4
      %s212 = smul.addr %s211, 4
      %s213 = smul.addr %s209, 20
      %s214 = sadd.s32 %s212, %s213
      %s215 = smul.addr %s214, 4
      %s216 = scalar_lea.vmem %s0, %s215
      %p217 = pneg %p50
      %p218 = pneg %p47
      %s219 = sadd.s32 %s20, 1
      %p220 = scmp.lt.s32.totalorder %s19, 3
      %s221 = scalar_select %p220, %s19, 3
      %p222 = scmp.lt.s32.totalorder %s219, 4
      %s223 = scalar_select %p222, %s219, 4
      %s224 = smul.addr %s223, 4
      %s225 = smul.addr %s221, 20
      %s226 = sadd.s32 %s224, %s225
      %s227 = smul.addr %s226, 4
      %s228 = scalar_lea.vmem %s1, %s227
      %p229 = pneg %p80
      %p230 = pneg %p77
      %p231 = pneg %p101
      %p232 = pneg %p98
      %p233 = pneg %p122
      %p234 = pneg %p119
      %p235 = pneg %p150
      %p236 = pneg %p147
      %p237 = scmp.lt.s32.totalorder %s19, 3
      %s238 = scalar_select %p237, %s19, 3
      %p239 = scmp.lt.s32.totalorder %s20, 3
      %s240 = scalar_select %p239, %s20, 3
      %s241 = smul.addr %s238, 4
      %s242 = sadd.s32 %s240, %s241
      %s243 = smul.addr %s242, 2
      %s244 = scalar_lea.vmem %s4, %s243
      %p245 = scmp.lt.s32.totalorder %s19, 3
      %s246 = scalar_select %p245, %s19, 3
      %p247 = scmp.lt.s32.totalorder %s20, 4
      %s248 = scalar_select %p247, %s20, 4
      %s249 = smul.addr %s248, 4
      %s250 = smul.addr %s246, 20
      %s251 = sadd.s32 %s249, %s250
      %s252 = smul.addr %s251, 4
      %s253 = scalar_lea.vmem %s0, %s252
      %s254 = sadd.s32 %s20, 1
      %p255 = scmp.lt.s32.totalorder %s19, 3
      %s256 = scalar_select %p255, %s19, 3
      %p257 = scmp.lt.s32.totalorder %s254, 4
      %s258 = scalar_select %p257, %s254, 4
      %s259 = smul.addr %s258, 4
      %s260 = smul.addr %s256, 20
      %s261 = sadd.s32 %s259, %s260
      %s262 = smul.addr %s261, 4
      %s263 = scalar_lea.vmem %s1, %s262
      %s264 = sadd.s32 %s20, 1
      %p265 = scmp.lt.s32.totalorder %s19, 3
      %s266 = scalar_select %p265, %s19, 3
      %p267 = scmp.lt.s32.totalorder %s20, 3
      %s268 = scalar_select %p267, %s20, 3
      %s269 = smul.addr %s266, 4
      %s270 = sadd.s32 %s268, %s269
      %s271 = smul.addr %s270, 2
      %s272 = scalar_lea.vmem %s4, %s271
      %v274 = vld [vmem:[%s253] sm:$0x77]
      %v275 = vld [vmem:[%s253 + $0x8] sm:$0x77]
      %v276 = vld [vmem:[%s263] sm:$0x77]
      %v278 = vunpack.c.l.b16 %v274
      %v279 = vunpack.c.h.b16 %v274
      %v280 = vpack.c.b16 %v278, %v278
      %v281 = vpack.c.b16 %v279, %v279
      %v285 = vshrl.u32 %v280, 16
      %v287 = vshll.u32 %v280, 16
      %v289 = vrot.slane %v287, 1
      %v290 = vor.u32 %v285, %v289
      %v293 = vunpack.c.l.b16 %v275
      %v294 = vunpack.c.h.b16 %v275
      %v295 = vpack.c.b16 %v293, %v293
      %v296 = vpack.c.b16 %v294, %v294
      %v300 = vshrl.u32 %v295, 16
      %v302 = vshll.u32 %v295, 16
      %v304 = vrot.slane %v302, 1
      %v305 = vor.u32 %v300, %v304
      %v308 = vunpack.c.l.b16 %v276
      %v309 = vunpack.c.h.b16 %v276
      %v310 = vpack.c.b16 %v308, %v308
      %v311 = vpack.c.b16 %v309, %v309
      %v315 = vshrl.u32 %v310, 16
      %v317 = vshll.u32 %v310, 16
      %v319 = vrot.slane %v317, 1
      %v320 = vor.u32 %v315, %v319
      %v322 = vld [vmem:[%s2] sm:$0xf]
      %v323 = vld [vmem:[%s2 + $0x4] sm:$0xf]
      %v324 = vld [vmem:[%s2 + $0x8] sm:$0xf]
      %v325 = vld [vmem:[%s2 + $0xc] sm:$0xf]
      %v326 = vld [vmem:[%s2 + $0x10] sm:$0xf]
      %v327 = vld [vmem:[%s2 + $0x14] sm:$0xf]
      %v328 = vld [vmem:[%s2 + $0x18] sm:$0xf]
      %v329 = vld [vmem:[%s2 + $0x1c] sm:$0xf]
      %v330 = vld [vmem:[%s2 + $0x20] sm:$0xf]
      %v331 = vld [vmem:[%s2 + $0x24] sm:$0xf]
      %v332 = vld [vmem:[%s2 + $0x28] sm:$0xf]
      %v333 = vld [vmem:[%s2 + $0x2c] sm:$0xf]
      %v334 = vld [vmem:[%s2 + $0x30] sm:$0xf]
      %v335 = vld [vmem:[%s2 + $0x34] sm:$0xf]
      %v336 = vld [vmem:[%s2 + $0x38] sm:$0xf]
      %v337 = vld [vmem:[%s2 + $0x3c] sm:$0xf]
      %v338 = vld [vmem:[%s2 + $0x40] sm:$0xf]
      %v339 = vld [vmem:[%s2 + $0x44] sm:$0xf]
      %v340 = vld [vmem:[%s2 + $0x48] sm:$0xf]
      %v341 = vld [vmem:[%s2 + $0x4c] sm:$0xf]
      %v342 = vld [vmem:[%s2 + $0x50] sm:$0xf]
      %v343 = vld [vmem:[%s2 + $0x54] sm:$0xf]
      %v344 = vld [vmem:[%s2 + $0x58] sm:$0xf]
      %v345 = vld [vmem:[%s2 + $0x5c] sm:$0xf]
      %v346 = vld [vmem:[%s2 + $0x60] sm:$0xf]
      %v347 = vld [vmem:[%s2 + $0x64] sm:$0xf]
      %v348 = vld [vmem:[%s2 + $0x68] sm:$0xf]
      %v349 = vld [vmem:[%s2 + $0x6c] sm:$0xf]
      %v350 = vld [vmem:[%s2 + $0x70] sm:$0xf]
      %v351 = vld [vmem:[%s2 + $0x74] sm:$0xf]
      %v352 = vld [vmem:[%s2 + $0x78] sm:$0xf]
      %v353 = vld [vmem:[%s2 + $0x7c] sm:$0xf]
      %v354 = vld [vmem:[%s2 + $0x80] sm:$0xf]
      %v355 = vld [vmem:[%s2 + $0x84] sm:$0xf]
      %v356 = vld [vmem:[%s2 + $0x88] sm:$0xf]
      %v357 = vld [vmem:[%s2 + $0x8c] sm:$0xf]
      %v358 = vld [vmem:[%s2 + $0x90] sm:$0xf]
      %v359 = vld [vmem:[%s2 + $0x94] sm:$0xf]
      %v360 = vld [vmem:[%s2 + $0x98] sm:$0xf]
      %v361 = vld [vmem:[%s2 + $0x9c] sm:$0xf]
      %v362 = vld [vmem:[%s2 + $0xa0] sm:$0xf]
      %v363 = vld [vmem:[%s2 + $0xa4] sm:$0xf]
      %v364 = vld [vmem:[%s2 + $0xa8] sm:$0xf]
      %v365 = vld [vmem:[%s2 + $0xac] sm:$0xf]
      %v366 = vld [vmem:[%s2 + $0xb0] sm:$0xf]
      %v367 = vld [vmem:[%s2 + $0xb4] sm:$0xf]
      %v368 = vld [vmem:[%s2 + $0xb8] sm:$0xf]
      %v369 = vld [vmem:[%s2 + $0xbc] sm:$0xf]
      %v370 = vld [vmem:[%s2 + $0xc0] sm:$0xf]
      %v371 = vld [vmem:[%s2 + $0xc4] sm:$0xf]
      %v372 = vld [vmem:[%s2 + $0xc8] sm:$0xf]
      %v373 = vld [vmem:[%s2 + $0xcc] sm:$0xf]
      %v374 = vld [vmem:[%s2 + $0xd0] sm:$0xf]
      %v375 = vld [vmem:[%s2 + $0xd4] sm:$0xf]
      %v376 = vld [vmem:[%s2 + $0xd8] sm:$0xf]
      %v377 = vld [vmem:[%s2 + $0xdc] sm:$0xf]
      %v378 = vld [vmem:[%s2 + $0xe0] sm:$0xf]
      %v379 = vld [vmem:[%s2 + $0xe4] sm:$0xf]
      %v380 = vld [vmem:[%s2 + $0xe8] sm:$0xf]
      %v381 = vld [vmem:[%s2 + $0xec] sm:$0xf]
      %v382 = vld [vmem:[%s2 + $0xf0] sm:$0xf]
      %v383 = vld [vmem:[%s2 + $0xf4] sm:$0xf]
      %v384 = vld [vmem:[%s2 + $0xf8] sm:$0xf]
      %v385 = vld [vmem:[%s2 + $0xfc] sm:$0xf]
      %v386 = vld [vmem:[%s2 + $0x100] sm:$0xf]
      %v387 = vld [vmem:[%s2 + $0x104] sm:$0xf]
      %v388 = vld [vmem:[%s2 + $0x108] sm:$0xf]
      %v389 = vld [vmem:[%s2 + $0x10c] sm:$0xf]
      %v390 = vld [vmem:[%s2 + $0x110] sm:$0xf]
      %v391 = vld [vmem:[%s2 + $0x114] sm:$0xf]
      %v392 = vld [vmem:[%s2 + $0x118] sm:$0xf]
      %v393 = vld [vmem:[%s2 + $0x11c] sm:$0xf]
      %v394 = vld [vmem:[%s2 + $0x120] sm:$0xf]
      %v395 = vld [vmem:[%s2 + $0x124] sm:$0xf]
      %v396 = vld [vmem:[%s2 + $0x128] sm:$0xf]
      %v397 = vld [vmem:[%s2 + $0x12c] sm:$0xf]
      %v398 = vld [vmem:[%s2 + $0x130] sm:$0xf]
      %v399 = vld [vmem:[%s2 + $0x134] sm:$0xf]
      %v400 = vld [vmem:[%s2 + $0x138] sm:$0xf]
      %v401 = vld [vmem:[%s2 + $0x13c] sm:$0xf]
      %v402 = vld [vmem:[%s2 + $0x140] sm:$0xf]
      %v403 = vld [vmem:[%s2 + $0x144] sm:$0xf]
      %v404 = vld [vmem:[%s2 + $0x148] sm:$0xf]
      %v405 = vld [vmem:[%s2 + $0x14c] sm:$0xf]
      %v406 = vld [vmem:[%s2 + $0x150] sm:$0xf]
      %v407 = vld [vmem:[%s2 + $0x154] sm:$0xf]
      %v408 = vld [vmem:[%s2 + $0x158] sm:$0xf]
      %v409 = vld [vmem:[%s2 + $0x15c] sm:$0xf]
      %v410 = vld [vmem:[%s2 + $0x160] sm:$0xf]
      %v411 = vld [vmem:[%s2 + $0x164] sm:$0xf]
      %v412 = vld [vmem:[%s2 + $0x168] sm:$0xf]
      %v413 = vld [vmem:[%s2 + $0x16c] sm:$0xf]
      %v414 = vld [vmem:[%s2 + $0x170] sm:$0xf]
      %v415 = vld [vmem:[%s2 + $0x174] sm:$0xf]
      %v416 = vld [vmem:[%s2 + $0x178] sm:$0xf]
      %v417 = vld [vmem:[%s2 + $0x17c] sm:$0xf]
      %v418 = vld [vmem:[%s2 + $0x180] sm:$0xf]
      %v419 = vld [vmem:[%s2 + $0x184] sm:$0xf]
      %v420 = vld [vmem:[%s2 + $0x188] sm:$0xf]
      %v421 = vld [vmem:[%s2 + $0x18c] sm:$0xf]
      %v422 = vld [vmem:[%s2 + $0x190] sm:$0xf]
      %v423 = vld [vmem:[%s2 + $0x194] sm:$0xf]
      %v424 = vld [vmem:[%s2 + $0x198] sm:$0xf]
      %v425 = vld [vmem:[%s2 + $0x19c] sm:$0xf]
      %v426 = vld [vmem:[%s2 + $0x1a0] sm:$0xf]
      %v427 = vld [vmem:[%s2 + $0x1a4] sm:$0xf]
      %v428 = vld [vmem:[%s2 + $0x1a8] sm:$0xf]
      %v429 = vld [vmem:[%s2 + $0x1ac] sm:$0xf]
      %v430 = vld [vmem:[%s2 + $0x1b0] sm:$0xf]
      %v431 = vld [vmem:[%s2 + $0x1b4] sm:$0xf]
      %v432 = vld [vmem:[%s2 + $0x1b8] sm:$0xf]
      %v433 = vld [vmem:[%s2 + $0x1bc] sm:$0xf]
      %v434 = vld [vmem:[%s2 + $0x1c0] sm:$0xf]
      %v435 = vld [vmem:[%s2 + $0x1c4] sm:$0xf]
      %v436 = vld [vmem:[%s2 + $0x1c8] sm:$0xf]
      %v437 = vld [vmem:[%s2 + $0x1cc] sm:$0xf]
      %v438 = vld [vmem:[%s2 + $0x1d0] sm:$0xf]
      %v439 = vld [vmem:[%s2 + $0x1d4] sm:$0xf]
      %v440 = vld [vmem:[%s2 + $0x1d8] sm:$0xf]
      %v441 = vld [vmem:[%s2 + $0x1dc] sm:$0xf]
      %v442 = vld [vmem:[%s2 + $0x1e0] sm:$0xf]
      %v443 = vld [vmem:[%s2 + $0x1e4] sm:$0xf]
      %v444 = vld [vmem:[%s2 + $0x1e8] sm:$0xf]
      %v445 = vld [vmem:[%s2 + $0x1ec] sm:$0xf]
      %v446 = vld [vmem:[%s2 + $0x1f0] sm:$0xf]
      %v447 = vld [vmem:[%s2 + $0x1f4] sm:$0xf]
      %v448 = vld [vmem:[%s2 + $0x1f8] sm:$0xf]
      %v449 = vld [vmem:[%s2 + $0x1fc] sm:$0xf]
      %v450 = vld [vmem:[%s2 + $0x200] sm:$0xf]
      %v451 = vld [vmem:[%s2 + $0x204] sm:$0xf]
      %v452 = vld [vmem:[%s2 + $0x208] sm:$0xf]
      %v453 = vld [vmem:[%s2 + $0x20c] sm:$0xf]
      %v454 = vld [vmem:[%s2 + $0x210] sm:$0xf]
      %v455 = vld [vmem:[%s2 + $0x214] sm:$0xf]
      %v456 = vld [vmem:[%s2 + $0x218] sm:$0xf]
      %v457 = vld [vmem:[%s2 + $0x21c] sm:$0xf]
      %v458 = vld [vmem:[%s2 + $0x220] sm:$0xf]
      %v459 = vld [vmem:[%s2 + $0x224] sm:$0xf]
      %v460 = vld [vmem:[%s2 + $0x228] sm:$0xf]
      %v461 = vld [vmem:[%s2 + $0x22c] sm:$0xf]
      %v462 = vld [vmem:[%s2 + $0x230] sm:$0xf]
      %v463 = vld [vmem:[%s2 + $0x234] sm:$0xf]
      %v464 = vld [vmem:[%s2 + $0x238] sm:$0xf]
      %v465 = vld [vmem:[%s2 + $0x23c] sm:$0xf]
      %v466 = vld [vmem:[%s3] sm:$0x1]
      %v468 = vlaneseq
      %v469 = vshrl.u32 %v468, 7
      %v470 = vsub.s32 0, %v469
      %v471 = vrot.slane %v466, %v470
      %v617 = vunpack.c.l.b16 %v322
      %v618 = vunpack.c.l.b16 %v323
      %v619 = vunpack.c.l.b16 %v324
      %v620 = vunpack.c.l.b16 %v325
      %v621 = vunpack.c.l.b16 %v326
      %v622 = vunpack.c.l.b16 %v327
      %v623 = vunpack.c.l.b16 %v328
      %v624 = vunpack.c.l.b16 %v329
      %v625 = vunpack.c.l.b16 %v330
      %v626 = vunpack.c.l.b16 %v331
      %v627 = vunpack.c.l.b16 %v332
      %v628 = vunpack.c.l.b16 %v333
      %v629 = vunpack.c.l.b16 %v334
      %v630 = vunpack.c.l.b16 %v335
      %v631 = vunpack.c.l.b16 %v336
      %v632 = vunpack.c.l.b16 %v337
      %v633 = vunpack.c.l.b16 %v338
      %v634 = vunpack.c.l.b16 %v339
      %v635 = vunpack.c.l.b16 %v340
      %v636 = vunpack.c.l.b16 %v341
      %v637 = vunpack.c.l.b16 %v342
      %v638 = vunpack.c.l.b16 %v343
      %v639 = vunpack.c.l.b16 %v344
      %v640 = vunpack.c.l.b16 %v345
      %v641 = vunpack.c.l.b16 %v346
      %v642 = vunpack.c.l.b16 %v347
      %v643 = vunpack.c.l.b16 %v348
      %v644 = vunpack.c.l.b16 %v349
      %v645 = vunpack.c.l.b16 %v350
      %v646 = vunpack.c.l.b16 %v351
      %v647 = vunpack.c.l.b16 %v352
      %v648 = vunpack.c.l.b16 %v353
      %v649 = vunpack.c.l.b16 %v354
      %v650 = vunpack.c.l.b16 %v355
      %v651 = vunpack.c.l.b16 %v356
      %v652 = vunpack.c.l.b16 %v357
      %v653 = vunpack.c.l.b16 %v358
      %v654 = vunpack.c.l.b16 %v359
      %v655 = vunpack.c.l.b16 %v360
      %v656 = vunpack.c.l.b16 %v361
      %v657 = vunpack.c.l.b16 %v362
      %v658 = vunpack.c.l.b16 %v363
      %v659 = vunpack.c.l.b16 %v364
      %v660 = vunpack.c.l.b16 %v365
      %v661 = vunpack.c.l.b16 %v366
      %v662 = vunpack.c.l.b16 %v367
      %v663 = vunpack.c.l.b16 %v368
      %v664 = vunpack.c.l.b16 %v369
      %v665 = vunpack.c.l.b16 %v370
      %v666 = vunpack.c.l.b16 %v371
      %v667 = vunpack.c.l.b16 %v372
      %v668 = vunpack.c.l.b16 %v373
      %v669 = vunpack.c.l.b16 %v374
      %v670 = vunpack.c.l.b16 %v375
      %v671 = vunpack.c.l.b16 %v376
      %v672 = vunpack.c.l.b16 %v377
      %v673 = vunpack.c.l.b16 %v378
      %v674 = vunpack.c.l.b16 %v379
      %v675 = vunpack.c.l.b16 %v380
      %v676 = vunpack.c.l.b16 %v381
      %v677 = vunpack.c.l.b16 %v382
      %v678 = vunpack.c.l.b16 %v383
      %v679 = vunpack.c.l.b16 %v384
      %v680 = vunpack.c.l.b16 %v385
      %v681 = vunpack.c.l.b16 %v386
      %v682 = vunpack.c.l.b16 %v387
      %v683 = vunpack.c.l.b16 %v388
      %v684 = vunpack.c.l.b16 %v389
      %v685 = vunpack.c.l.b16 %v390
      %v686 = vunpack.c.l.b16 %v391
      %v687 = vunpack.c.l.b16 %v392
      %v688 = vunpack.c.l.b16 %v393
      %v689 = vunpack.c.l.b16 %v394
      %v690 = vunpack.c.l.b16 %v395
      %v691 = vunpack.c.l.b16 %v396
      %v692 = vunpack.c.l.b16 %v397
      %v693 = vunpack.c.l.b16 %v398
      %v694 = vunpack.c.l.b16 %v399
      %v695 = vunpack.c.l.b16 %v400
      %v696 = vunpack.c.l.b16 %v401
      %v697 = vunpack.c.l.b16 %v402
      %v698 = vunpack.c.l.b16 %v403
      %v699 = vunpack.c.l.b16 %v404
      %v700 = vunpack.c.l.b16 %v405
      %v701 = vunpack.c.l.b16 %v406
      %v702 = vunpack.c.l.b16 %v407
      %v703 = vunpack.c.l.b16 %v408
      %v704 = vunpack.c.l.b16 %v409
      %v705 = vunpack.c.l.b16 %v410
      %v706 = vunpack.c.l.b16 %v411
      %v707 = vunpack.c.l.b16 %v412
      %v708 = vunpack.c.l.b16 %v413
      %v709 = vunpack.c.l.b16 %v414
      %v710 = vunpack.c.l.b16 %v415
      %v711 = vunpack.c.l.b16 %v416
      %v712 = vunpack.c.l.b16 %v417
      %v713 = vunpack.c.l.b16 %v418
      %v714 = vunpack.c.l.b16 %v419
      %v715 = vunpack.c.l.b16 %v420
      %v716 = vunpack.c.l.b16 %v421
      %v717 = vunpack.c.l.b16 %v422
      %v718 = vunpack.c.l.b16 %v423
      %v719 = vunpack.c.l.b16 %v424
      %v720 = vunpack.c.l.b16 %v425
      %v721 = vunpack.c.l.b16 %v426
      %v722 = vunpack.c.l.b16 %v427
      %v723 = vunpack.c.l.b16 %v428
      %v724 = vunpack.c.l.b16 %v429
      %v725 = vunpack.c.l.b16 %v430
      %v726 = vunpack.c.l.b16 %v431
      %v727 = vunpack.c.l.b16 %v432
      %v728 = vunpack.c.l.b16 %v433
      %v729 = vunpack.c.l.b16 %v434
      %v730 = vunpack.c.l.b16 %v435
      %v731 = vunpack.c.l.b16 %v436
      %v732 = vunpack.c.l.b16 %v437
      %v733 = vunpack.c.l.b16 %v438
      %v734 = vunpack.c.l.b16 %v439
      %v735 = vunpack.c.l.b16 %v440
      %v736 = vunpack.c.l.b16 %v441
      %v737 = vunpack.c.l.b16 %v442
      %v738 = vunpack.c.l.b16 %v443
      %v739 = vunpack.c.l.b16 %v444
      %v740 = vunpack.c.l.b16 %v445
      %v741 = vunpack.c.l.b16 %v446
      %v742 = vunpack.c.l.b16 %v447
      %v743 = vunpack.c.l.b16 %v448
      %v744 = vunpack.c.l.b16 %v449
      %v745 = vunpack.c.l.b16 %v450
      %v746 = vunpack.c.l.b16 %v451
      %v747 = vunpack.c.l.b16 %v452
      %v748 = vunpack.c.l.b16 %v453
      %v749 = vunpack.c.l.b16 %v454
      %v750 = vunpack.c.l.b16 %v455
      %v751 = vunpack.c.l.b16 %v456
      %v752 = vunpack.c.l.b16 %v457
      %v753 = vunpack.c.l.b16 %v458
      %v754 = vunpack.c.l.b16 %v459
      %v755 = vunpack.c.l.b16 %v460
      %v756 = vunpack.c.l.b16 %v461
      %v757 = vunpack.c.l.b16 %v462
      %v758 = vunpack.c.l.b16 %v463
      %v759 = vunpack.c.l.b16 %v464
      %v760 = vunpack.c.l.b16 %v465
      %v761 = vpack.c.b16 %v618, %v617
      %v762 = vpack.c.b16 %v620, %v619
      %v763 = vpack.c.b16 %v622, %v621
      %v764 = vpack.c.b16 %v624, %v623
      %v765 = vpack.c.b16 %v626, %v625
      %v766 = vpack.c.b16 %v628, %v627
      %v767 = vpack.c.b16 %v630, %v629
      %v768 = vpack.c.b16 %v632, %v631
      %v769 = vpack.c.b16 %v634, %v633
      %v770 = vpack.c.b16 %v636, %v635
      %v771 = vpack.c.b16 %v638, %v637
      %v772 = vpack.c.b16 %v640, %v639
      %v773 = vpack.c.b16 %v642, %v641
      %v774 = vpack.c.b16 %v644, %v643
      %v775 = vpack.c.b16 %v646, %v645
      %v776 = vpack.c.b16 %v648, %v647
      %v777 = vpack.c.b16 %v650, %v649
      %v778 = vpack.c.b16 %v652, %v651
      %v779 = vpack.c.b16 %v654, %v653
      %v780 = vpack.c.b16 %v656, %v655
      %v781 = vpack.c.b16 %v658, %v657
      %v782 = vpack.c.b16 %v660, %v659
      %v783 = vpack.c.b16 %v662, %v661
      %v784 = vpack.c.b16 %v664, %v663
      %v785 = vpack.c.b16 %v666, %v665
      %v786 = vpack.c.b16 %v668, %v667
      %v787 = vpack.c.b16 %v670, %v669
      %v788 = vpack.c.b16 %v672, %v671
      %v789 = vpack.c.b16 %v674, %v673
      %v790 = vpack.c.b16 %v676, %v675
      %v791 = vpack.c.b16 %v678, %v677
      %v792 = vpack.c.b16 %v680, %v679
      %v793 = vpack.c.b16 %v682, %v681
      %v794 = vpack.c.b16 %v684, %v683
      %v795 = vpack.c.b16 %v686, %v685
      %v796 = vpack.c.b16 %v688, %v687
      %v797 = vpack.c.b16 %v690, %v689
      %v798 = vpack.c.b16 %v692, %v691
      %v799 = vpack.c.b16 %v694, %v693
      %v800 = vpack.c.b16 %v696, %v695
      %v801 = vpack.c.b16 %v698, %v697
      %v802 = vpack.c.b16 %v700, %v699
      %v803 = vpack.c.b16 %v702, %v701
      %v804 = vpack.c.b16 %v704, %v703
      %v805 = vpack.c.b16 %v706, %v705
      %v806 = vpack.c.b16 %v708, %v707
      %v807 = vpack.c.b16 %v710, %v709
      %v808 = vpack.c.b16 %v712, %v711
      %v809 = vpack.c.b16 %v714, %v713
      %v810 = vpack.c.b16 %v716, %v715
      %v811 = vpack.c.b16 %v718, %v717
      %v812 = vpack.c.b16 %v720, %v719
      %v813 = vpack.c.b16 %v722, %v721
      %v814 = vpack.c.b16 %v724, %v723
      %v815 = vpack.c.b16 %v726, %v725
      %v816 = vpack.c.b16 %v728, %v727
      %v817 = vpack.c.b16 %v730, %v729
      %v818 = vpack.c.b16 %v732, %v731
      %v819 = vpack.c.b16 %v734, %v733
      %v820 = vpack.c.b16 %v736, %v735
      %v821 = vpack.c.b16 %v738, %v737
      %v822 = vpack.c.b16 %v740, %v739
      %v823 = vpack.c.b16 %v742, %v741
      %v824 = vpack.c.b16 %v744, %v743
      %v825 = vpack.c.b16 %v746, %v745
      %v826 = vpack.c.b16 %v748, %v747
      %v827 = vpack.c.b16 %v750, %v749
      %v828 = vpack.c.b16 %v752, %v751
      %v829 = vpack.c.b16 %v754, %v753
      %v830 = vpack.c.b16 %v756, %v755
      %v831 = vpack.c.b16 %v758, %v757
      %v832 = vpack.c.b16 %v760, %v759
      %905 = vmatprep.subr.bf16.mxu0 0
      %906 = vmatpush1.bf16.msra.mxu0 %v768
      %907 = vmatprep.subr.bf16.mxu0 0
      %908 = vmatpush1.bf16.msra.mxu0 %v767
      %909 = vmatprep.subr.bf16.mxu0 0
      %910 = vmatpush1.bf16.msra.mxu0 %v766
      %911 = vmatprep.subr.bf16.mxu0 0
      %912 = vmatpush1.bf16.msra.mxu0 %v765
      %913 = vmatprep.subr.bf16.mxu0 0
      %914 = vmatpush1.bf16.msra.mxu0 %v764
      %915 = vmatprep.subr.bf16.mxu0 0
      %916 = vmatpush1.bf16.msra.mxu0 %v763
      %917 = vmatprep.subr.bf16.mxu0 0
      %918 = vmatpush1.bf16.msra.mxu0 %v762
      %919 = vmatprep.subr.bf16.mxu0 0
      %920 = vmatpush1.bf16.msra.mxu0 %v761
      %921 = vmatprep.subr.bf16.mxu0 0
      %922 = vmatpush2.bf16.msra.mxu0 %v776
      %923 = vmatprep.subr.bf16.mxu0 0
      %924 = vmatpush2.bf16.msra.mxu0 %v775
      %925 = vmatprep.subr.bf16.mxu0 0
      %926 = vmatpush2.bf16.msra.mxu0 %v774
      %927 = vmatprep.subr.bf16.mxu0 0
      %928 = vmatpush2.bf16.msra.mxu0 %v773
      %929 = vmatprep.subr.bf16.mxu0 0
      %930 = vmatpush2.bf16.msra.mxu0 %v772
      %931 = vmatprep.subr.bf16.mxu0 0
      %932 = vmatpush2.bf16.msra.mxu0 %v771
      %933 = vmatprep.subr.bf16.mxu0 0
      %934 = vmatpush2.bf16.msra.mxu0 %v770
      %935 = vmatprep.subr.bf16.mxu0 0
      %936 = vmatpush2.bf16.msra.mxu0 %v769
      %937 = vmatprep.mubr.bf16.mxu0 %v281
      %938 = vmatmul.mubr.bf16.gmra.mxu0 %v280
      %v939 = vpop.f32.mrf.mxu0
      %v940 = vadd.f32 %v471, %v939
      %v941 = vpop.f32.mrf.mxu0
      %v942 = vpop.f32.mrf.mxu0
      %v943 = vpop.f32.mrf.mxu0
      %944 = vdwg.mxu0
      %945 = vmatprep.subr.bf16.mxu0 0
      %946 = vmatpush1.bf16.msra.mxu0 %v784
      %947 = vmatprep.subr.bf16.mxu0 0
      %948 = vmatpush1.bf16.msra.mxu0 %v783
      %949 = vmatprep.subr.bf16.mxu0 0
      %950 = vmatpush1.bf16.msra.mxu0 %v782
      %951 = vmatprep.subr.bf16.mxu0 0
      %952 = vmatpush1.bf16.msra.mxu0 %v781
      %953 = vmatprep.subr.bf16.mxu0 0
      %954 = vmatpush1.bf16.msra.mxu0 %v780
      %955 = vmatprep.subr.bf16.mxu0 0
      %956 = vmatpush1.bf16.msra.mxu0 %v779
      %957 = vmatprep.subr.bf16.mxu0 0
      %958 = vmatpush1.bf16.msra.mxu0 %v778
      %959 = vmatprep.subr.bf16.mxu0 0
      %960 = vmatpush1.bf16.msra.mxu0 %v777
      %961 = vmatprep.subr.bf16.mxu0 0
      %962 = vmatpush2.bf16.msra.mxu0 %v792
      %963 = vmatprep.subr.bf16.mxu0 0
      %964 = vmatpush2.bf16.msra.mxu0 %v791
      %965 = vmatprep.subr.bf16.mxu0 0
      %966 = vmatpush2.bf16.msra.mxu0 %v790
      %967 = vmatprep.subr.bf16.mxu0 0
      %968 = vmatpush2.bf16.msra.mxu0 %v789
      %969 = vmatprep.subr.bf16.mxu0 0
      %970 = vmatpush2.bf16.msra.mxu0 %v788
      %971 = vmatprep.subr.bf16.mxu0 0
      %972 = vmatpush2.bf16.msra.mxu0 %v787
      %973 = vmatprep.subr.bf16.mxu0 0
      %974 = vmatpush2.bf16.msra.mxu0 %v786
      %975 = vmatprep.subr.bf16.mxu0 0
      %976 = vmatpush2.bf16.msra.mxu0 %v785
      %977 = vmatprep.mubr.bf16.mxu0 %v295
      %978 = vmatmul.mubr.bf16.gmra.mxu0 %v290
      %v979 = vpop.f32.mrf.mxu0
      %v980 = vadd.f32 %v940, %v979
      %v981 = vpop.f32.mrf.mxu0
      %v982 = vpop.f32.mrf.mxu0
      %v983 = vpop.f32.mrf.mxu0
      %984 = vdwg.mxu0
      %985 = vmatprep.subr.bf16.mxu0 0
      %986 = vmatpush1.bf16.msra.mxu0 %v800
      %987 = vmatprep.subr.bf16.mxu0 0
      %988 = vmatpush1.bf16.msra.mxu0 %v799
      %989 = vmatprep.subr.bf16.mxu0 0
      %990 = vmatpush1.bf16.msra.mxu0 %v798
      %991 = vmatprep.subr.bf16.mxu0 0
      %992 = vmatpush1.bf16.msra.mxu0 %v797
      %993 = vmatprep.subr.bf16.mxu0 0
      %994 = vmatpush1.bf16.msra.mxu0 %v796
      %995 = vmatprep.subr.bf16.mxu0 0
      %996 = vmatpush1.bf16.msra.mxu0 %v795
      %997 = vmatprep.subr.bf16.mxu0 0
      %998 = vmatpush1.bf16.msra.mxu0 %v794
      %999 = vmatprep.subr.bf16.mxu0 0
      %1000 = vmatpush1.bf16.msra.mxu0 %v793
      %1001 = vmatprep.subr.bf16.mxu0 0
      %1002 = vmatpush2.bf16.msra.mxu0 %v808
      %1003 = vmatprep.subr.bf16.mxu0 0
      %1004 = vmatpush2.bf16.msra.mxu0 %v807
      %1005 = vmatprep.subr.bf16.mxu0 0
      %1006 = vmatpush2.bf16.msra.mxu0 %v806
      %1007 = vmatprep.subr.bf16.mxu0 0
      %1008 = vmatpush2.bf16.msra.mxu0 %v805
      %1009 = vmatprep.subr.bf16.mxu0 0
      %1010 = vmatpush2.bf16.msra.mxu0 %v804
      %1011 = vmatprep.subr.bf16.mxu0 0
      %1012 = vmatpush2.bf16.msra.mxu0 %v803
      %1013 = vmatprep.subr.bf16.mxu0 0
      %1014 = vmatpush2.bf16.msra.mxu0 %v802
      %1015 = vmatprep.subr.bf16.mxu0 0
      %1016 = vmatpush2.bf16.msra.mxu0 %v801
      %1017 = vmatprep.mubr.bf16.mxu0 %v305
      %1018 = vmatmul.mubr.bf16.gmra.mxu0 %v296
      %v1019 = vpop.f32.mrf.mxu0
      %v1020 = vadd.f32 %v980, %v1019
      %v1021 = vpop.f32.mrf.mxu0
      %v1022 = vpop.f32.mrf.mxu0
      %v1023 = vpop.f32.mrf.mxu0
      %1024 = vdwg.mxu0
      %1025 = vmatprep.subr.bf16.mxu0 0
      %1026 = vmatpush1.bf16.msra.mxu0 %v816
      %1027 = vmatprep.subr.bf16.mxu0 0
      %1028 = vmatpush1.bf16.msra.mxu0 %v815
      %1029 = vmatprep.subr.bf16.mxu0 0
      %1030 = vmatpush1.bf16.msra.mxu0 %v814
      %1031 = vmatprep.subr.bf16.mxu0 0
      %1032 = vmatpush1.bf16.msra.mxu0 %v813
      %1033 = vmatprep.subr.bf16.mxu0 0
      %1034 = vmatpush1.bf16.msra.mxu0 %v812
      %1035 = vmatprep.subr.bf16.mxu0 0
      %1036 = vmatpush1.bf16.msra.mxu0 %v811
      %1037 = vmatprep.subr.bf16.mxu0 0
      %1038 = vmatpush1.bf16.msra.mxu0 %v810
      %1039 = vmatprep.subr.bf16.mxu0 0
      %1040 = vmatpush1.bf16.msra.mxu0 %v809
      %1041 = vmatprep.subr.bf16.mxu0 0
      %1042 = vmatpush2.bf16.msra.mxu0 %v824
      %1043 = vmatprep.subr.bf16.mxu0 0
      %1044 = vmatpush2.bf16.msra.mxu0 %v823
      %1045 = vmatprep.subr.bf16.mxu0 0
      %1046 = vmatpush2.bf16.msra.mxu0 %v822
      %1047 = vmatprep.subr.bf16.mxu0 0
      %1048 = vmatpush2.bf16.msra.mxu0 %v821
      %1049 = vmatprep.subr.bf16.mxu0 0
      %1050 = vmatpush2.bf16.msra.mxu0 %v820
      %1051 = vmatprep.subr.bf16.mxu0 0
      %1052 = vmatpush2.bf16.msra.mxu0 %v819
      %1053 = vmatprep.subr.bf16.mxu0 0
      %1054 = vmatpush2.bf16.msra.mxu0 %v818
      %1055 = vmatprep.subr.bf16.mxu0 0
      %1056 = vmatpush2.bf16.msra.mxu0 %v817
      %1057 = vmatprep.mubr.bf16.mxu0 %v311
      %1058 = vmatmul.mubr.bf16.gmra.mxu0 %v310
      %v1059 = vpop.f32.mrf.mxu0
      %v1060 = vadd.f32 %v1020, %v1059
      %v1061 = vpop.f32.mrf.mxu0
      %v1062 = vpop.f32.mrf.mxu0
      %v1063 = vpop.f32.mrf.mxu0
      %1064 = vdwg.mxu0
      %1065 = vmatprep.subr.bf16.mxu0 0
      %1066 = vmatpush1.bf16.msra.mxu0 %v832
      %1067 = vmatprep.subr.bf16.mxu0 0
      %1068 = vmatpush1.bf16.msra.mxu0 %v831
      %1069 = vmatprep.subr.bf16.mxu0 0
      %1070 = vmatpush1.bf16.msra.mxu0 %v830
      %1071 = vmatprep.subr.bf16.mxu0 0
      %1072 = vmatpush1.bf16.msra.mxu0 %v829
      %1073 = vmatprep.subr.bf16.mxu0 0
      %1074 = vmatpush1.bf16.msra.mxu0 %v828
      %1075 = vmatprep.subr.bf16.mxu0 0
      %1076 = vmatpush1.bf16.msra.mxu0 %v827
      %1077 = vmatprep.subr.bf16.mxu0 0
      %1078 = vmatpush1.bf16.msra.mxu0 %v826
      %1079 = vmatprep.subr.bf16.mxu0 0
      %1080 = vmatpush1.bf16.msra.mxu0 %v825
      %1081 = vmatprep.subr.bf16.mxu0 0
      %1082 = vmatpush2.bf16.msra.mxu0 0
      %1083 = vmatprep.subr.bf16.mxu0 0
      %1084 = vmatpush2.bf16.msra.mxu0 0
      %1085 = vmatprep.subr.bf16.mxu0 0
      %1086 = vmatpush2.bf16.msra.mxu0 0
      %1087 = vmatprep.subr.bf16.mxu0 0
      %1088 = vmatpush2.bf16.msra.mxu0 0
      %1089 = vmatprep.subr.bf16.mxu0 0
      %1090 = vmatpush2.bf16.msra.mxu0 0
      %1091 = vmatprep.subr.bf16.mxu0 0
      %1092 = vmatpush2.bf16.msra.mxu0 0
      %1093 = vmatprep.subr.bf16.mxu0 0
      %1094 = vmatpush2.bf16.msra.mxu0 0
      %1095 = vmatprep.subr.bf16.mxu0 0
      %1096 = vmatpush2.bf16.msra.mxu0 0
      %1097 = vmatprep.mubr.bf16.mxu0 0
      %1098 = vmatmul.mubr.bf16.gmra.mxu0 %v320
      %v1099 = vpop.f32.mrf.mxu0
      %v1100 = vadd.f32 %v1060, %v1099
      %v1101 = vpop.f32.mrf.mxu0
      %v1102 = vpop.f32.mrf.mxu0
      %v1103 = vpop.f32.mrf.mxu0
      %1104 = vdwg.mxu0
      %v1105 = vmax.f32 %v1100, 0.0
      %v1106 = vpack.c.bf16 %v1105, %v1105
      %1107 = vst [vmem:[%s272] sm:$0x3] %v1106
      %p1108 = scmp.lt.s32.totalorder %s19, 3
      %s1109 = scalar_select %p1108, %s19, 3
      %p1110 = scmp.lt.s32.totalorder %s20, 3
      %s1111 = scalar_select %p1110, %s20, 3
      %s1112 = smul.addr %s1109, 4
      %s1113 = sadd.s32 %s1111, %s1112
      %s1114 = smul.addr %s1113, 2
      %s1115 = scalar_lea.vmem %s4, %s1114
      // Predicated region
      $region37: #{_lambda_.5} parent=35 // pred_check
        %p1116 = pneg %p147
      $region38: #{_lambda_.5} parent=35 // pred_check_branch
        %1118 = sbr.rel (%p1116) target = $region40
      $region39: #{_lambda_.5} parent=35 // pred_region
        _
      $region40: #{_lambda_.5} parent=35 // pred_fallthru
        _
    $region36: #{_lambda_.5} parent=5 // pred_fallthru
      _
    %p1119 = scmp.le.s32.totalorder 2, %s10
    // Predicated region
    $region41: #{_lambda_.5} parent=5 // pred_check
      %p1120 = pneg %p1119
    $region42: #{_lambda_.5} parent=5 // pred_check_branch
      %1122 = sbr.rel (%p1120) target = $region44
    $region43: #{_lambda_.5} parent=5 // pred_region
      %s1123 = ssub.s32 %s10, 2
      // Predicated region
      $region45: #{_lambda_.5} parent=43 // pred_check
        %p1124 = pneg %p153
      $region46: #{_lambda_.5} parent=43 // pred_check_branch
        %1126 = sbr.rel (%p1124) target = $region48
      $region47: #{_lambda_.5} parent=43 // pred_region
        %p1127 = scmp.lt.s32.totalorder %s21, 3
        %s1128 = scalar_select %p1127, %s21, 3
        %p1129 = scmp.lt.s32.totalorder %s22, 3
        %s1130 = scalar_select %p1129, %s22, 3
        %s1131 = smul.addr %s1128, 4
        %s1132 = sadd.s32 %s1130, %s1131
        %s1133 = smul.addr %s1132, 2
        %s1134 = scalar_lea.vmem %s4, %s1133
      $region48: #{_lambda_.5} parent=43 // pred_fallthru
        _
    $region44: #{_lambda_.5} parent=5 // pred_fallthru
      _
  $region6: #{_lambda_.5} parent=0 // loop_footer
    %s14 = sadd.s32 1, %s10
  $region7: #{_lambda_.5} parent=0 // loop_footer_branch
    %9 = sbr.rel target = $region3
  $region8: #{_lambda_.5} parent=0 // loop_exit
    _

// kernel: _lambda_.7
$region0: #{_lambda_.7}
  #allocation0 [shape = 'u32[]', space=smem, size = 0x4, offset = 0x4, fixed_abs, tag = 'smem constant byte address 0x4 - core index']
  #allocation1 [shape = 'u32[144,128]{1,0:T(1,128)}', space=vmem, size = 0x12000, scoped, tag = 'internal scratch']
  #allocation2 [shape = 'bf16[8,128]{1,0:T(8,128)(2,1)}', space=vmem, size = 0x800, scoped, tag = 'scratch operand']
  #allocation3 [shape = 'f32[8,1]{1,0:T(8,128)}', space=vmem, size = 0x1000, scoped, tag = 'scratch operand']
  #allocation4 [shape = 'f32[8,1]{1,0:T(8,128)}', space=vmem, size = 0x1000, scoped, tag = 'scratch operand']
  #allocation5 [shape = 'f32[8,128]{1,0:T(8,128)}', space=vmem, size = 0x1000, scoped, tag = 'scratch operand']
  %s0 = inlined_call_operand.vmem [shape: f32[8,128], index: 0, kind: input, shape index: {}]
  %s1 = inlined_call_operand.vmem [shape: bf16[2,32,128], index: 1, kind: input, shape index: {}]
  %s2 = inlined_call_operand.vmem [shape: bf16[2,32,128], index: 2, kind: input, shape index: {}]
  %s3 = inlined_call_operand.vmem [shape: bf16[128,128], index: 3, kind: input, shape index: {}]
  %s4 = inlined_call_operand.vmem [shape: f32[1,128], index: 4, kind: input, shape index: {}]
  %s5 = inlined_call_operand.vmem [shape: bf16[128,128], index: 5, kind: input, shape index: {}]
  %s6 = inlined_call_operand.vmem [shape: f32[1,128], index: 6, kind: input, shape index: {}]
  %s7 = inlined_call_operand.vmem [shape: bf16[128,256], index: 7, kind: input, shape index: {}]
  %s8 = inlined_call_operand.vmem [shape: f32[1,256], index: 8, kind: input, shape index: {}]
  %s9 = inlined_call_operand.vmem [shape: bf16[256,128], index: 9, kind: input, shape index: {}]
  %s10 = inlined_call_operand.vmem [shape: f32[1,128], index: 10, kind: input, shape index: {}]
  %s11 = inlined_call_operand.vmem [shape: bf16[128,128], index: 11, kind: input, shape index: {}]
  %s12 = inlined_call_operand.vmem [shape: f32[1,128], index: 12, kind: input, shape index: {}]
  %s13 = inlined_call_operand.vmem [shape: f32[2,8,128], index: 13, kind: output, shape index: {}]
  %s14 = sld [smem:[#allocation0]]
  $region93: #{_lambda_.7} parent=0
    _
  %s16 = ssub.s32 1, %s14
  %s17 = scalar_select 0, %s16, %s14
  loop: start=0, step=1, limit=4
  $region2: #{_lambda_.7} parent=0 // loop_pre_header
    _
  $region3: #{_lambda_.7} parent=0 // loop_header
    %s19 = sphi 0, %s23
    %p20 = scmp.ge.s32.totalorder %s19, 4
    %s26 = sphi 0, %s45
    %s27 = sphi 0, %s41
    %s28 = sphi 0, %s37
    %s29 = sphi 0, %s26
    %s30 = sphi 0, %s27
    %s31 = sphi 0, %s28
    %s32 = sphi 0, %s29
    %s33 = sphi 0, %s30
    %s34 = sphi 0, %s31
    %s48 = sphi 0, %s50
    %s51 = sphi 0, %s48
    %s52 = sphi 0, %s51
    %s68 = sphi 0, %s52
    %s76 = sphi 0, %s78
    %s79 = sphi 0, %s76
    %s80 = sphi 0, %s79
    %s96 = sphi 0, %s80
    %s104 = sphi 0, %s106
    %s107 = sphi 0, %s104
    %s108 = sphi 0, %s107
    %s124 = sphi 0, %s108
    %s128 = sphi 0, %s128
    %s130 = sphi 0, %s128
    %s131 = sphi 0, %s130
    %s145 = sphi 0, %s131
    %s149 = sphi 0, %s149
    %s151 = sphi 0, %s149
    %s152 = sphi 0, %s151
    %s166 = sphi 0, %s152
    %s170 = sphi 0, %s170
    %s172 = sphi 0, %s170
    %s173 = sphi 0, %s172
    %s187 = sphi 0, %s173
    %s191 = sphi 0, %s191
    %s193 = sphi 0, %s191
    %s194 = sphi 0, %s193
    %s208 = sphi 0, %s194
    %s212 = sphi 0, %s212
    %s214 = sphi 0, %s212
    %s215 = sphi 0, %s214
    %s229 = sphi 0, %s215
    %s233 = sphi 0, %s233
    %s235 = sphi 0, %s233
    %s236 = sphi 0, %s235
    %s250 = sphi 0, %s236
    %s254 = sphi 0, %s254
    %s256 = sphi 0, %s254
    %s257 = sphi 0, %s256
    %s271 = sphi 0, %s257
    %s275 = sphi 0, %s275
    %s277 = sphi 0, %s275
    %s278 = sphi 0, %s277
    %s292 = sphi 0, %s278
    %s296 = sphi 0, %s296
    %s298 = sphi 0, %s296
    %s299 = sphi 0, %s298
    %s313 = sphi 0, %s299
    %s317 = sphi 0, %s317
    %s319 = sphi 0, %s317
    %s320 = sphi 0, %s319
    %s334 = sphi 0, %s320
    %s342 = sphi 0, %s344
    %s345 = sphi 0, %s342
    %s346 = sphi 0, %s345
    %s362 = sphi 0, %s346
  $region4: #{_lambda_.7} parent=0 // loop_header_branch
    %22 = sbr.rel (%p20) target = $region8
  $region5: #{_lambda_.7} parent=0 // loop_body
    %s24 = ssub.s32 %s19, 1
    %s25 = ssub.s32 %s19, 2
    %s35 = sadd.s32 1, %s28
    %p36 = scmp.ge.s32.totalorder %s35, 1
    %s37 = scalar_select %p36, 0, %s35
    %s38 = sadd.s32 1, %s27
    %s39 = scalar_select %p36, %s38, %s27
    %p40 = scmp.ge.s32.totalorder %s39, 1
    %s41 = scalar_select %p40, 0, %s39
    %s42 = sadd.s32 1, %s26
    %s43 = scalar_select %p40, %s42, %s26
    %p44 = scmp.ge.s32.totalorder %s43, 2
    %s45 = scalar_select %p44, 0, %s43
    %s46 = ssub.s32 %s27, %s41
    %p47 = scmp.eq.s32.totalorder %s46, 0
    %s49 = sadd.s32 %s48, 1
    %s50 = scalar_select %p47, %s48, %s49
    %p53 = pneg %p47
    %p54 = scmp.eq.s32.totalorder %s19, 1
    %p55 = por %p53, %p54
    %p56 = scmp.ne.s32.totalorder %s48, %s51
    %p57 = scmp.eq.s32.totalorder %s19, 0
    %p58 = por %p56, %p57
    %p59 = scmp.ne.s32.totalorder %s48, %s51
    %p60 = scmp.eq.s32.totalorder %s24, 1
    %p61 = por %p59, %p60
    %p62 = scmp.ne.s32.totalorder %s51, %s52
    %p63 = scmp.eq.s32.totalorder %s24, 0
    %p64 = por %p62, %p63
    %p65 = scmp.ne.s32.totalorder %s51, %s52
    %p66 = scmp.eq.s32.totalorder %s25, 1
    %p67 = por %p65, %p66
    %p69 = scmp.ne.s32.totalorder %s52, %s68
    %p70 = scmp.eq.s32.totalorder %s25, 0
    %p71 = por %p69, %p70
    %s72 = ssub.s32 %s26, %s45
    %s73 = ssub.s32 %s28, %s37
    %s74 = sor.u32 %s72, %s73
    %p75 = scmp.eq.s32.totalorder %s74, 0
    %s77 = sadd.s32 %s76, 1
    %s78 = scalar_select %p75, %s76, %s77
    %p81 = pneg %p75
    %p82 = scmp.eq.s32.totalorder %s19, 1
    %p83 = por %p81, %p82
    %p84 = scmp.ne.s32.totalorder %s76, %s79
    %p85 = scmp.eq.s32.totalorder %s19, 0
    %p86 = por %p84, %p85
    %p87 = scmp.ne.s32.totalorder %s76, %s79
    %p88 = scmp.eq.s32.totalorder %s24, 1
    %p89 = por %p87, %p88
    %p90 = scmp.ne.s32.totalorder %s79, %s80
    %p91 = scmp.eq.s32.totalorder %s24, 0
    %p92 = por %p90, %p91
    %p93 = scmp.ne.s32.totalorder %s79, %s80
    %p94 = scmp.eq.s32.totalorder %s25, 1
    %p95 = por %p93, %p94
    %p97 = scmp.ne.s32.totalorder %s80, %s96
    %p98 = scmp.eq.s32.totalorder %s25, 0
    %p99 = por %p97, %p98
    %s100 = ssub.s32 %s26, %s45
    %s101 = ssub.s32 %s28, %s37
    %s102 = sor.u32 %s100, %s101
    %p103 = scmp.eq.s32.totalorder %s102, 0
    %s105 = sadd.s32 %s104, 1
    %s106 = scalar_select %p103, %s104, %s105
    %p109 = pneg %p103
    %p110 = scmp.eq.s32.totalorder %s19, 1
    %p111 = por %p109, %p110
    %p112 = scmp.ne.s32.totalorder %s104, %s107
    %p113 = scmp.eq.s32.totalorder %s19, 0
    %p114 = por %p112, %p113
    %p115 = scmp.ne.s32.totalorder %s104, %s107
    %p116 = scmp.eq.s32.totalorder %s24, 1
    %p117 = por %p115, %p116
    %p118 = scmp.ne.s32.totalorder %s107, %s108
    %p119 = scmp.eq.s32.totalorder %s24, 0
    %p120 = por %p118, %p119
    %p121 = scmp.ne.s32.totalorder %s107, %s108
    %p122 = scmp.eq.s32.totalorder %s25, 1
    %p123 = por %p121, %p122
    %p125 = scmp.ne.s32.totalorder %s108, %s124
    %p126 = scmp.eq.s32.totalorder %s25, 0
    %p127 = por %p125, %p126
    %s129 = sadd.s32 %s128, 1
    %p132 = scmp.eq.s32.totalorder %s19, 1
    %p133 = scmp.ne.s32.totalorder %s128, %s130
    %p134 = scmp.eq.s32.totalorder %s19, 0
    %p135 = por %p133, %p134
    %p136 = scmp.ne.s32.totalorder %s128, %s130
    %p137 = scmp.eq.s32.totalorder %s24, 1
    %p138 = por %p136, %p137
    %p139 = scmp.ne.s32.totalorder %s130, %s131
    %p140 = scmp.eq.s32.totalorder %s24, 0
    %p141 = por %p139, %p140
    %p142 = scmp.ne.s32.totalorder %s130, %s131
    %p143 = scmp.eq.s32.totalorder %s25, 1
    %p144 = por %p142, %p143
    %p146 = scmp.ne.s32.totalorder %s131, %s145
    %p147 = scmp.eq.s32.totalorder %s25, 0
    %p148 = por %p146, %p147
    %s150 = sadd.s32 %s149, 1
    %p153 = scmp.eq.s32.totalorder %s19, 1
    %p154 = scmp.ne.s32.totalorder %s149, %s151
    %p155 = scmp.eq.s32.totalorder %s19, 0
    %p156 = por %p154, %p155
    %p157 = scmp.ne.s32.totalorder %s149, %s151
    %p158 = scmp.eq.s32.totalorder %s24, 1
    %p159 = por %p157, %p158
    %p160 = scmp.ne.s32.totalorder %s151, %s152
    %p161 = scmp.eq.s32.totalorder %s24, 0
    %p162 = por %p160, %p161
    %p163 = scmp.ne.s32.totalorder %s151, %s152
    %p164 = scmp.eq.s32.totalorder %s25, 1
    %p165 = por %p163, %p164
    %p167 = scmp.ne.s32.totalorder %s152, %s166
    %p168 = scmp.eq.s32.totalorder %s25, 0
    %p169 = por %p167, %p168
    %s171 = sadd.s32 %s170, 1
    %p174 = scmp.eq.s32.totalorder %s19, 1
    %p175 = scmp.ne.s32.totalorder %s170, %s172
    %p176 = scmp.eq.s32.totalorder %s19, 0
    %p177 = por %p175, %p176
    %p178 = scmp.ne.s32.totalorder %s170, %s172
    %p179 = scmp.eq.s32.totalorder %s24, 1
    %p180 = por %p178, %p179
    %p181 = scmp.ne.s32.totalorder %s172, %s173
    %p182 = scmp.eq.s32.totalorder %s24, 0
    %p183 = por %p181, %p182
    %p184 = scmp.ne.s32.totalorder %s172, %s173
    %p185 = scmp.eq.s32.totalorder %s25, 1
    %p186 = por %p184, %p185
    %p188 = scmp.ne.s32.totalorder %s173, %s187
    %p189 = scmp.eq.s32.totalorder %s25, 0
    %p190 = por %p188, %p189
    %s192 = sadd.s32 %s191, 1
    %p195 = scmp.eq.s32.totalorder %s19, 1
    %p196 = scmp.ne.s32.totalorder %s191, %s193
    %p197 = scmp.eq.s32.totalorder %s19, 0
    %p198 = por %p196, %p197
    %p199 = scmp.ne.s32.totalorder %s191, %s193
    %p200 = scmp.eq.s32.totalorder %s24, 1
    %p201 = por %p199, %p200
    %p202 = scmp.ne.s32.totalorder %s193, %s194
    %p203 = scmp.eq.s32.totalorder %s24, 0
    %p204 = por %p202, %p203
    %p205 = scmp.ne.s32.totalorder %s193, %s194
    %p206 = scmp.eq.s32.totalorder %s25, 1
    %p207 = por %p205, %p206
    %p209 = scmp.ne.s32.totalorder %s194, %s208
    %p210 = scmp.eq.s32.totalorder %s25, 0
    %p211 = por %p209, %p210
    %s213 = sadd.s32 %s212, 1
    %p216 = scmp.eq.s32.totalorder %s19, 1
    %p217 = scmp.ne.s32.totalorder %s212, %s214
    %p218 = scmp.eq.s32.totalorder %s19, 0
    %p219 = por %p217, %p218
    %p220 = scmp.ne.s32.totalorder %s212, %s214
    %p221 = scmp.eq.s32.totalorder %s24, 1
    %p222 = por %p220, %p221
    %p223 = scmp.ne.s32.totalorder %s214, %s215
    %p224 = scmp.eq.s32.totalorder %s24, 0
    %p225 = por %p223, %p224
    %p226 = scmp.ne.s32.totalorder %s214, %s215
    %p227 = scmp.eq.s32.totalorder %s25, 1
    %p228 = por %p226, %p227
    %p230 = scmp.ne.s32.totalorder %s215, %s229
    %p231 = scmp.eq.s32.totalorder %s25, 0
    %p232 = por %p230, %p231
    %s234 = sadd.s32 %s233, 1
    %p237 = scmp.eq.s32.totalorder %s19, 1
    %p238 = scmp.ne.s32.totalorder %s233, %s235
    %p239 = scmp.eq.s32.totalorder %s19, 0
    %p240 = por %p238, %p239
    %p241 = scmp.ne.s32.totalorder %s233, %s235
    %p242 = scmp.eq.s32.totalorder %s24, 1
    %p243 = por %p241, %p242
    %p244 = scmp.ne.s32.totalorder %s235, %s236
    %p245 = scmp.eq.s32.totalorder %s24, 0
    %p246 = por %p244, %p245
    %p247 = scmp.ne.s32.totalorder %s235, %s236
    %p248 = scmp.eq.s32.totalorder %s25, 1
    %p249 = por %p247, %p248
    %p251 = scmp.ne.s32.totalorder %s236, %s250
    %p252 = scmp.eq.s32.totalorder %s25, 0
    %p253 = por %p251, %p252
    %s255 = sadd.s32 %s254, 1
    %p258 = scmp.eq.s32.totalorder %s19, 1
    %p259 = scmp.ne.s32.totalorder %s254, %s256
    %p260 = scmp.eq.s32.totalorder %s19, 0
    %p261 = por %p259, %p260
    %p262 = scmp.ne.s32.totalorder %s254, %s256
    %p263 = scmp.eq.s32.totalorder %s24, 1
    %p264 = por %p262, %p263
    %p265 = scmp.ne.s32.totalorder %s256, %s257
    %p266 = scmp.eq.s32.totalorder %s24, 0
    %p267 = por %p265, %p266
    %p268 = scmp.ne.s32.totalorder %s256, %s257
    %p269 = scmp.eq.s32.totalorder %s25, 1
    %p270 = por %p268, %p269
    %p272 = scmp.ne.s32.totalorder %s257, %s271
    %p273 = scmp.eq.s32.totalorder %s25, 0
    %p274 = por %p272, %p273
    %s276 = sadd.s32 %s275, 1
    %p279 = scmp.eq.s32.totalorder %s19, 1
    %p280 = scmp.ne.s32.totalorder %s275, %s277
    %p281 = scmp.eq.s32.totalorder %s19, 0
    %p282 = por %p280, %p281
    %p283 = scmp.ne.s32.totalorder %s275, %s277
    %p284 = scmp.eq.s32.totalorder %s24, 1
    %p285 = por %p283, %p284
    %p286 = scmp.ne.s32.totalorder %s277, %s278
    %p287 = scmp.eq.s32.totalorder %s24, 0
    %p288 = por %p286, %p287
    %p289 = scmp.ne.s32.totalorder %s277, %s278
    %p290 = scmp.eq.s32.totalorder %s25, 1
    %p291 = por %p289, %p290
    %p293 = scmp.ne.s32.totalorder %s278, %s292
    %p294 = scmp.eq.s32.totalorder %s25, 0
    %p295 = por %p293, %p294
    %s297 = sadd.s32 %s296, 1
    %p300 = scmp.eq.s32.totalorder %s19, 1
    %p301 = scmp.ne.s32.totalorder %s296, %s298
    %p302 = scmp.eq.s32.totalorder %s19, 0
    %p303 = por %p301, %p302
    %p304 = scmp.ne.s32.totalorder %s296, %s298
    %p305 = scmp.eq.s32.totalorder %s24, 1
    %p306 = por %p304, %p305
    %p307 = scmp.ne.s32.totalorder %s298, %s299
    %p308 = scmp.eq.s32.totalorder %s24, 0
    %p309 = por %p307, %p308
    %p310 = scmp.ne.s32.totalorder %s298, %s299
    %p311 = scmp.eq.s32.totalorder %s25, 1
    %p312 = por %p310, %p311
    %p314 = scmp.ne.s32.totalorder %s299, %s313
    %p315 = scmp.eq.s32.totalorder %s25, 0
    %p316 = por %p314, %p315
    %s318 = sadd.s32 %s317, 1
    %p321 = scmp.eq.s32.totalorder %s19, 1
    %p322 = scmp.ne.s32.totalorder %s317, %s319
    %p323 = scmp.eq.s32.totalorder %s19, 0
    %p324 = por %p322, %p323
    %p325 = scmp.ne.s32.totalorder %s317, %s319
    %p326 = scmp.eq.s32.totalorder %s24, 1
    %p327 = por %p325, %p326
    %p328 = scmp.ne.s32.totalorder %s319, %s320
    %p329 = scmp.eq.s32.totalorder %s24, 0
    %p330 = por %p328, %p329
    %p331 = scmp.ne.s32.totalorder %s319, %s320
    %p332 = scmp.eq.s32.totalorder %s25, 1
    %p333 = por %p331, %p332
    %p335 = scmp.ne.s32.totalorder %s320, %s334
    %p336 = scmp.eq.s32.totalorder %s25, 0
    %p337 = por %p335, %p336
    %s338 = ssub.s32 %s26, %s45
    %s339 = ssub.s32 %s27, %s41
    %s340 = sor.u32 %s338, %s339
    %p341 = scmp.eq.s32.totalorder %s340, 0
    %s343 = sadd.s32 %s342, 1
    %s344 = scalar_select %p341, %s342, %s343
    %p347 = pneg %p341
    %p348 = scmp.eq.s32.totalorder %s19, 1
    %p349 = por %p347, %p348
    %p350 = scmp.ne.s32.totalorder %s342, %s345
    %p351 = scmp.eq.s32.totalorder %s19, 0
    %p352 = por %p350, %p351
    %p353 = scmp.ne.s32.totalorder %s342, %s345
    %p354 = scmp.eq.s32.totalorder %s24, 1
    %p355 = por %p353, %p354
    %p356 = scmp.ne.s32.totalorder %s345, %s346
    %p357 = scmp.eq.s32.totalorder %s24, 0
    %p358 = por %p356, %p357
    %p359 = scmp.ne.s32.totalorder %s345, %s346
    %p360 = scmp.eq.s32.totalorder %s25, 1
    %p361 = por %p359, %p360
    %p363 = scmp.ne.s32.totalorder %s346, %s362
    %p364 = scmp.eq.s32.totalorder %s25, 0
    %p365 = por %p363, %p364
    %p366 = scmp.le.s32.totalorder 1, %s19
    %p367 = scmp.lt.s32.totalorder %s19, 3
    %p368 = pnand %p366, %p367
    %p369 = pneg %p368
    // Predicated region
    $region9: #{_lambda_.7} parent=5 // pred_check
      _
    $region10: #{_lambda_.7} parent=5 // pred_check_branch
      %371 = sbr.rel (%p368) target = $region12
    $region11: #{_lambda_.7} parent=5 // pred_region
      %s372 = ssub.s32 %s19, 1
      // Predicated region
      $region13: #{_lambda_.7} parent=11 // pred_check
        %p373 = pneg %p64
      $region14: #{_lambda_.7} parent=11 // pred_check_branch
        %375 = sbr.rel (%p373) target = $region16
      $region15: #{_lambda_.7} parent=11 // pred_region
        %p376 = scmp.lt.s32.totalorder %s30, 0
        %s377 = scalar_select %p376, %s30, 0
        %s378 = smul.addr %s377, 8
        %s379 = scalar_lea.vmem %s0, %s378
      $region16: #{_lambda_.7} parent=11 // pred_fallthru
        _
      // Predicated region
      $region17: #{_lambda_.7} parent=11 // pred_check
        %p380 = pneg %p141
      $region18: #{_lambda_.7} parent=11 // pred_check_branch
        %382 = sbr.rel (%p380) target = $region20
      $region19: #{_lambda_.7} parent=11 // pred_region
        _
      $region20: #{_lambda_.7} parent=11 // pred_fallthru
        _
      // Predicated region
      $region21: #{_lambda_.7} parent=11 // pred_check
        %p383 = pneg %p162
      $region22: #{_lambda_.7} parent=11 // pred_check_branch
        %385 = sbr.rel (%p383) target = $region24
      $region23: #{_lambda_.7} parent=11 // pred_region
        _
      $region24: #{_lambda_.7} parent=11 // pred_fallthru
        _
      // Predicated region
      $region25: #{_lambda_.7} parent=11 // pred_check
        %p386 = pneg %p183
      $region26: #{_lambda_.7} parent=11 // pred_check_branch
        %388 = sbr.rel (%p386) target = $region28
      $region27: #{_lambda_.7} parent=11 // pred_region
        _
      $region28: #{_lambda_.7} parent=11 // pred_fallthru
        _
      // Predicated region
      $region29: #{_lambda_.7} parent=11 // pred_check
        %p389 = pneg %p204
      $region30: #{_lambda_.7} parent=11 // pred_check_branch
        %391 = sbr.rel (%p389) target = $region32
      $region31: #{_lambda_.7} parent=11 // pred_region
        _
      $region32: #{_lambda_.7} parent=11 // pred_fallthru
        _
      // Predicated region
      $region33: #{_lambda_.7} parent=11 // pred_check
        %p392 = pneg %p225
      $region34: #{_lambda_.7} parent=11 // pred_check_branch
        %394 = sbr.rel (%p392) target = $region36
      $region35: #{_lambda_.7} parent=11 // pred_region
        _
      $region36: #{_lambda_.7} parent=11 // pred_fallthru
        _
      // Predicated region
      $region37: #{_lambda_.7} parent=11 // pred_check
        %p395 = pneg %p246
      $region38: #{_lambda_.7} parent=11 // pred_check_branch
        %397 = sbr.rel (%p395) target = $region40
      $region39: #{_lambda_.7} parent=11 // pred_region
        _
      $region40: #{_lambda_.7} parent=11 // pred_fallthru
        _
      // Predicated region
      $region41: #{_lambda_.7} parent=11 // pred_check
        %p398 = pneg %p267
      $region42: #{_lambda_.7} parent=11 // pred_check_branch
        %400 = sbr.rel (%p398) target = $region44
      $region43: #{_lambda_.7} parent=11 // pred_region
        _
      $region44: #{_lambda_.7} parent=11 // pred_fallthru
        _
      // Predicated region
      $region45: #{_lambda_.7} parent=11 // pred_check
        %p401 = pneg %p288
      $region46: #{_lambda_.7} parent=11 // pred_check_branch
        %403 = sbr.rel (%p401) target = $region48
      $region47: #{_lambda_.7} parent=11 // pred_region
        _
      $region48: #{_lambda_.7} parent=11 // pred_fallthru
        _
      // Predicated region
      $region49: #{_lambda_.7} parent=11 // pred_check
        %p404 = pneg %p309
      $region50: #{_lambda_.7} parent=11 // pred_check_branch
        %406 = sbr.rel (%p404) target = $region52
      $region51: #{_lambda_.7} parent=11 // pred_region
        _
      $region52: #{_lambda_.7} parent=11 // pred_fallthru
        _
      // Predicated region
      $region53: #{_lambda_.7} parent=11 // pred_check
        %p407 = pneg %p330
      $region54: #{_lambda_.7} parent=11 // pred_check_branch
        %409 = sbr.rel (%p407) target = $region56
      $region55: #{_lambda_.7} parent=11 // pred_region
        _
      $region56: #{_lambda_.7} parent=11 // pred_fallthru
        _
    $region12: #{_lambda_.7} parent=5 // pred_fallthru
      _
    %p410 = scmp.lt.s32.totalorder %s19, 2
    // Predicated region
    $region57: #{_lambda_.7} parent=5 // pred_check
      %p411 = pneg %p410
    $region58: #{_lambda_.7} parent=5 // pred_check_branch
      %413 = sbr.rel (%p411) target = $region60
    $region59: #{_lambda_.7} parent=5 // pred_region
      // Predicated region
      $region61: #{_lambda_.7} parent=59 // pred_check
        %p414 = pneg %p86
      $region62: #{_lambda_.7} parent=59 // pred_check_branch
        %416 = sbr.rel (%p414) target = $region64
      $region63: #{_lambda_.7} parent=59 // pred_region
        %s417 = smul.u32 4, %s28
        %p418 = scmp.lt.s32.totalorder %s26, 1
        %s419 = scalar_select %p418, %s26, 1
        %p420 = scmp.lt.s32.totalorder %s417, 3
        %s421 = scalar_select %p420, %s417, 3
        %s422 = smul.addr %s419, 4
        %s423 = sadd.s32 %s421, %s422
        %s424 = smul.addr %s423, 4
        %s425 = scalar_lea.vmem %s1, %s424
        %s426 = smul.u32 4, %s28
      $region64: #{_lambda_.7} parent=59 // pred_fallthru
        _
      // Predicated region
      $region65: #{_lambda_.7} parent=59 // pred_check
        %p427 = pneg %p114
      $region66: #{_lambda_.7} parent=59 // pred_check_branch
        %429 = sbr.rel (%p427) target = $region68
      $region67: #{_lambda_.7} parent=59 // pred_region
        %s430 = smul.u32 4, %s28
        %p431 = scmp.lt.s32.totalorder %s26, 1
        %s432 = scalar_select %p431, %s26, 1
        %p433 = scmp.lt.s32.totalorder %s430, 3
        %s434 = scalar_select %p433, %s430, 3
        %s435 = smul.addr %s432, 4
        %s436 = sadd.s32 %s434, %s435
        %s437 = smul.addr %s436, 4
        %s438 = scalar_lea.vmem %s2, %s437
        %s439 = smul.u32 4, %s28
      $region68: #{_lambda_.7} parent=59 // pred_fallthru
        _
    $region60: #{_lambda_.7} parent=5 // pred_fallthru
      _
    %p440 = scmp.le.s32.totalorder 1, %s19
    %p441 = scmp.lt.s32.totalorder %s19, 3
    %p442 = pnand %p440, %p441
    %p443 = pneg %p442
    // Predicated region
    $region69: #{_lambda_.7} parent=5 // pred_check
      _
    $region70: #{_lambda_.7} parent=5 // pred_check_branch
      %445 = sbr.rel (%p442) target = $region72
    $region71: #{_lambda_.7} parent=5 // pred_region
      %s446 = ssub.s32 %s19, 1
      %p447 = scmp.lt.s32.totalorder %s30, 0
      %s448 = scalar_select %p447, %s30, 0
      %s449 = smul.addr %s448, 8
      %s450 = scalar_lea.vmem %s0, %s449
      %p451 = pneg %p64
      %p452 = pneg %p61
      %s453 = smul.u32 4, %s31
      %p454 = scmp.lt.s32.totalorder %s29, 1
      %s455 = scalar_select %p454, %s29, 1
      %p456 = scmp.lt.s32.totalorder %s453, 3
      %s457 = scalar_select %p456, %s453, 3
      %s458 = smul.addr %s455, 4
      %s459 = sadd.s32 %s457, %s458
      %s460 = smul.addr %s459, 4
      %s461 = scalar_lea.vmem %s1, %s460
      %p462 = pneg %p92
      %p463 = pneg %p89
      %s464 = smul.u32 4, %s31
      %p465 = scmp.lt.s32.totalorder %s29, 1
      %s466 = scalar_select %p465, %s29, 1
      %p467 = scmp.lt.s32.totalorder %s464, 3
      %s468 = scalar_select %p467, %s464, 3
      %s469 = smul.addr %s466, 4
      %s470 = sadd.s32 %s468, %s469
      %s471 = smul.addr %s470, 4
      %s472 = scalar_lea.vmem %s2, %s471
      %p473 = pneg %p120
      %p474 = pneg %p117
      %p475 = pneg %p141
      %p476 = pneg %p138
      %p477 = pneg %p162
      %p478 = pneg %p159
      %p479 = pneg %p183
      %p480 = pneg %p180
      %p481 = pneg %p204
      %p482 = pneg %p201
      %p483 = pneg %p225
      %p484 = pneg %p222
      %p485 = pneg %p246
      %p486 = pneg %p243
      %p487 = pneg %p267
      %p488 = pneg %p264
      %p489 = pneg %p288
      %p490 = pneg %p285
      %p491 = pneg %p309
      %p492 = pneg %p306
      %p493 = pneg %p330
      %p494 = pneg %p327
      %p495 = pneg %p358
      %p496 = pneg %p355
      %p497 = scmp.lt.s32.totalorder %s29, 1
      %s498 = scalar_select %p497, %s29, 1
      %p499 = scmp.lt.s32.totalorder %s30, 0
      %s500 = scalar_select %p499, %s30, 0
      %s501 = sadd.s32 %s500, %s498
      %s502 = smul.addr %s501, 8
      %s503 = scalar_lea.vmem %s13, %s502
      %p504 = scmp.lt.s32.totalorder %s30, 0
      %s505 = scalar_select %p504, %s30, 0
      %s506 = smul.addr %s505, 8
      %s507 = scalar_lea.vmem %s0, %s506
      %s508 = smul.u32 4, %s31
      %p509 = scmp.lt.s32.totalorder %s29, 1
      %s510 = scalar_select %p509, %s29, 1
      %p511 = scmp.lt.s32.totalorder %s508, 3
      %s512 = scalar_select %p511, %s508, 3
      %s513 = smul.addr %s510, 4
      %s514 = sadd.s32 %s512, %s513
      %s515 = smul.addr %s514, 4
      %s516 = scalar_lea.vmem %s1, %s515
      %s517 = smul.u32 4, %s31
      %s518 = smul.u32 4, %s31
      %p519 = scmp.lt.s32.totalorder %s29, 1
      %s520 = scalar_select %p519, %s29, 1
      %p521 = scmp.lt.s32.totalorder %s518, 3
      %s522 = scalar_select %p521, %s518, 3
      %s523 = smul.addr %s520, 4
      %s524 = sadd.s32 %s522, %s523
      %s525 = smul.addr %s524, 4
      %s526 = scalar_lea.vmem %s2, %s525
      %s527 = smul.u32 4, %s31
      %p528 = scmp.lt.s32.totalorder %s29, 1
      %s529 = scalar_select %p528, %s29, 1
      %p530 = scmp.lt.s32.totalorder %s30, 0
      %s531 = scalar_select %p530, %s30, 0
      %s532 = sadd.s32 %s531, %s529
      %s533 = smul.addr %s532, 8
      %s534 = scalar_lea.vmem %s13, %s533
      %p536 = scmp.eq.s32.totalorder %s31, 0
      // Predicated region
      $region73: #{_lambda_.7} parent=71 // pred_check
        %p537 = pneg %p536
      $region74: #{_lambda_.7} parent=71 // pred_check_branch
        %539 = sbr.rel (%p537) target = $region76
      $region75: #{_lambda_.7} parent=71 // pred_region
        %v540 = vld [vmem:[%s507] sm:$0xff]
        %v541 = vpack.c.bf16 %v540, %v540
        %v542 = vld [vmem:[%s3] sm:$0xf]
        %v543 = vld [vmem:[%s3 + $0x4] sm:$0xf]
        %v544 = vld [vmem:[%s3 + $0x8] sm:$0xf]
        %v545 = vld [vmem:[%s3 + $0xc] sm:$0xf]
        %v546 = vld [vmem:[%s3 + $0x10] sm:$0xf]
        %v547 = vld [vmem:[%s3 + $0x14] sm:$0xf]
        %v548 = vld [vmem:[%s3 + $0x18] sm:$0xf]
        %v549 = vld [vmem:[%s3 + $0x1c] sm:$0xf]
        %v550 = vld [vmem:[%s3 + $0x20] sm:$0xf]
        %v551 = vld [vmem:[%s3 + $0x24] sm:$0xf]
        %v552 = vld [vmem:[%s3 + $0x28] sm:$0xf]
        %v553 = vld [vmem:[%s3 + $0x2c] sm:$0xf]
        %v554 = vld [vmem:[%s3 + $0x30] sm:$0xf]
        %v555 = vld [vmem:[%s3 + $0x34] sm:$0xf]
        %v556 = vld [vmem:[%s3 + $0x38] sm:$0xf]
        %v557 = vld [vmem:[%s3 + $0x3c] sm:$0xf]
        %v558 = vld [vmem:[%s4] sm:$0x1]
        %v560 = vlaneseq
        %v561 = vshrl.u32 %v560, 7
        %v562 = vsub.s32 0, %v561
        %v563 = vrot.slane %v558, %v562
        %v581 = vunpack.c.l.b16 %v542
        %v582 = vunpack.c.l.b16 %v543
        %v583 = vunpack.c.l.b16 %v544
        %v584 = vunpack.c.l.b16 %v545
        %v585 = vunpack.c.l.b16 %v546
        %v586 = vunpack.c.l.b16 %v547
        %v587 = vunpack.c.l.b16 %v548
        %v588 = vunpack.c.l.b16 %v549
        %v589 = vunpack.c.l.b16 %v550
        %v590 = vunpack.c.l.b16 %v551
        %v591 = vunpack.c.l.b16 %v552
        %v592 = vunpack.c.l.b16 %v553
        %v593 = vunpack.c.l.b16 %v554
        %v594 = vunpack.c.l.b16 %v555
        %v595 = vunpack.c.l.b16 %v556
        %v596 = vunpack.c.l.b16 %v557
        %v597 = vpack.c.b16 %v582, %v581
        %v598 = vpack.c.b16 %v584, %v583
        %v599 = vpack.c.b16 %v586, %v585
        %v600 = vpack.c.b16 %v588, %v587
        %v601 = vpack.c.b16 %v590, %v589
        %v602 = vpack.c.b16 %v592, %v591
        %v603 = vpack.c.b16 %v594, %v593
        %v604 = vpack.c.b16 %v596, %v595
        %613 = vmatprep.subr.bf16.mxu0 0
        %614 = vmatpush1.bf16.msra.mxu0 %v604
        %615 = vmatprep.subr.bf16.mxu0 0
        %616 = vmatpush1.bf16.msra.mxu0 %v603
        %617 = vmatprep.subr.bf16.mxu0 0
        %618 = vmatpush1.bf16.msra.mxu0 %v602
        %619 = vmatprep.subr.bf16.mxu0 0
        %620 = vmatpush1.bf16.msra.mxu0 %v601
        %621 = vmatprep.subr.bf16.mxu0 0
        %622 = vmatpush1.bf16.msra.mxu0 %v600
        %623 = vmatprep.subr.bf16.mxu0 0
        %624 = vmatpush1.bf16.msra.mxu0 %v599
        %625 = vmatprep.subr.bf16.mxu0 0
        %626 = vmatpush1.bf16.msra.mxu0 %v598
        %627 = vmatprep.subr.bf16.mxu0 0
        %628 = vmatpush1.bf16.msra.mxu0 %v597
        %629 = vmatprep.subr.bf16.mxu0 0
        %630 = vmatpush2.bf16.msra.mxu0 0
        %631 = vmatprep.subr.bf16.mxu0 0
        %632 = vmatpush2.bf16.msra.mxu0 0
        %633 = vmatprep.subr.bf16.mxu0 0
        %634 = vmatpush2.bf16.msra.mxu0 0
        %635 = vmatprep.subr.bf16.mxu0 0
        %636 = vmatpush2.bf16.msra.mxu0 0
        %637 = vmatprep.subr.bf16.mxu0 0
        %638 = vmatpush2.bf16.msra.mxu0 0
        %639 = vmatprep.subr.bf16.mxu0 0
        %640 = vmatpush2.bf16.msra.mxu0 0
        %641 = vmatprep.subr.bf16.mxu0 0
        %642 = vmatpush2.bf16.msra.mxu0 0
        %643 = vmatprep.subr.bf16.mxu0 0
        %644 = vmatpush2.bf16.msra.mxu0 0
        %645 = vmatprep.mubr.bf16.mxu0 0
        %646 = vmatmul.mubr.bf16.gmra.mxu0 %v541
        %v647 = vpop.f32.mrf.mxu0
        %v648 = vadd.f32 %v563, %v647
        %v649 = vpop.f32.mrf.mxu0
        %v650 = vpop.f32.mrf.mxu0
        %v651 = vpop.f32.mrf.mxu0
        %652 = vdwg.mxu0
        %v653 = vpack.c.bf16 %v648, %v648
        %654 = vst [vmem:[#allocation2] sm:$0xf] %v653
        %vm655 = vcmask 7168
        %656 = vst.msk [vmem:[#allocation3] sm:$0xff] %vm655, -inf
        %657 = vst.msk [vmem:[#allocation4] sm:$0xff] %vm655, 0.0
        %658 = vst [vmem:[#allocation5] sm:$0xff] 0.0
      $region76: #{_lambda_.7} parent=71 // pred_fallthru
        _
      %v659 = vld [vmem:[%s516] sm:$0xf]
      %v660 = vld [vmem:[%s516 + $0x4] sm:$0xf]
      %v661 = vld [vmem:[%s516 + $0x8] sm:$0xf]
      %v662 = vld [vmem:[%s516 + $0xc] sm:$0xf]
      %v663 = vld [vmem:[%s526] sm:$0xf]
      %v664 = vld [vmem:[%s526 + $0x4] sm:$0xf]
      %v665 = vld [vmem:[%s526 + $0x8] sm:$0xf]
      %v666 = vld [vmem:[%s526 + $0xc] sm:$0xf]
      %v667 = vld [vmem:[#allocation2] sm:$0xf]
      %v672 = vunpack.c.l.b16 %v659
      %v673 = vunpack.c.l.b16 %v660
      %v674 = vunpack.c.l.b16 %v661
      %v675 = vunpack.c.l.b16 %v662
      %v676 = vpack.c.b16 %v673, %v672
      %v677 = vpack.c.b16 %v675, %v674
      %680 = vmatprep.subr.bf16.mxu0 0
      %681 = vmatpush1.bf16.xpose.msra.mxu0 0
      %682 = vmatprep.subr.bf16.mxu0 0
      %683 = vmatpush1.bf16.xpose.msra.mxu0 0
      %684 = vmatprep.subr.bf16.mxu0 0
      %685 = vmatpush1.bf16.xpose.msra.mxu0 0
      %686 = vmatprep.subr.bf16.mxu0 0
      %687 = vmatpush1.bf16.xpose.msra.mxu0 0
      %688 = vmatprep.subr.bf16.mxu0 0
      %689 = vmatpush1.bf16.xpose.msra.mxu0 0
      %690 = vmatprep.subr.bf16.mxu0 0
      %691 = vmatpush1.bf16.xpose.msra.mxu0 0
      %692 = vmatprep.subr.bf16.mxu0 0
      %693 = vmatpush1.bf16.xpose.msra.mxu0 %v677
      %694 = vmatprep.subr.bf16.mxu0 0
      %695 = vmatpush1.bf16.xpose.msra.mxu0 %v676
      %696 = vmatprep.subr.bf16.mxu0 0
      %697 = vmatpush2.bf16.xpose.msra.mxu0 0
      %698 = vmatprep.subr.bf16.mxu0 0
      %699 = vmatpush2.bf16.xpose.msra.mxu0 0
      %700 = vmatprep.subr.bf16.mxu0 0
      %701 = vmatpush2.bf16.xpose.msra.mxu0 0
      %702 = vmatprep.subr.bf16.mxu0 0
      %703 = vmatpush2.bf16.xpose.msra.mxu0 0
      %704 = vmatprep.subr.bf16.mxu0 0
      %705 = vmatpush2.bf16.xpose.msra.mxu0 0
      %706 = vmatprep.subr.bf16.mxu0 0
      %707 = vmatpush2.bf16.xpose.msra.mxu0 0
      %708 = vmatprep.subr.bf16.mxu0 0
      %709 = vmatpush2.bf16.xpose.msra.mxu0 0
      %710 = vmatprep.subr.bf16.mxu0 0
      %711 = vmatpush2.bf16.xpose.msra.mxu0 0
      %712 = vmatprep.mubr.bf16.mxu0 0
      %713 = vmatmul.mubr.bf16.gmra.mxu0 %v667
      %v714 = vpop.f32.mrf.mxu0
      %v715 = vadd.f32 0.0, %v714
      %v716 = vpop.f32.mrf.mxu0
      %v717 = vpop.f32.mrf.mxu0
      %v718 = vpop.f32.mrf.mxu0
      %719 = vdwg.mxu0
      %v720 = vld [vmem:[#allocation3] sm:$0xff]
      %vm721 = vcmask 261120
      %v722 = vsel %vm721, %v715, -inf
      %723 = vmax.xlane.f32.xlu0 %v722
      %v724 = vpop.xlane.xlu0 %723
      %v725 = vmax.f32 %v720, %v724
      %v726 = vsub.f32 %v720, %v725
      %v727 = vmul.f32 %v726, 1.442695
      %v728 = vpow.pop %v727
      %730 = vset.pattern.permute.xlu0 0
      %731 = vperm.xlu0 %730, %v725
      %v732 = vpop.permute.xlu0 %731
      %v734 = vsub.f32 %v715, %v732
      %v735 = vmul.f32 %v734, 1.442695
      %v736 = vpow.pop %v735
      %v737 = vld [vmem:[#allocation4] sm:$0xff]
      %v738 = vmul.f32 %v728, %v737
      %v739 = vsel %vm721, %v736, 0.0
      %740 = vadd.xlane.f32.xlu0 %v739
      %v741 = vpop.xlane.xlu0 %740
      %v742 = vadd.f32 %v738, %v741
      %vm743 = vcmask 7168
      %744 = vst.msk [vmem:[#allocation4] sm:$0xff] %vm743, %v742
      %v745 = vld [vmem:[#allocation5] sm:$0xff]
      %747 = vset.pattern.permute.xlu0 0
      %748 = vperm.xlu0 %747, %v728
      %v749 = vpop.permute.xlu0 %748
      %v751 = vmul.f32 %v749, %v745
      %v752 = vpack.c.bf16 %v736, %v736
      %v757 = vunpack.c.l.b16 %v663
      %v758 = vunpack.c.l.b16 %v664
      %v759 = vunpack.c.l.b16 %v665
      %v760 = vunpack.c.l.b16 %v666
      %v761 = vpack.c.b16 %v758, %v757
      %v762 = vpack.c.b16 %v760, %v759
      %v766 = vsel %vm721, %v752, 0
      %768 = vmatprep.subr.bf16.mxu0 0
      %769 = vmatpush1.bf16.msra.mxu0 0
      %770 = vmatprep.subr.bf16.mxu0 0
      %771 = vmatpush1.bf16.msra.mxu0 0
      %772 = vmatprep.subr.bf16.mxu0 0
      %773 = vmatpush1.bf16.msra.mxu0 0
      %774 = vmatprep.subr.bf16.mxu0 0
      %775 = vmatpush1.bf16.msra.mxu0 0
      %776 = vmatprep.subr.bf16.mxu0 0
      %777 = vmatpush1.bf16.msra.mxu0 0
      %778 = vmatprep.subr.bf16.mxu0 0
      %779 = vmatpush1.bf16.msra.mxu0 0
      %780 = vmatprep.subr.bf16.mxu0 0
      %781 = vmatpush1.bf16.msra.mxu0 %v762
      %782 = vmatprep.subr.bf16.mxu0 0
      %783 = vmatpush1.bf16.msra.mxu0 %v761
      %784 = vmatprep.subr.bf16.mxu0 0
      %785 = vmatpush2.bf16.msra.mxu0 0
      %786 = vmatprep.subr.bf16.mxu0 0
      %787 = vmatpush2.bf16.msra.mxu0 0
      %788 = vmatprep.subr.bf16.mxu0 0
      %789 = vmatpush2.bf16.msra.mxu0 0
      %790 = vmatprep.subr.bf16.mxu0 0
      %791 = vmatpush2.bf16.msra.mxu0 0
      %792 = vmatprep.subr.bf16.mxu0 0
      %793 = vmatpush2.bf16.msra.mxu0 0
      %794 = vmatprep.subr.bf16.mxu0 0
      %795 = vmatpush2.bf16.msra.mxu0 0
      %796 = vmatprep.subr.bf16.mxu0 0
      %797 = vmatpush2.bf16.msra.mxu0 0
      %798 = vmatprep.subr.bf16.mxu0 0
      %799 = vmatpush2.bf16.msra.mxu0 0
      %800 = vmatprep.mubr.bf16.mxu0 0
      %801 = vmatmul.mubr.bf16.gmra.mxu0 %v766
      %v802 = vpop.f32.mrf.mxu0
      %v803 = vadd.f32 0.0, %v802
      %v804 = vpop.f32.mrf.mxu0
      %v805 = vpop.f32.mrf.mxu0
      %v806 = vpop.f32.mrf.mxu0
      %807 = vdwg.mxu0
      %v808 = vadd.f32 %v751, %v803
      %809 = vst [vmem:[#allocation5] sm:$0xff] %v808
      %810 = vst.msk [vmem:[#allocation3] sm:$0xff] %vm743, %v725
      // Predicated region
      $region77: #{_lambda_.7} parent=71 // pred_check
        %p811 = pneg %p536
      $region78: #{_lambda_.7} parent=71 // pred_check_branch
        %813 = sbr.rel (%p811) target = $region80
      $region79: #{_lambda_.7} parent=71 // pred_region
        %v814 = vld [vmem:[#allocation5] sm:$0xff]
        %v815 = vld [vmem:[#allocation4] sm:$0xff]
        %817 = vset.pattern.permute.xlu0 0
        %818 = vperm.xlu0 %817, %v815
        %v819 = vpop.permute.xlu0 %818
        %v821 = vrcp.pop %v819
        %v822 = vmul.f32 %v814, %v821
        %v823 = vpack.c.bf16 %v822, %v822
        %v824 = vld [vmem:[%s5] sm:$0xf]
        %v825 = vld [vmem:[%s5 + $0x4] sm:$0xf]
        %v826 = vld [vmem:[%s5 + $0x8] sm:$0xf]
        %v827 = vld [vmem:[%s5 + $0xc] sm:$0xf]
        %v828 = vld [vmem:[%s5 + $0x10] sm:$0xf]
        %v829 = vld [vmem:[%s5 + $0x14] sm:$0xf]
        %v830 = vld [vmem:[%s5 + $0x18] sm:$0xf]
        %v831 = vld [vmem:[%s5 + $0x1c] sm:$0xf]
        %v832 = vld [vmem:[%s5 + $0x20] sm:$0xf]
        %v833 = vld [vmem:[%s5 + $0x24] sm:$0xf]
        %v834 = vld [vmem:[%s5 + $0x28] sm:$0xf]
        %v835 = vld [vmem:[%s5 + $0x2c] sm:$0xf]
        %v836 = vld [vmem:[%s5 + $0x30] sm:$0xf]
        %v837 = vld [vmem:[%s5 + $0x34] sm:$0xf]
        %v838 = vld [vmem:[%s5 + $0x38] sm:$0xf]
        %v839 = vld [vmem:[%s5 + $0x3c] sm:$0xf]
        %v840 = vld [vmem:[%s6] sm:$0x1]
        %v842 = vlaneseq
        %v843 = vshrl.u32 %v842, 7
        %v844 = vsub.s32 0, %v843
        %v845 = vrot.slane %v840, %v844
        %v863 = vunpack.c.l.b16 %v824
        %v864 = vunpack.c.l.b16 %v825
        %v865 = vunpack.c.l.b16 %v826
        %v866 = vunpack.c.l.b16 %v827
        %v867 = vunpack.c.l.b16 %v828
        %v868 = vunpack.c.l.b16 %v829
        %v869 = vunpack.c.l.b16 %v830
        %v870 = vunpack.c.l.b16 %v831
        %v871 = vunpack.c.l.b16 %v832
        %v872 = vunpack.c.l.b16 %v833
        %v873 = vunpack.c.l.b16 %v834
        %v874 = vunpack.c.l.b16 %v835
        %v875 = vunpack.c.l.b16 %v836
        %v876 = vunpack.c.l.b16 %v837
        %v877 = vunpack.c.l.b16 %v838
        %v878 = vunpack.c.l.b16 %v839
        %v879 = vpack.c.b16 %v864, %v863
        %v880 = vpack.c.b16 %v866, %v865
        %v881 = vpack.c.b16 %v868, %v867
        %v882 = vpack.c.b16 %v870, %v869
        %v883 = vpack.c.b16 %v872, %v871
        %v884 = vpack.c.b16 %v874, %v873
        %v885 = vpack.c.b16 %v876, %v875
        %v886 = vpack.c.b16 %v878, %v877
        %895 = vmatprep.subr.bf16.mxu0 0
        %896 = vmatpush1.bf16.msra.mxu0 %v886
        %897 = vmatprep.subr.bf16.mxu0 0
        %898 = vmatpush1.bf16.msra.mxu0 %v885
        %899 = vmatprep.subr.bf16.mxu0 0
        %900 = vmatpush1.bf16.msra.mxu0 %v884
        %901 = vmatprep.subr.bf16.mxu0 0
        %902 = vmatpush1.bf16.msra.mxu0 %v883
        %903 = vmatprep.subr.bf16.mxu0 0
        %904 = vmatpush1.bf16.msra.mxu0 %v882
        %905 = vmatprep.subr.bf16.mxu0 0
        %906 = vmatpush1.bf16.msra.mxu0 %v881
        %907 = vmatprep.subr.bf16.mxu0 0
        %908 = vmatpush1.bf16.msra.mxu0 %v880
        %909 = vmatprep.subr.bf16.mxu0 0
        %910 = vmatpush1.bf16.msra.mxu0 %v879
        %911 = vmatprep.subr.bf16.mxu0 0
        %912 = vmatpush2.bf16.msra.mxu0 0
        %913 = vmatprep.subr.bf16.mxu0 0
        %914 = vmatpush2.bf16.msra.mxu0 0
        %915 = vmatprep.subr.bf16.mxu0 0
        %916 = vmatpush2.bf16.msra.mxu0 0
        %917 = vmatprep.subr.bf16.mxu0 0
        %918 = vmatpush2.bf16.msra.mxu0 0
        %919 = vmatprep.subr.bf16.mxu0 0
        %920 = vmatpush2.bf16.msra.mxu0 0
        %921 = vmatprep.subr.bf16.mxu0 0
        %922 = vmatpush2.bf16.msra.mxu0 0
        %923 = vmatprep.subr.bf16.mxu0 0
        %924 = vmatpush2.bf16.msra.mxu0 0
        %925 = vmatprep.subr.bf16.mxu0 0
        %926 = vmatpush2.bf16.msra.mxu0 0
        %927 = vmatprep.mubr.bf16.mxu0 0
        %928 = vmatmul.mubr.bf16.gmra.mxu0 %v823
        %v929 = vpop.f32.mrf.mxu0
        %v930 = vadd.f32 %v845, %v929
        %v931 = vpop.f32.mrf.mxu0
        %v932 = vpop.f32.mrf.mxu0
        %v933 = vpop.f32.mrf.mxu0
        %934 = vdwg.mxu0
        %v935 = vld [vmem:[%s507] sm:$0xff]
        %v936 = vadd.f32 %v930, %v935
        %v937 = vpack.c.bf16 %v936, %v936
        %v938 = vld [vmem:[%s7] sm:$0xff]
        %v939 = vld [vmem:[%s7 + $0x8] sm:$0xff]
        %v940 = vld [vmem:[%s7 + $0x10] sm:$0xff]
        %v941 = vld [vmem:[%s7 + $0x18] sm:$0xff]
        %v942 = vld [vmem:[%s7 + $0x20] sm:$0xff]
        %v943 = vld [vmem:[%s7 + $0x28] sm:$0xff]
        %v944 = vld [vmem:[%s7 + $0x30] sm:$0xff]
        %v945 = vld [vmem:[%s7 + $0x38] sm:$0xff]
        %v946 = vld [vmem:[%s7 + $0x40] sm:$0xff]
        %v947 = vld [vmem:[%s7 + $0x48] sm:$0xff]
        %v948 = vld [vmem:[%s7 + $0x50] sm:$0xff]
        %v949 = vld [vmem:[%s7 + $0x58] sm:$0xff]
        %v950 = vld [vmem:[%s7 + $0x60] sm:$0xff]
        %v951 = vld [vmem:[%s7 + $0x68] sm:$0xff]
        %v952 = vld [vmem:[%s7 + $0x70] sm:$0xff]
        %v953 = vld [vmem:[%s7 + $0x78] sm:$0xff]
        %v954 = vld [vmem:[%s8] sm:$0x3]
        %v956 = vlaneseq
        %v957 = vshrl.u32 %v956, 7
        %v958 = vsub.s32 0, %v957
        %v959 = vrot.slane %v954, %v958
        %v960 = vlaneseq
        %v961 = vshrl.u32 %v960, 7
        %v962 = vsub.s32 1, %v961
        %v963 = vrot.slane %v954, %v962
        %v982 = vunpack.c.l.b16 %v938
        %v983 = vunpack.c.h.b16 %v938
        %v984 = vunpack.c.l.b16 %v939
        %v985 = vunpack.c.h.b16 %v939
        %v986 = vunpack.c.l.b16 %v940
        %v987 = vunpack.c.h.b16 %v940
        %v988 = vunpack.c.l.b16 %v941
        %v989 = vunpack.c.h.b16 %v941
        %v990 = vunpack.c.l.b16 %v942
        %v991 = vunpack.c.h.b16 %v942
        %v992 = vunpack.c.l.b16 %v943
        %v993 = vunpack.c.h.b16 %v943
        %v994 = vunpack.c.l.b16 %v944
        %v995 = vunpack.c.h.b16 %v944
        %v996 = vunpack.c.l.b16 %v945
        %v997 = vunpack.c.h.b16 %v945
        %v998 = vunpack.c.l.b16 %v946
        %v999 = vunpack.c.h.b16 %v946
        %v1000 = vunpack.c.l.b16 %v947
        %v1001 = vunpack.c.h.b16 %v947
        %v1002 = vunpack.c.l.b16 %v948
        %v1003 = vunpack.c.h.b16 %v948
        %v1004 = vunpack.c.l.b16 %v949
        %v1005 = vunpack.c.h.b16 %v949
        %v1006 = vunpack.c.l.b16 %v950
        %v1007 = vunpack.c.h.b16 %v950
        %v1008 = vunpack.c.l.b16 %v951
        %v1009 = vunpack.c.h.b16 %v951
        %v1010 = vunpack.c.l.b16 %v952
        %v1011 = vunpack.c.h.b16 %v952
        %v1012 = vunpack.c.l.b16 %v953
        %v1013 = vunpack.c.h.b16 %v953
        %v1014 = vpack.c.b16 %v984, %v982
        %v1015 = vpack.c.b16 %v985, %v983
        %v1016 = vpack.c.b16 %v988, %v986
        %v1017 = vpack.c.b16 %v989, %v987
        %v1018 = vpack.c.b16 %v992, %v990
        %v1019 = vpack.c.b16 %v993, %v991
        %v1020 = vpack.c.b16 %v996, %v994
        %v1021 = vpack.c.b16 %v997, %v995
        %v1022 = vpack.c.b16 %v1000, %v998
        %v1023 = vpack.c.b16 %v1001, %v999
        %v1024 = vpack.c.b16 %v1004, %v1002
        %v1025 = vpack.c.b16 %v1005, %v1003
        %v1026 = vpack.c.b16 %v1008, %v1006
        %v1027 = vpack.c.b16 %v1009, %v1007
        %v1028 = vpack.c.b16 %v1012, %v1010
        %v1029 = vpack.c.b16 %v1013, %v1011
        %1046 = vmatprep.subr.bf16.mxu0 %v1029
        %1047 = vmatpush1.bf16.msra.mxu0 %v1028
        %1048 = vmatprep.subr.bf16.mxu0 %v1027
        %1049 = vmatpush1.bf16.msra.mxu0 %v1026
        %1050 = vmatprep.subr.bf16.mxu0 %v1025
        %1051 = vmatpush1.bf16.msra.mxu0 %v1024
        %1052 = vmatprep.subr.bf16.mxu0 %v1023
        %1053 = vmatpush1.bf16.msra.mxu0 %v1022
        %1054 = vmatprep.subr.bf16.mxu0 %v1021
        %1055 = vmatpush1.bf16.msra.mxu0 %v1020
        %1056 = vmatprep.subr.bf16.mxu0 %v1019
        %1057 = vmatpush1.bf16.msra.mxu0 %v1018
        %1058 = vmatprep.subr.bf16.mxu0 %v1017
        %1059 = vmatpush1.bf16.msra.mxu0 %v1016
        %1060 = vmatprep.subr.bf16.mxu0 %v1015
        %1061 = vmatpush1.bf16.msra.mxu0 %v1014
        %1062 = vmatprep.subr.bf16.mxu0 0
        %1063 = vmatpush2.bf16.msra.mxu0 0
        %1064 = vmatprep.subr.bf16.mxu0 0
        %1065 = vmatpush2.bf16.msra.mxu0 0
        %1066 = vmatprep.subr.bf16.mxu0 0
        %1067 = vmatpush2.bf16.msra.mxu0 0
        %1068 = vmatprep.subr.bf16.mxu0 0
        %1069 = vmatpush2.bf16.msra.mxu0 0
        %1070 = vmatprep.subr.bf16.mxu0 0
        %1071 = vmatpush2.bf16.msra.mxu0 0
        %1072 = vmatprep.subr.bf16.mxu0 0
        %1073 = vmatpush2.bf16.msra.mxu0 0
        %1074 = vmatprep.subr.bf16.mxu0 0
        %1075 = vmatpush2.bf16.msra.mxu0 0
        %1076 = vmatprep.subr.bf16.mxu0 0
        %1077 = vmatpush2.bf16.msra.mxu0 0
        %1078 = vmatprep.mubr.bf16.mxu0 0
        %1079 = vmatmul.mubr.bf16.gmra.mxu0 %v937
        %v1080 = vpop.f32.mrf.mxu0
        %v1081 = vadd.f32 %v959, %v1080
        %v1082 = vpop.f32.mrf.mxu0
        %v1083 = vadd.f32 %v963, %v1082
        %v1084 = vpop.f32.mrf.mxu0
        %v1085 = vpop.f32.mrf.mxu0
        %1086 = vdwg.mxu0
        %v1087 = vmax.f32 %v1081, 0.0
        %v1088 = vmax.f32 %v1083, 0.0
        %v1089 = vpack.c.bf16 %v1087, %v1087
        %v1090 = vpack.c.bf16 %v1088, %v1088
        %v1091 = vld [vmem:[%s9] sm:$0xf]
        %v1092 = vld [vmem:[%s9 + $0x4] sm:$0xf]
        %v1093 = vld [vmem:[%s9 + $0x8] sm:$0xf]
        %v1094 = vld [vmem:[%s9 + $0xc] sm:$0xf]
        %v1095 = vld [vmem:[%s9 + $0x10] sm:$0xf]
        %v1096 = vld [vmem:[%s9 + $0x14] sm:$0xf]
        %v1097 = vld [vmem:[%s9 + $0x18] sm:$0xf]
        %v1098 = vld [vmem:[%s9 + $0x1c] sm:$0xf]
        %v1099 = vld [vmem:[%s9 + $0x20] sm:$0xf]
        %v1100 = vld [vmem:[%s9 + $0x24] sm:$0xf]
        %v1101 = vld [vmem:[%s9 + $0x28] sm:$0xf]
        %v1102 = vld [vmem:[%s9 + $0x2c] sm:$0xf]
        %v1103 = vld [vmem:[%s9 + $0x30] sm:$0xf]
        %v1104 = vld [vmem:[%s9 + $0x34] sm:$0xf]
        %v1105 = vld [vmem:[%s9 + $0x38] sm:$0xf]
        %v1106 = vld [vmem:[%s9 + $0x3c] sm:$0xf]
        %v1107 = vld [vmem:[%s9 + $0x40] sm:$0xf]
        %v1108 = vld [vmem:[%s9 + $0x44] sm:$0xf]
        %v1109 = vld [vmem:[%s9 + $0x48] sm:$0xf]
        %v1110 = vld [vmem:[%s9 + $0x4c] sm:$0xf]
        %v1111 = vld [vmem:[%s9 + $0x50] sm:$0xf]
        %v1112 = vld [vmem:[%s9 + $0x54] sm:$0xf]
        %v1113 = vld [vmem:[%s9 + $0x58] sm:$0xf]
        %v1114 = vld [vmem:[%s9 + $0x5c] sm:$0xf]
        %v1115 = vld [vmem:[%s9 + $0x60] sm:$0xf]
        %v1116 = vld [vmem:[%s9 + $0x64] sm:$0xf]
        %v1117 = vld [vmem:[%s9 + $0x68] sm:$0xf]
        %v1118 = vld [vmem:[%s9 + $0x6c] sm:$0xf]
        %v1119 = vld [vmem:[%s9 + $0x70] sm:$0xf]
        %v1120 = vld [vmem:[%s9 + $0x74] sm:$0xf]
        %v1121 = vld [vmem:[%s9 + $0x78] sm:$0xf]
        %v1122 = vld [vmem:[%s9 + $0x7c] sm:$0xf]
        %v1123 = vld [vmem:[%s10] sm:$0x1]
        %v1125 = vlaneseq
        %v1126 = vshrl.u32 %v1125, 7
        %v1127 = vsub.s32 0, %v1126
        %v1128 = vrot.slane %v1123, %v1127
        %v1162 = vunpack.c.l.b16 %v1091
        %v1163 = vunpack.c.l.b16 %v1092
        %v1164 = vunpack.c.l.b16 %v1093
        %v1165 = vunpack.c.l.b16 %v1094
        %v1166 = vunpack.c.l.b16 %v1095
        %v1167 = vunpack.c.l.b16 %v1096
        %v1168 = vunpack.c.l.b16 %v1097
        %v1169 = vunpack.c.l.b16 %v1098
        %v1170 = vunpack.c.l.b16 %v1099
        %v1171 = vunpack.c.l.b16 %v1100
        %v1172 = vunpack.c.l.b16 %v1101
        %v1173 = vunpack.c.l.b16 %v1102
        %v1174 = vunpack.c.l.b16 %v1103
        %v1175 = vunpack.c.l.b16 %v1104
        %v1176 = vunpack.c.l.b16 %v1105
        %v1177 = vunpack.c.l.b16 %v1106
        %v1178 = vunpack.c.l.b16 %v1107
        %v1179 = vunpack.c.l.b16 %v1108
        %v1180 = vunpack.c.l.b16 %v1109
        %v1181 = vunpack.c.l.b16 %v1110
        %v1182 = vunpack.c.l.b16 %v1111
        %v1183 = vunpack.c.l.b16 %v1112
        %v1184 = vunpack.c.l.b16 %v1113
        %v1185 = vunpack.c.l.b16 %v1114
        %v1186 = vunpack.c.l.b16 %v1115
        %v1187 = vunpack.c.l.b16 %v1116
        %v1188 = vunpack.c.l.b16 %v1117
        %v1189 = vunpack.c.l.b16 %v1118
        %v1190 = vunpack.c.l.b16 %v1119
        %v1191 = vunpack.c.l.b16 %v1120
        %v1192 = vunpack.c.l.b16 %v1121
        %v1193 = vunpack.c.l.b16 %v1122
        %v1194 = vpack.c.b16 %v1163, %v1162
        %v1195 = vpack.c.b16 %v1165, %v1164
        %v1196 = vpack.c.b16 %v1167, %v1166
        %v1197 = vpack.c.b16 %v1169, %v1168
        %v1198 = vpack.c.b16 %v1171, %v1170
        %v1199 = vpack.c.b16 %v1173, %v1172
        %v1200 = vpack.c.b16 %v1175, %v1174
        %v1201 = vpack.c.b16 %v1177, %v1176
        %v1202 = vpack.c.b16 %v1179, %v1178
        %v1203 = vpack.c.b16 %v1181, %v1180
        %v1204 = vpack.c.b16 %v1183, %v1182
        %v1205 = vpack.c.b16 %v1185, %v1184
        %v1206 = vpack.c.b16 %v1187, %v1186
        %v1207 = vpack.c.b16 %v1189, %v1188
        %v1208 = vpack.c.b16 %v1191, %v1190
        %v1209 = vpack.c.b16 %v1193, %v1192
        %1226 = vmatprep.subr.bf16.mxu0 0
        %1227 = vmatpush1.bf16.msra.mxu0 %v1201
        %1228 = vmatprep.subr.bf16.mxu0 0
        %1229 = vmatpush1.bf16.msra.mxu0 %v1200
        %1230 = vmatprep.subr.bf16.mxu0 0
        %1231 = vmatpush1.bf16.msra.mxu0 %v1199
        %1232 = vmatprep.subr.bf16.mxu0 0
        %1233 = vmatpush1.bf16.msra.mxu0 %v1198
        %1234 = vmatprep.subr.bf16.mxu0 0
        %1235 = vmatpush1.bf16.msra.mxu0 %v1197
        %1236 = vmatprep.subr.bf16.mxu0 0
        %1237 = vmatpush1.bf16.msra.mxu0 %v1196
        %1238 = vmatprep.subr.bf16.mxu0 0
        %1239 = vmatpush1.bf16.msra.mxu0 %v1195
        %1240 = vmatprep.subr.bf16.mxu0 0
        %1241 = vmatpush1.bf16.msra.mxu0 %v1194
        %1242 = vmatprep.subr.bf16.mxu0 0
        %1243 = vmatpush2.bf16.msra.mxu0 %v1209
        %1244 = vmatprep.subr.bf16.mxu0 0
        %1245 = vmatpush2.bf16.msra.mxu0 %v1208
        %1246 = vmatprep.subr.bf16.mxu0 0
        %1247 = vmatpush2.bf16.msra.mxu0 %v1207
        %1248 = vmatprep.subr.bf16.mxu0 0
        %1249 = vmatpush2.bf16.msra.mxu0 %v1206
        %1250 = vmatprep.subr.bf16.mxu0 0
        %1251 = vmatpush2.bf16.msra.mxu0 %v1205
        %1252 = vmatprep.subr.bf16.mxu0 0
        %1253 = vmatpush2.bf16.msra.mxu0 %v1204
        %1254 = vmatprep.subr.bf16.mxu0 0
        %1255 = vmatpush2.bf16.msra.mxu0 %v1203
        %1256 = vmatprep.subr.bf16.mxu0 0
        %1257 = vmatpush2.bf16.msra.mxu0 %v1202
        %1258 = vmatprep.mubr.bf16.mxu0 %v1090
        %1259 = vmatmul.mubr.bf16.gmra.mxu0 %v1089
        %v1260 = vpop.f32.mrf.mxu0
        %v1261 = vadd.f32 %v1128, %v1260
        %v1262 = vpop.f32.mrf.mxu0
        %v1263 = vpop.f32.mrf.mxu0
        %v1264 = vpop.f32.mrf.mxu0
        %1265 = vdwg.mxu0
        %v1266 = vadd.f32 %v1261, %v936
        %v1267 = vpack.c.bf16 %v1266, %v1266
        %v1268 = vld [vmem:[%s11] sm:$0xf]
        %v1269 = vld [vmem:[%s11 + $0x4] sm:$0xf]
        %v1270 = vld [vmem:[%s11 + $0x8] sm:$0xf]
        %v1271 = vld [vmem:[%s11 + $0xc] sm:$0xf]
        %v1272 = vld [vmem:[%s11 + $0x10] sm:$0xf]
        %v1273 = vld [vmem:[%s11 + $0x14] sm:$0xf]
        %v1274 = vld [vmem:[%s11 + $0x18] sm:$0xf]
        %v1275 = vld [vmem:[%s11 + $0x1c] sm:$0xf]
        %v1276 = vld [vmem:[%s11 + $0x20] sm:$0xf]
        %v1277 = vld [vmem:[%s11 + $0x24] sm:$0xf]
        %v1278 = vld [vmem:[%s11 + $0x28] sm:$0xf]
        %v1279 = vld [vmem:[%s11 + $0x2c] sm:$0xf]
        %v1280 = vld [vmem:[%s11 + $0x30] sm:$0xf]
        %v1281 = vld [vmem:[%s11 + $0x34] sm:$0xf]
        %v1282 = vld [vmem:[%s11 + $0x38] sm:$0xf]
        %v1283 = vld [vmem:[%s11 + $0x3c] sm:$0xf]
        %v1284 = vld [vmem:[%s12] sm:$0x1]
        %v1286 = vlaneseq
        %v1287 = vshrl.u32 %v1286, 7
        %v1288 = vsub.s32 0, %v1287
        %v1289 = vrot.slane %v1284, %v1288
        %v1307 = vunpack.c.l.b16 %v1268
        %v1308 = vunpack.c.l.b16 %v1269
        %v1309 = vunpack.c.l.b16 %v1270
        %v1310 = vunpack.c.l.b16 %v1271
        %v1311 = vunpack.c.l.b16 %v1272
        %v1312 = vunpack.c.l.b16 %v1273
        %v1313 = vunpack.c.l.b16 %v1274
        %v1314 = vunpack.c.l.b16 %v1275
        %v1315 = vunpack.c.l.b16 %v1276
        %v1316 = vunpack.c.l.b16 %v1277
        %v1317 = vunpack.c.l.b16 %v1278
        %v1318 = vunpack.c.l.b16 %v1279
        %v1319 = vunpack.c.l.b16 %v1280
        %v1320 = vunpack.c.l.b16 %v1281
        %v1321 = vunpack.c.l.b16 %v1282
        %v1322 = vunpack.c.l.b16 %v1283
        %v1323 = vpack.c.b16 %v1308, %v1307
        %v1324 = vpack.c.b16 %v1310, %v1309
        %v1325 = vpack.c.b16 %v1312, %v1311
        %v1326 = vpack.c.b16 %v1314, %v1313
        %v1327 = vpack.c.b16 %v1316, %v1315
        %v1328 = vpack.c.b16 %v1318, %v1317
        %v1329 = vpack.c.b16 %v1320, %v1319
        %v1330 = vpack.c.b16 %v1322, %v1321
        %1339 = vmatprep.subr.bf16.mxu0 0
        %1340 = vmatpush1.bf16.msra.mxu0 %v1330
        %1341 = vmatprep.subr.bf16.mxu0 0
        %1342 = vmatpush1.bf16.msra.mxu0 %v1329
        %1343 = vmatprep.subr.bf16.mxu0 0
        %1344 = vmatpush1.bf16.msra.mxu0 %v1328
        %1345 = vmatprep.subr.bf16.mxu0 0
        %1346 = vmatpush1.bf16.msra.mxu0 %v1327
        %1347 = vmatprep.subr.bf16.mxu0 0
        %1348 = vmatpush1.bf16.msra.mxu0 %v1326
        %1349 = vmatprep.subr.bf16.mxu0 0
        %1350 = vmatpush1.bf16.msra.mxu0 %v1325
        %1351 = vmatprep.subr.bf16.mxu0 0
        %1352 = vmatpush1.bf16.msra.mxu0 %v1324
        %1353 = vmatprep.subr.bf16.mxu0 0
        %1354 = vmatpush1.bf16.msra.mxu0 %v1323
        %1355 = vmatprep.subr.bf16.mxu0 0
        %1356 = vmatpush2.bf16.msra.mxu0 0
        %1357 = vmatprep.subr.bf16.mxu0 0
        %1358 = vmatpush2.bf16.msra.mxu0 0
        %1359 = vmatprep.subr.bf16.mxu0 0
        %1360 = vmatpush2.bf16.msra.mxu0 0
        %1361 = vmatprep.subr.bf16.mxu0 0
        %1362 = vmatpush2.bf16.msra.mxu0 0
        %1363 = vmatprep.subr.bf16.mxu0 0
        %1364 = vmatpush2.bf16.msra.mxu0 0
        %1365 = vmatprep.subr.bf16.mxu0 0
        %1366 = vmatpush2.bf16.msra.mxu0 0
        %1367 = vmatprep.subr.bf16.mxu0 0
        %1368 = vmatpush2.bf16.msra.mxu0 0
        %1369 = vmatprep.subr.bf16.mxu0 0
        %1370 = vmatpush2.bf16.msra.mxu0 0
        %1371 = vmatprep.mubr.bf16.mxu0 0
        %1372 = vmatmul.mubr.bf16.gmra.mxu0 %v1267
        %v1373 = vpop.f32.mrf.mxu0
        %v1374 = vadd.f32 %v1289, %v1373
        %v1375 = vpop.f32.mrf.mxu0
        %v1376 = vpop.f32.mrf.mxu0
        %v1377 = vpop.f32.mrf.mxu0
        %1378 = vdwg.mxu0
        %1379 = vst [vmem:[%s534] sm:$0xff] %v1374
      $region80: #{_lambda_.7} parent=71 // pred_fallthru
        _
      %p1380 = scmp.lt.s32.totalorder %s29, 1
      %s1381 = scalar_select %p1380, %s29, 1
      %p1382 = scmp.lt.s32.totalorder %s30, 0
      %s1383 = scalar_select %p1382, %s30, 0
      %s1384 = sadd.s32 %s1383, %s1381
      %s1385 = smul.addr %s1384, 8
      %s1386 = scalar_lea.vmem %s13, %s1385
      // Predicated region
      $region81: #{_lambda_.7} parent=71 // pred_check
        %p1387 = pneg %p355
      $region82: #{_lambda_.7} parent=71 // pred_check_branch
        %1389 = sbr.rel (%p1387) target = $region84
      $region83: #{_lambda_.7} parent=71 // pred_region
        _
      $region84: #{_lambda_.7} parent=71 // pred_fallthru
        _
    $region72: #{_lambda_.7} parent=5 // pred_fallthru
      _
    %p1390 = scmp.le.s32.totalorder 2, %s19
    // Predicated region
    $region85: #{_lambda_.7} parent=5 // pred_check
      %p1391 = pneg %p1390
    $region86: #{_lambda_.7} parent=5 // pred_check_branch
      %1393 = sbr.rel (%p1391) target = $region88
    $region87: #{_lambda_.7} parent=5 // pred_region
      %s1394 = ssub.s32 %s19, 2
      // Predicated region
      $region89: #{_lambda_.7} parent=87 // pred_check
        %p1395 = pneg %p361
      $region90: #{_lambda_.7} parent=87 // pred_check_branch
        %1397 = sbr.rel (%p1395) target = $region92
      $region91: #{_lambda_.7} parent=87 // pred_region
        %p1398 = scmp.lt.s32.totalorder %s32, 1
        %s1399 = scalar_select %p1398, %s32, 1
        %p1400 = scmp.lt.s32.totalorder %s33, 0
        %s1401 = scalar_select %p1400, %s33, 0
        %s1402 = sadd.s32 %s1401, %s1399
        %s1403 = smul.addr %s1402, 8
        %s1404 = scalar_lea.vmem %s13, %s1403
      $region92: #{_lambda_.7} parent=87 // pred_fallthru
        _
    $region88: #{_lambda_.7} parent=5 // pred_fallthru
      _
  $region6: #{_lambda_.7} parent=0 // loop_footer
    %s23 = sadd.s32 1, %s19
  $region7: #{_lambda_.7} parent=0 // loop_footer_branch
    %18 = sbr.rel target = $region3
  $region8: #{_lambda_.7} parent=0 // loop_exit
    _

</llo_original>
